<compile_context>
chip_gen: v7x
topology: tpu7x:2x2x1
jax: 0.10.0
libtpu: 0.0.40
codegen_flags: <defaults>
</compile_context>

<pallas_src>
import functools

import jax
import jax.numpy as jnp
from jax.experimental import pallas as pl
from jax.experimental.pallas import tpu as pltpu

V_TH = 1.0
LANE = 128      # vreg lane width
SUBLANE = 8     # f32 vreg sublane count


def _round_up(n, m):
    return ((n + m - 1) // m) * m


def _if_chunk(v, a, n, Bp):
    """Hard-reset integrate-and-fire over the n time sub-steps packed in `a`.

    v: (Bp, D) f32 membrane state.  a: (n*Bp, D) f32 pre-activations, row
    j*Bp + b == (sub-step j, batch b).  Returns (new v, spikes (n*Bp, D) f32).
    All slices and the concat sit on 8-row f32 vreg boundaries -> no data moves.
    """
    spikes = []
    for j in range(n):
        v = v + a[j * Bp:(j + 1) * Bp, :]
        fired = v >= V_TH
        spikes.append(fired.astype(jnp.float32))
        v = jnp.where(fired, 0.0, v)
    return v, (spikes[0] if n == 1 else jnp.concatenate(spikes, axis=0))


def _fused_kernel(x_ref,
                  w1a_ref, b1a_ref, w2a_ref, b2a_ref,
                  w1b_ref, b1b_ref, w2b_ref, b2b_ref,
                  w1c_ref, b1c_ref, w2c_ref, b2c_ref,
                  w4_ref, b4_ref,
                  o_ref, *, T, Bp, TC):
    Dp = o_ref.shape[-1]
    layers = ((w1a_ref, b1a_ref, w2a_ref, b2a_ref),
              (w1b_ref, b1b_ref, w2b_ref, b2b_ref),
              (w1c_ref, b1c_ref, w2c_ref, b2c_ref))
    n_res = len(layers)

    # Hoist bias broadcasts out of the fully unrolled time loop.
    rmax = TC * Bp
    b1s = [jnp.broadcast_to(l[1][...], (rmax, Dp)) for l in layers]
    b2s = [jnp.broadcast_to(l[3][...], (rmax, Dp)) for l in layers]
    b4 = jnp.broadcast_to(b4_ref[...], (rmax, Dp))

    # Per-layer IF membrane potentials, carried across the unrolled time loop.
    v1 = [jnp.zeros((Bp, Dp), jnp.float32) for _ in range(n_res)]
    v2 = [jnp.zeros((Bp, Dp), jnp.float32) for _ in range(n_res)]

    # Fully unrolled time loop in chunks of TC steps; the whole depth runs per
    # chunk so MXU pushes interleave with the serial IF VALU chain.
    # TODO(synk): switch to lax.fori_loop(..., unroll=2) + a VMEM spike scratch
    # if T ever grows past ~32 (compile-time / vreg-pressure guard).
    t = 0
    while t < T:
        n = TC if t + TC <= T else T - t
        rows = n * Bp
        h = x_ref[pl.ds(t * Bp, rows), :]                      # (rows, Dp) bf16
        for l in range(n_res):
            w1_ref, _, w2_ref, _ = layers[l]
            # fc1 over the whole chunk: dense (rows,128)x(128,128) MXU matmul.
            a1 = (jnp.dot(h, w1_ref[...], preferred_element_type=jnp.float32)
                  + b1s[l][:rows])
            v1[l], s1 = _if_chunk(v1[l], a1, n, Bp)            # sn1 (serial)
            # Residual branch: s1 + fc2(s1).  Spikes hit the MXU as bf16 (0/1
            # is exact); the residual add stays f32.
            a2 = (s1
                  + jnp.dot(s1.astype(jnp.bfloat16), w2_ref[...],
                            preferred_element_type=jnp.float32)
                  + b2s[l][:rows])
            v2[l], s2 = _if_chunk(v2[l], a2, n, Bp)            # sn2 (serial)
            h = s2.astype(jnp.bfloat16)
        # Nonact_FClayer: plain linear, lane-dense f32 store at an aligned row.
        o_ref[pl.ds(t * Bp, rows), :] = (
            jnp.dot(h, w4_ref[...], preferred_element_type=jnp.float32)
            + b4[:rows]).astype(o_ref.dtype)
        t += n


# ----------------------------------------------------------------------------
# Parameter init (deterministic, PyTorch nn.Linear-style uniform) + one-time prep
# ----------------------------------------------------------------------------
def init_linear(key, in_f, out_f):
    kw, kb = jax.random.split(key)
    bound = 1.0 / (in_f ** 0.5)
    w = jax.random.uniform(kw, (out_f, in_f), jnp.float32, -bound, bound)
    b = jax.random.uniform(kb, (out_f,), jnp.float32, -bound, bound)
    return w, b


def init_params(key, dim):
    keys = jax.random.split(key, 7)
    return {
        "res1_fc1": init_linear(keys[0], dim[0], dim[1]),
        "res1_fc2": init_linear(keys[1], dim[1], dim[1]),
        "res2_fc1": init_linear(keys[2], dim[1], dim[2]),
        "res2_fc2": init_linear(keys[3], dim[2], dim[2]),
        "res3_fc1": init_linear(keys[4], dim[2], dim[3]),
        "res3_fc2": init_linear(keys[5], dim[3], dim[3]),
        "fc4": init_linear(keys[6], dim[3], dim[4]),
    }


def prep_params(params, dim):
    """One-time prep: transpose to (in,out), zero-pad features to 128 lanes,
    round weights to bf16 (mirrored in the reference).  Biases stay f32."""
    Dp = _round_up(max(dim), LANE)

    def pad_w(w):                  # torch (out,in) -> (Dp, Dp) (in,out), bf16
        o, i = w.shape
        wp = jnp.zeros((Dp, Dp), jnp.float32).at[:i, :o].set(w.T)
        return wp.astype(jnp.bfloat16)

    def pad_b(b):
        return jnp.zeros((1, Dp), jnp.float32).at[0, :b.shape[0]].set(b)

    out = {}
    for k in (1, 2, 3):
        out[f"w1_{k}"] = pad_w(params[f"res{k}_fc1"][0])
        out[f"b1_{k}"] = pad_b(params[f"res{k}_fc1"][1])
        out[f"w2_{k}"] = pad_w(params[f"res{k}_fc2"][0])
        out[f"b2_{k}"] = pad_b(params[f"res{k}_fc2"][1])
    out["w4"] = pad_w(params["fc4"][0])
    out["b4"] = pad_b(params["fc4"][1])
    return out


def auditory_modality(prepped, x, d_out):
    """x: (T, B, d_in) f32 -> (T, B, d_out) f32."""
    T, B, d_in = x.shape
    Dp = prepped["w4"].shape[0]
    Bp = _round_up(max(B, SUBLANE), SUBLANE)
    TC = 2 if T >= 2 else 1           # pair time steps -> full (16,128) bf16 LHS

    # Lane/sublane-dense (T*Bp, Dp) bf16 input slab.  Padded rows/lanes are zero;
    # padded lanes can never spike (zero weights + zero bias), padded rows are
    # independent junk that is sliced off below.
    xp = jnp.zeros((T, Bp, Dp), jnp.bfloat16)
    xp = xp.at[:, :B, :d_in].set(x.astype(jnp.bfloat16))
    xp = xp.reshape(T * Bp, Dp)

    kernel = functools.partial(_fused_kernel, T=T, Bp=Bp, TC=TC)
    flops = 2 * 7 * T * Bp * Dp * Dp               # 7 matmuls per time step
    bytes_accessed = (T * Bp * Dp * 2              # bf16 input slab
                      + 7 * Dp * Dp * 2            # bf16 weights
                      + 7 * Dp * 4                 # f32 biases
                      + T * Bp * Dp * 4)           # f32 output slab

    # TODO(synk): if called repeatedly with the same weights, keep the ~230 KB
    # weight slab resident across calls (cross-call prefetch / io-alias pattern)
    # to hide the up-front weight DMA behind surrounding ops.
    # TODO(synk): for large B on v7x, add a leading batch-tile grid axis with
    # dimension_semantics=("parallel",) to use both TensorCores.
    y = pl.pallas_call(
        kernel,
        out_shape=jax.ShapeDtypeStruct((T * Bp, Dp), jnp.float32),
        in_specs=[pl.BlockSpec(memory_space=pltpu.MemorySpace.VMEM)] * 15,
        out_specs=pl.BlockSpec(memory_space=pltpu.MemorySpace.VMEM),
        cost_estimate=pl.CostEstimate(flops=flops, transcendentals=0,
                                      bytes_accessed=bytes_accessed),
    )(xp,
      prepped["w1_1"], prepped["b1_1"], prepped["w2_1"], prepped["b2_1"],
      prepped["w1_2"], prepped["b1_2"], prepped["w2_2"], prepped["b2_2"],
      prepped["w1_3"], prepped["b1_3"], prepped["w2_3"], prepped["b2_3"],
      prepped["w4"], prepped["b4"])

    return y.reshape(T, Bp, Dp)[:, :B, :d_out]


# ----------------------------------------------------------------------------
# Pure-JAX reference (same semantics; mirrors the kernel's bf16 rounding of the
# input/weights so the binary spike decisions match)
# ----------------------------------------------------------------------------
def ref_forward(params, x):
    f32 = jnp.float32

    def lin(p, h):
        w, b = p
        wr = w.astype(jnp.bfloat16).astype(f32)
        return jnp.einsum("tbi,oi->tbo", h, wr) + b

    def if_node(a):
        def step(v, at):
            v = v + at
            fired = v >= V_TH
            return jnp.where(fired, 0.0, v), fired.astype(f32)

        _, spikes = jax.lax.scan(step, jnp.zeros_like(a[0]), a)
        return spikes

    h = x.astype(jnp.bfloat16).astype(f32)
    for k in (1, 2, 3):
        s1 = if_node(lin(params[f"res{k}_fc1"], h))
        h = if_node(s1 + lin(params[f"res{k}_fc2"], s1))
    return lin(params["fc4"], h)


if __name__ == "__main__":
    T, B = 8, 2                       # time steps, batch
    dim = [32, 32, 32, 32, 16]        # AuditoryModality(dim)

    key = jax.random.PRNGKey(0)
    kx, kp = jax.random.split(key)
    x = jax.random.normal(kx, (T, B, dim[0]), jnp.float32)
    params = init_params(kp, dim)
    prepped = prep_params(params, dim)

    out = jax.block_until_ready(auditory_modality(prepped, x, dim[4]))
    assert out.shape == (T, B, dim[4]), out.shape

    ref = jax.block_until_ready(ref_forward(params, x))
    max_err = float(jnp.max(jnp.abs(out - ref)))
    assert max_err < 1e-3, f"mismatch vs reference: {max_err}"

    print("KERNEL_OK")
</pallas_src>

<mosaic_0001>
module attributes {stable_mosaic.version = 11 : i64} {
  func.func @_fused_kernel(%arg0: memref<64x128xbf16, #tpu.memory_space<vmem>>, %arg1: memref<128x128xbf16, #tpu.memory_space<vmem>>, %arg2: memref<1x128xf32, #tpu.memory_space<vmem>>, %arg3: memref<128x128xbf16, #tpu.memory_space<vmem>>, %arg4: memref<1x128xf32, #tpu.memory_space<vmem>>, %arg5: memref<128x128xbf16, #tpu.memory_space<vmem>>, %arg6: memref<1x128xf32, #tpu.memory_space<vmem>>, %arg7: memref<128x128xbf16, #tpu.memory_space<vmem>>, %arg8: memref<1x128xf32, #tpu.memory_space<vmem>>, %arg9: memref<128x128xbf16, #tpu.memory_space<vmem>>, %arg10: memref<1x128xf32, #tpu.memory_space<vmem>>, %arg11: memref<128x128xbf16, #tpu.memory_space<vmem>>, %arg12: memref<1x128xf32, #tpu.memory_space<vmem>>, %arg13: memref<128x128xbf16, #tpu.memory_space<vmem>>, %arg14: memref<1x128xf32, #tpu.memory_space<vmem>>, %arg15: memref<64x128xf32, #tpu.memory_space<vmem>>) attributes {dimension_semantics = [], scalar_prefetch = 0 : i64, scratch_operands = 0 : i64, tpu.core_type = #tpu.core_type<tc>} {
    %c0 = arith.constant 0 : index
    %c0_0 = arith.constant 0 : index
    %0 = vector.load %arg2[%c0, %c0_0] : memref<1x128xf32, #tpu.memory_space<vmem>>, vector<1x128xf32>
    %1 = vector.shape_cast %0 : vector<1x128xf32> to vector<1x128xf32>
    %2 = vector.broadcast %1 : vector<1x128xf32> to vector<16x128xf32>
    %c0_1 = arith.constant 0 : index
    %c0_2 = arith.constant 0 : index
    %3 = vector.load %arg6[%c0_1, %c0_2] : memref<1x128xf32, #tpu.memory_space<vmem>>, vector<1x128xf32>
    %4 = vector.shape_cast %3 : vector<1x128xf32> to vector<1x128xf32>
    %5 = vector.broadcast %4 : vector<1x128xf32> to vector<16x128xf32>
    %c0_3 = arith.constant 0 : index
    %c0_4 = arith.constant 0 : index
    %6 = vector.load %arg10[%c0_3, %c0_4] : memref<1x128xf32, #tpu.memory_space<vmem>>, vector<1x128xf32>
    %7 = vector.shape_cast %6 : vector<1x128xf32> to vector<1x128xf32>
    %8 = vector.broadcast %7 : vector<1x128xf32> to vector<16x128xf32>
    %c0_5 = arith.constant 0 : index
    %c0_6 = arith.constant 0 : index
    %9 = vector.load %arg4[%c0_5, %c0_6] : memref<1x128xf32, #tpu.memory_space<vmem>>, vector<1x128xf32>
    %10 = vector.shape_cast %9 : vector<1x128xf32> to vector<1x128xf32>
    %11 = vector.broadcast %10 : vector<1x128xf32> to vector<16x128xf32>
    %c0_7 = arith.constant 0 : index
    %c0_8 = arith.constant 0 : index
    %12 = vector.load %arg8[%c0_7, %c0_8] : memref<1x128xf32, #tpu.memory_space<vmem>>, vector<1x128xf32>
    %13 = vector.shape_cast %12 : vector<1x128xf32> to vector<1x128xf32>
    %14 = vector.broadcast %13 : vector<1x128xf32> to vector<16x128xf32>
    %c0_9 = arith.constant 0 : index
    %c0_10 = arith.constant 0 : index
    %15 = vector.load %arg12[%c0_9, %c0_10] : memref<1x128xf32, #tpu.memory_space<vmem>>, vector<1x128xf32>
    %16 = vector.shape_cast %15 : vector<1x128xf32> to vector<1x128xf32>
    %17 = vector.broadcast %16 : vector<1x128xf32> to vector<16x128xf32>
    %c0_11 = arith.constant 0 : index
    %c0_12 = arith.constant 0 : index
    %18 = vector.load %arg14[%c0_11, %c0_12] : memref<1x128xf32, #tpu.memory_space<vmem>>, vector<1x128xf32>
    %19 = vector.shape_cast %18 : vector<1x128xf32> to vector<1x128xf32>
    %20 = vector.broadcast %19 : vector<1x128xf32> to vector<16x128xf32>
    %cst = arith.constant 0.000000e+00 : f32
    %21 = vector.broadcast %cst : f32 to vector<8x128xf32>
    %cst_13 = arith.constant 0.000000e+00 : f32
    %22 = vector.broadcast %cst_13 : f32 to vector<8x128xf32>
    %cst_14 = arith.constant 0.000000e+00 : f32
    %23 = vector.broadcast %cst_14 : f32 to vector<8x128xf32>
    %cst_15 = arith.constant 0.000000e+00 : f32
    %24 = vector.broadcast %cst_15 : f32 to vector<8x128xf32>
    %cst_16 = arith.constant 0.000000e+00 : f32
    %25 = vector.broadcast %cst_16 : f32 to vector<8x128xf32>
    %cst_17 = arith.constant 0.000000e+00 : f32
    %26 = vector.broadcast %cst_17 : f32 to vector<8x128xf32>
    %c0_18 = arith.constant 0 : index
    %c0_19 = arith.constant 0 : index
    %27 = vector.load %arg0[%c0_18, %c0_19] : memref<64x128xbf16, #tpu.memory_space<vmem>>, vector<16x128xbf16>
    %c0_20 = arith.constant 0 : index
    %c0_21 = arith.constant 0 : index
    %28 = vector.load %arg1[%c0_20, %c0_21] : memref<128x128xbf16, #tpu.memory_space<vmem>>, vector<128x128xbf16>
    %cst_22 = arith.constant dense<0.000000e+00> : vector<16x128xf32>
    %29 = tpu.matmul %27, %28, %cst_22 {dimension_numbers = #tpu.dot_dimension_numbers<[1], [0], [0], [1], [0, 0, 1, 1], [], []>} : vector<16x128xbf16>, vector<128x128xbf16>, vector<16x128xf32> -> vector<16x128xf32>
    %30 = arith.addf %29, %2 : vector<16x128xf32>
    %31 = vector.extract_strided_slice %30 {offsets = [0, 0], sizes = [8, 128], strides = [1, 1]} : vector<16x128xf32> to vector<8x128xf32>
    %32 = arith.addf %21, %31 : vector<8x128xf32>
    %cst_23 = arith.constant 1.000000e+00 : f32
    %33 = vector.broadcast %cst_23 : f32 to vector<8x128xf32>
    %34 = arith.cmpf oge, %32, %33 : vector<8x128xf32>
    %35 = arith.extui %34 : vector<8x128xi1> to vector<8x128xi32>
    %36 = arith.sitofp %35 : vector<8x128xi32> to vector<8x128xf32>
    %cst_24 = arith.constant 0.000000e+00 : f32
    %37 = vector.broadcast %cst_24 : f32 to vector<8x128xf32>
    %38 = arith.select %34, %37, %32 : vector<8x128xi1>, vector<8x128xf32>
    %39 = vector.extract_strided_slice %30 {offsets = [8, 0], sizes = [8, 128], strides = [1, 1]} : vector<16x128xf32> to vector<8x128xf32>
    %40 = arith.addf %38, %39 : vector<8x128xf32>
    %cst_25 = arith.constant 1.000000e+00 : f32
    %41 = vector.broadcast %cst_25 : f32 to vector<8x128xf32>
    %42 = arith.cmpf oge, %40, %41 : vector<8x128xf32>
    %43 = arith.extui %42 : vector<8x128xi1> to vector<8x128xi32>
    %44 = arith.sitofp %43 : vector<8x128xi32> to vector<8x128xf32>
    %cst_26 = arith.constant 0.000000e+00 : f32
    %45 = vector.broadcast %cst_26 : f32 to vector<8x128xf32>
    %46 = arith.select %42, %45, %40 : vector<8x128xi1>, vector<8x128xf32>
    %47 = tpu.concatenate %36, %44 in 0 : vector<8x128xf32>, vector<8x128xf32> -> vector<16x128xf32>
    %48 = arith.truncf %47 : vector<16x128xf32> to vector<16x128xbf16>
    %c0_27 = arith.constant 0 : index
    %c0_28 = arith.constant 0 : index
    %49 = vector.load %arg3[%c0_27, %c0_28] : memref<128x128xbf16, #tpu.memory_space<vmem>>, vector<128x128xbf16>
    %cst_29 = arith.constant dense<0.000000e+00> : vector<16x128xf32>
    %50 = tpu.matmul %48, %49, %cst_29 {dimension_numbers = #tpu.dot_dimension_numbers<[1], [0], [0], [1], [0, 0, 1, 1], [], []>} : vector<16x128xbf16>, vector<128x128xbf16>, vector<16x128xf32> -> vector<16x128xf32>
    %51 = arith.addf %47, %50 : vector<16x128xf32>
    %52 = arith.addf %51, %11 : vector<16x128xf32>
    %53 = vector.extract_strided_slice %52 {offsets = [0, 0], sizes = [8, 128], strides = [1, 1]} : vector<16x128xf32> to vector<8x128xf32>
    %54 = arith.addf %24, %53 : vector<8x128xf32>
    %cst_30 = arith.constant 1.000000e+00 : f32
    %55 = vector.broadcast %cst_30 : f32 to vector<8x128xf32>
    %56 = arith.cmpf oge, %54, %55 : vector<8x128xf32>
    %57 = arith.extui %56 : vector<8x128xi1> to vector<8x128xi32>
    %58 = arith.sitofp %57 : vector<8x128xi32> to vector<8x128xf32>
    %cst_31 = arith.constant 0.000000e+00 : f32
    %59 = vector.broadcast %cst_31 : f32 to vector<8x128xf32>
    %60 = arith.select %56, %59, %54 : vector<8x128xi1>, vector<8x128xf32>
    %61 = vector.extract_strided_slice %52 {offsets = [8, 0], sizes = [8, 128], strides = [1, 1]} : vector<16x128xf32> to vector<8x128xf32>
    %62 = arith.addf %60, %61 : vector<8x128xf32>
    %cst_32 = arith.constant 1.000000e+00 : f32
    %63 = vector.broadcast %cst_32 : f32 to vector<8x128xf32>
    %64 = arith.cmpf oge, %62, %63 : vector<8x128xf32>
    %65 = arith.extui %64 : vector<8x128xi1> to vector<8x128xi32>
    %66 = arith.sitofp %65 : vector<8x128xi32> to vector<8x128xf32>
    %cst_33 = arith.constant 0.000000e+00 : f32
    %67 = vector.broadcast %cst_33 : f32 to vector<8x128xf32>
    %68 = arith.select %64, %67, %62 : vector<8x128xi1>, vector<8x128xf32>
    %69 = tpu.concatenate %58, %66 in 0 : vector<8x128xf32>, vector<8x128xf32> -> vector<16x128xf32>
    %70 = arith.truncf %69 : vector<16x128xf32> to vector<16x128xbf16>
    %c0_34 = arith.constant 0 : index
    %c0_35 = arith.constant 0 : index
    %71 = vector.load %arg5[%c0_34, %c0_35] : memref<128x128xbf16, #tpu.memory_space<vmem>>, vector<128x128xbf16>
    %cst_36 = arith.constant dense<0.000000e+00> : vector<16x128xf32>
    %72 = tpu.matmul %70, %71, %cst_36 {dimension_numbers = #tpu.dot_dimension_numbers<[1], [0], [0], [1], [0, 0, 1, 1], [], []>} : vector<16x128xbf16>, vector<128x128xbf16>, vector<16x128xf32> -> vector<16x128xf32>
    %73 = arith.addf %72, %5 : vector<16x128xf32>
    %74 = vector.extract_strided_slice %73 {offsets = [0, 0], sizes = [8, 128], strides = [1, 1]} : vector<16x128xf32> to vector<8x128xf32>
    %75 = arith.addf %22, %74 : vector<8x128xf32>
    %cst_37 = arith.constant 1.000000e+00 : f32
    %76 = vector.broadcast %cst_37 : f32 to vector<8x128xf32>
    %77 = arith.cmpf oge, %75, %76 : vector<8x128xf32>
    %78 = arith.extui %77 : vector<8x128xi1> to vector<8x128xi32>
    %79 = arith.sitofp %78 : vector<8x128xi32> to vector<8x128xf32>
    %cst_38 = arith.constant 0.000000e+00 : f32
    %80 = vector.broadcast %cst_38 : f32 to vector<8x128xf32>
    %81 = arith.select %77, %80, %75 : vector<8x128xi1>, vector<8x128xf32>
    %82 = vector.extract_strided_slice %73 {offsets = [8, 0], sizes = [8, 128], strides = [1, 1]} : vector<16x128xf32> to vector<8x128xf32>
    %83 = arith.addf %81, %82 : vector<8x128xf32>
    %cst_39 = arith.constant 1.000000e+00 : f32
    %84 = vector.broadcast %cst_39 : f32 to vector<8x128xf32>
    %85 = arith.cmpf oge, %83, %84 : vector<8x128xf32>
    %86 = arith.extui %85 : vector<8x128xi1> to vector<8x128xi32>
    %87 = arith.sitofp %86 : vector<8x128xi32> to vector<8x128xf32>
    %cst_40 = arith.constant 0.000000e+00 : f32
    %88 = vector.broadcast %cst_40 : f32 to vector<8x128xf32>
    %89 = arith.select %85, %88, %83 : vector<8x128xi1>, vector<8x128xf32>
    %90 = tpu.concatenate %79, %87 in 0 : vector<8x128xf32>, vector<8x128xf32> -> vector<16x128xf32>
    %91 = arith.truncf %90 : vector<16x128xf32> to vector<16x128xbf16>
    %c0_41 = arith.constant 0 : index
    %c0_42 = arith.constant 0 : index
    %92 = vector.load %arg7[%c0_41, %c0_42] : memref<128x128xbf16, #tpu.memory_space<vmem>>, vector<128x128xbf16>
    %cst_43 = arith.constant dense<0.000000e+00> : vector<16x128xf32>
    %93 = tpu.matmul %91, %92, %cst_43 {dimension_numbers = #tpu.dot_dimension_numbers<[1], [0], [0], [1], [0, 0, 1, 1], [], []>} : vector<16x128xbf16>, vector<128x128xbf16>, vector<16x128xf32> -> vector<16x128xf32>
    %94 = arith.addf %90, %93 : vector<16x128xf32>
    %95 = arith.addf %94, %14 : vector<16x128xf32>
    %96 = vector.extract_strided_slice %95 {offsets = [0, 0], sizes = [8, 128], strides = [1, 1]} : vector<16x128xf32> to vector<8x128xf32>
    %97 = arith.addf %25, %96 : vector<8x128xf32>
    %cst_44 = arith.constant 1.000000e+00 : f32
    %98 = vector.broadcast %cst_44 : f32 to vector<8x128xf32>
    %99 = arith.cmpf oge, %97, %98 : vector<8x128xf32>
    %100 = arith.extui %99 : vector<8x128xi1> to vector<8x128xi32>
    %101 = arith.sitofp %100 : vector<8x128xi32> to vector<8x128xf32>
    %cst_45 = arith.constant 0.000000e+00 : f32
    %102 = vector.broadcast %cst_45 : f32 to vector<8x128xf32>
    %103 = arith.select %99, %102, %97 : vector<8x128xi1>, vector<8x128xf32>
    %104 = vector.extract_strided_slice %95 {offsets = [8, 0], sizes = [8, 128], strides = [1, 1]} : vector<16x128xf32> to vector<8x128xf32>
    %105 = arith.addf %103, %104 : vector<8x128xf32>
    %cst_46 = arith.constant 1.000000e+00 : f32
    %106 = vector.broadcast %cst_46 : f32 to vector<8x128xf32>
    %107 = arith.cmpf oge, %105, %106 : vector<8x128xf32>
    %108 = arith.extui %107 : vector<8x128xi1> to vector<8x128xi32>
    %109 = arith.sitofp %108 : vector<8x128xi32> to vector<8x128xf32>
    %cst_47 = arith.constant 0.000000e+00 : f32
    %110 = vector.broadcast %cst_47 : f32 to vector<8x128xf32>
    %111 = arith.select %107, %110, %105 : vector<8x128xi1>, vector<8x128xf32>
    %112 = tpu.concatenate %101, %109 in 0 : vector<8x128xf32>, vector<8x128xf32> -> vector<16x128xf32>
    %113 = arith.truncf %112 : vector<16x128xf32> to vector<16x128xbf16>
    %c0_48 = arith.constant 0 : index
    %c0_49 = arith.constant 0 : index
    %114 = vector.load %arg9[%c0_48, %c0_49] : memref<128x128xbf16, #tpu.memory_space<vmem>>, vector<128x128xbf16>
    %cst_50 = arith.constant dense<0.000000e+00> : vector<16x128xf32>
    %115 = tpu.matmul %113, %114, %cst_50 {dimension_numbers = #tpu.dot_dimension_numbers<[1], [0], [0], [1], [0, 0, 1, 1], [], []>} : vector<16x128xbf16>, vector<128x128xbf16>, vector<16x128xf32> -> vector<16x128xf32>
    %116 = arith.addf %115, %8 : vector<16x128xf32>
    %117 = vector.extract_strided_slice %116 {offsets = [0, 0], sizes = [8, 128], strides = [1, 1]} : vector<16x128xf32> to vector<8x128xf32>
    %118 = arith.addf %23, %117 : vector<8x128xf32>
    %cst_51 = arith.constant 1.000000e+00 : f32
    %119 = vector.broadcast %cst_51 : f32 to vector<8x128xf32>
    %120 = arith.cmpf oge, %118, %119 : vector<8x128xf32>
    %121 = arith.extui %120 : vector<8x128xi1> to vector<8x128xi32>
    %122 = arith.sitofp %121 : vector<8x128xi32> to vector<8x128xf32>
    %cst_52 = arith.constant 0.000000e+00 : f32
    %123 = vector.broadcast %cst_52 : f32 to vector<8x128xf32>
    %124 = arith.select %120, %123, %118 : vector<8x128xi1>, vector<8x128xf32>
    %125 = vector.extract_strided_slice %116 {offsets = [8, 0], sizes = [8, 128], strides = [1, 1]} : vector<16x128xf32> to vector<8x128xf32>
    %126 = arith.addf %124, %125 : vector<8x128xf32>
    %cst_53 = arith.constant 1.000000e+00 : f32
    %127 = vector.broadcast %cst_53 : f32 to vector<8x128xf32>
    %128 = arith.cmpf oge, %126, %127 : vector<8x128xf32>
    %129 = arith.extui %128 : vector<8x128xi1> to vector<8x128xi32>
    %130 = arith.sitofp %129 : vector<8x128xi32> to vector<8x128xf32>
    %cst_54 = arith.constant 0.000000e+00 : f32
    %131 = vector.broadcast %cst_54 : f32 to vector<8x128xf32>
    %132 = arith.select %128, %131, %126 : vector<8x128xi1>, vector<8x128xf32>
    %133 = tpu.concatenate %122, %130 in 0 : vector<8x128xf32>, vector<8x128xf32> -> vector<16x128xf32>
    %134 = arith.truncf %133 : vector<16x128xf32> to vector<16x128xbf16>
    %c0_55 = arith.constant 0 : index
    %c0_56 = arith.constant 0 : index
    %135 = vector.load %arg11[%c0_55, %c0_56] : memref<128x128xbf16, #tpu.memory_space<vmem>>, vector<128x128xbf16>
    %cst_57 = arith.constant dense<0.000000e+00> : vector<16x128xf32>
    %136 = tpu.matmul %134, %135, %cst_57 {dimension_numbers = #tpu.dot_dimension_numbers<[1], [0], [0], [1], [0, 0, 1, 1], [], []>} : vector<16x128xbf16>, vector<128x128xbf16>, vector<16x128xf32> -> vector<16x128xf32>
    %137 = arith.addf %133, %136 : vector<16x128xf32>
    %138 = arith.addf %137, %17 : vector<16x128xf32>
    %139 = vector.extract_strided_slice %138 {offsets = [0, 0], sizes = [8, 128], strides = [1, 1]} : vector<16x128xf32> to vector<8x128xf32>
    %140 = arith.addf %26, %139 : vector<8x128xf32>
    %cst_58 = arith.constant 1.000000e+00 : f32
    %141 = vector.broadcast %cst_58 : f32 to vector<8x128xf32>
    %142 = arith.cmpf oge, %140, %141 : vector<8x128xf32>
    %143 = arith.extui %142 : vector<8x128xi1> to vector<8x128xi32>
    %144 = arith.sitofp %143 : vector<8x128xi32> to vector<8x128xf32>
    %cst_59 = arith.constant 0.000000e+00 : f32
    %145 = vector.broadcast %cst_59 : f32 to vector<8x128xf32>
    %146 = arith.select %142, %145, %140 : vector<8x128xi1>, vector<8x128xf32>
    %147 = vector.extract_strided_slice %138 {offsets = [8, 0], sizes = [8, 128], strides = [1, 1]} : vector<16x128xf32> to vector<8x128xf32>
    %148 = arith.addf %146, %147 : vector<8x128xf32>
    %cst_60 = arith.constant 1.000000e+00 : f32
    %149 = vector.broadcast %cst_60 : f32 to vector<8x128xf32>
    %150 = arith.cmpf oge, %148, %149 : vector<8x128xf32>
    %151 = arith.extui %150 : vector<8x128xi1> to vector<8x128xi32>
    %152 = arith.sitofp %151 : vector<8x128xi32> to vector<8x128xf32>
    %cst_61 = arith.constant 0.000000e+00 : f32
    %153 = vector.broadcast %cst_61 : f32 to vector<8x128xf32>
    %154 = arith.select %150, %153, %148 : vector<8x128xi1>, vector<8x128xf32>
    %155 = tpu.concatenate %144, %152 in 0 : vector<8x128xf32>, vector<8x128xf32> -> vector<16x128xf32>
    %156 = arith.truncf %155 : vector<16x128xf32> to vector<16x128xbf16>
    %c0_62 = arith.constant 0 : index
    %c0_63 = arith.constant 0 : index
    %157 = vector.load %arg13[%c0_62, %c0_63] : memref<128x128xbf16, #tpu.memory_space<vmem>>, vector<128x128xbf16>
    %cst_64 = arith.constant dense<0.000000e+00> : vector<16x128xf32>
    %158 = tpu.matmul %156, %157, %cst_64 {dimension_numbers = #tpu.dot_dimension_numbers<[1], [0], [0], [1], [0, 0, 1, 1], [], []>} : vector<16x128xbf16>, vector<128x128xbf16>, vector<16x128xf32> -> vector<16x128xf32>
    %159 = arith.addf %158, %20 : vector<16x128xf32>
    %c0_65 = arith.constant 0 : index
    %c0_66 = arith.constant 0 : index
    %160 = vector.load %arg15[%c0_65, %c0_66] : memref<64x128xf32, #tpu.memory_space<vmem>>, vector<16x128xf32>
    tpu.vector_store %arg15[%c0_65, %c0_66], %159 {strides = array<i32>} : memref<64x128xf32, #tpu.memory_space<vmem>>, vector<16x128xf32>,
    %c16 = arith.constant 16 : index
    %c0_67 = arith.constant 0 : index
    %161 = vector.load %arg0[%c16, %c0_67] : memref<64x128xbf16, #tpu.memory_space<vmem>>, vector<16x128xbf16>
    %c0_68 = arith.constant 0 : index
    %c0_69 = arith.constant 0 : index
    %162 = vector.load %arg1[%c0_68, %c0_69] : memref<128x128xbf16, #tpu.memory_space<vmem>>, vector<128x128xbf16>
    %cst_70 = arith.constant dense<0.000000e+00> : vector<16x128xf32>
    %163 = tpu.matmul %161, %162, %cst_70 {dimension_numbers = #tpu.dot_dimension_numbers<[1], [0], [0], [1], [0, 0, 1, 1], [], []>} : vector<16x128xbf16>, vector<128x128xbf16>, vector<16x128xf32> -> vector<16x128xf32>
    %164 = arith.addf %163, %2 : vector<16x128xf32>
    %165 = vector.extract_strided_slice %164 {offsets = [0, 0], sizes = [8, 128], strides = [1, 1]} : vector<16x128xf32> to vector<8x128xf32>
    %166 = arith.addf %46, %165 : vector<8x128xf32>
    %cst_71 = arith.constant 1.000000e+00 : f32
    %167 = vector.broadcast %cst_71 : f32 to vector<8x128xf32>
    %168 = arith.cmpf oge, %166, %167 : vector<8x128xf32>
    %169 = arith.extui %168 : vector<8x128xi1> to vector<8x128xi32>
    %170 = arith.sitofp %169 : vector<8x128xi32> to vector<8x128xf32>
    %cst_72 = arith.constant 0.000000e+00 : f32
    %171 = vector.broadcast %cst_72 : f32 to vector<8x128xf32>
    %172 = arith.select %168, %171, %166 : vector<8x128xi1>, vector<8x128xf32>
    %173 = vector.extract_strided_slice %164 {offsets = [8, 0], sizes = [8, 128], strides = [1, 1]} : vector<16x128xf32> to vector<8x128xf32>
    %174 = arith.addf %172, %173 : vector<8x128xf32>
    %cst_73 = arith.constant 1.000000e+00 : f32
    %175 = vector.broadcast %cst_73 : f32 to vector<8x128xf32>
    %176 = arith.cmpf oge, %174, %175 : vector<8x128xf32>
    %177 = arith.extui %176 : vector<8x128xi1> to vector<8x128xi32>
    %178 = arith.sitofp %177 : vector<8x128xi32> to vector<8x128xf32>
    %cst_74 = arith.constant 0.000000e+00 : f32
    %179 = vector.broadcast %cst_74 : f32 to vector<8x128xf32>
    %180 = arith.select %176, %179, %174 : vector<8x128xi1>, vector<8x128xf32>
    %181 = tpu.concatenate %170, %178 in 0 : vector<8x128xf32>, vector<8x128xf32> -> vector<16x128xf32>
    %182 = arith.truncf %181 : vector<16x128xf32> to vector<16x128xbf16>
    %c0_75 = arith.constant 0 : index
    %c0_76 = arith.constant 0 : index
    %183 = vector.load %arg3[%c0_75, %c0_76] : memref<128x128xbf16, #tpu.memory_space<vmem>>, vector<128x128xbf16>
    %cst_77 = arith.constant dense<0.000000e+00> : vector<16x128xf32>
    %184 = tpu.matmul %182, %183, %cst_77 {dimension_numbers = #tpu.dot_dimension_numbers<[1], [0], [0], [1], [0, 0, 1, 1], [], []>} : vector<16x128xbf16>, vector<128x128xbf16>, vector<16x128xf32> -> vector<16x128xf32>
    %185 = arith.addf %181, %184 : vector<16x128xf32>
    %186 = arith.addf %185, %11 : vector<16x128xf32>
    %187 = vector.extract_strided_slice %186 {offsets = [0, 0], sizes = [8, 128], strides = [1, 1]} : vector<16x128xf32> to vector<8x128xf32>
    %188 = arith.addf %68, %187 : vector<8x128xf32>
    %cst_78 = arith.constant 1.000000e+00 : f32
    %189 = vector.broadcast %cst_78 : f32 to vector<8x128xf32>
    %190 = arith.cmpf oge, %188, %189 : vector<8x128xf32>
    %191 = arith.extui %190 : vector<8x128xi1> to vector<8x128xi32>
    %192 = arith.sitofp %191 : vector<8x128xi32> to vector<8x128xf32>
    %cst_79 = arith.constant 0.000000e+00 : f32
    %193 = vector.broadcast %cst_79 : f32 to vector<8x128xf32>
    %194 = arith.select %190, %193, %188 : vector<8x128xi1>, vector<8x128xf32>
    %195 = vector.extract_strided_slice %186 {offsets = [8, 0], sizes = [8, 128], strides = [1, 1]} : vector<16x128xf32> to vector<8x128xf32>
    %196 = arith.addf %194, %195 : vector<8x128xf32>
    %cst_80 = arith.constant 1.000000e+00 : f32
    %197 = vector.broadcast %cst_80 : f32 to vector<8x128xf32>
    %198 = arith.cmpf oge, %196, %197 : vector<8x128xf32>
    %199 = arith.extui %198 : vector<8x128xi1> to vector<8x128xi32>
    %200 = arith.sitofp %199 : vector<8x128xi32> to vector<8x128xf32>
    %cst_81 = arith.constant 0.000000e+00 : f32
    %201 = vector.broadcast %cst_81 : f32 to vector<8x128xf32>
    %202 = arith.select %198, %201, %196 : vector<8x128xi1>, vector<8x128xf32>
    %203 = tpu.concatenate %192, %200 in 0 : vector<8x128xf32>, vector<8x128xf32> -> vector<16x128xf32>
    %204 = arith.truncf %203 : vector<16x128xf32> to vector<16x128xbf16>
    %c0_82 = arith.constant 0 : index
    %c0_83 = arith.constant 0 : index
    %205 = vector.load %arg5[%c0_82, %c0_83] : memref<128x128xbf16, #tpu.memory_space<vmem>>, vector<128x128xbf16>
    %cst_84 = arith.constant dense<0.000000e+00> : vector<16x128xf32>
    %206 = tpu.matmul %204, %205, %cst_84 {dimension_numbers = #tpu.dot_dimension_numbers<[1], [0], [0], [1], [0, 0, 1, 1], [], []>} : vector<16x128xbf16>, vector<128x128xbf16>, vector<16x128xf32> -> vector<16x128xf32>
    %207 = arith.addf %206, %5 : vector<16x128xf32>
    %208 = vector.extract_strided_slice %207 {offsets = [0, 0], sizes = [8, 128], strides = [1, 1]} : vector<16x128xf32> to vector<8x128xf32>
    %209 = arith.addf %89, %208 : vector<8x128xf32>
    %cst_85 = arith.constant 1.000000e+00 : f32
    %210 = vector.broadcast %cst_85 : f32 to vector<8x128xf32>
    %211 = arith.cmpf oge, %209, %210 : vector<8x128xf32>
    %212 = arith.extui %211 : vector<8x128xi1> to vector<8x128xi32>
    %213 = arith.sitofp %212 : vector<8x128xi32> to vector<8x128xf32>
    %cst_86 = arith.constant 0.000000e+00 : f32
    %214 = vector.broadcast %cst_86 : f32 to vector<8x128xf32>
    %215 = arith.select %211, %214, %209 : vector<8x128xi1>, vector<8x128xf32>
    %216 = vector.extract_strided_slice %207 {offsets = [8, 0], sizes = [8, 128], strides = [1, 1]} : vector<16x128xf32> to vector<8x128xf32>
    %217 = arith.addf %215, %216 : vector<8x128xf32>
    %cst_87 = arith.constant 1.000000e+00 : f32
    %218 = vector.broadcast %cst_87 : f32 to vector<8x128xf32>
    %219 = arith.cmpf oge, %217, %218 : vector<8x128xf32>
    %220 = arith.extui %219 : vector<8x128xi1> to vector<8x128xi32>
    %221 = arith.sitofp %220 : vector<8x128xi32> to vector<8x128xf32>
    %cst_88 = arith.constant 0.000000e+00 : f32
    %222 = vector.broadcast %cst_88 : f32 to vector<8x128xf32>
    %223 = arith.select %219, %222, %217 : vector<8x128xi1>, vector<8x128xf32>
    %224 = tpu.concatenate %213, %221 in 0 : vector<8x128xf32>, vector<8x128xf32> -> vector<16x128xf32>
    %225 = arith.truncf %224 : vector<16x128xf32> to vector<16x128xbf16>
    %c0_89 = arith.constant 0 : index
    %c0_90 = arith.constant 0 : index
    %226 = vector.load %arg7[%c0_89, %c0_90] : memref<128x128xbf16, #tpu.memory_space<vmem>>, vector<128x128xbf16>
    %cst_91 = arith.constant dense<0.000000e+00> : vector<16x128xf32>
    %227 = tpu.matmul %225, %226, %cst_91 {dimension_numbers = #tpu.dot_dimension_numbers<[1], [0], [0], [1], [0, 0, 1, 1], [], []>} : vector<16x128xbf16>, vector<128x128xbf16>, vector<16x128xf32> -> vector<16x128xf32>
    %228 = arith.addf %224, %227 : vector<16x128xf32>
    %229 = arith.addf %228, %14 : vector<16x128xf32>
    %230 = vector.extract_strided_slice %229 {offsets = [0, 0], sizes = [8, 128], strides = [1, 1]} : vector<16x128xf32> to vector<8x128xf32>
    %231 = arith.addf %111, %230 : vector<8x128xf32>
    %cst_92 = arith.constant 1.000000e+00 : f32
    %232 = vector.broadcast %cst_92 : f32 to vector<8x128xf32>
    %233 = arith.cmpf oge, %231, %232 : vector<8x128xf32>
    %234 = arith.extui %233 : vector<8x128xi1> to vector<8x128xi32>
    %235 = arith.sitofp %234 : vector<8x128xi32> to vector<8x128xf32>
    %cst_93 = arith.constant 0.000000e+00 : f32
    %236 = vector.broadcast %cst_93 : f32 to vector<8x128xf32>
    %237 = arith.select %233, %236, %231 : vector<8x128xi1>, vector<8x128xf32>
    %238 = vector.extract_strided_slice %229 {offsets = [8, 0], sizes = [8, 128], strides = [1, 1]} : vector<16x128xf32> to vector<8x128xf32>
    %239 = arith.addf %237, %238 : vector<8x128xf32>
    %cst_94 = arith.constant 1.000000e+00 : f32
    %240 = vector.broadcast %cst_94 : f32 to vector<8x128xf32>
    %241 = arith.cmpf oge, %239, %240 : vector<8x128xf32>
    %242 = arith.extui %241 : vector<8x128xi1> to vector<8x128xi32>
    %243 = arith.sitofp %242 : vector<8x128xi32> to vector<8x128xf32>
    %cst_95 = arith.constant 0.000000e+00 : f32
    %244 = vector.broadcast %cst_95 : f32 to vector<8x128xf32>
    %245 = arith.select %241, %244, %239 : vector<8x128xi1>, vector<8x128xf32>
    %246 = tpu.concatenate %235, %243 in 0 : vector<8x128xf32>, vector<8x128xf32> -> vector<16x128xf32>
    %247 = arith.truncf %246 : vector<16x128xf32> to vector<16x128xbf16>
    %c0_96 = arith.constant 0 : index
    %c0_97 = arith.constant 0 : index
    %248 = vector.load %arg9[%c0_96, %c0_97] : memref<128x128xbf16, #tpu.memory_space<vmem>>, vector<128x128xbf16>
    %cst_98 = arith.constant dense<0.000000e+00> : vector<16x128xf32>
    %249 = tpu.matmul %247, %248, %cst_98 {dimension_numbers = #tpu.dot_dimension_numbers<[1], [0], [0], [1], [0, 0, 1, 1], [], []>} : vector<16x128xbf16>, vector<128x128xbf16>, vector<16x128xf32> -> vector<16x128xf32>
    %250 = arith.addf %249, %8 : vector<16x128xf32>
    %251 = vector.extract_strided_slice %250 {offsets = [0, 0], sizes = [8, 128], strides = [1, 1]} : vector<16x128xf32> to vector<8x128xf32>
    %252 = arith.addf %132, %251 : vector<8x128xf32>
    %cst_99 = arith.constant 1.000000e+00 : f32
    %253 = vector.broadcast %cst_99 : f32 to vector<8x128xf32>
    %254 = arith.cmpf oge, %252, %253 : vector<8x128xf32>
    %255 = arith.extui %254 : vector<8x128xi1> to vector<8x128xi32>
    %256 = arith.sitofp %255 : vector<8x128xi32> to vector<8x128xf32>
    %cst_100 = arith.constant 0.000000e+00 : f32
    %257 = vector.broadcast %cst_100 : f32 to vector<8x128xf32>
    %258 = arith.select %254, %257, %252 : vector<8x128xi1>, vector<8x128xf32>
    %259 = vector.extract_strided_slice %250 {offsets = [8, 0], sizes = [8, 128], strides = [1, 1]} : vector<16x128xf32> to vector<8x128xf32>
    %260 = arith.addf %258, %259 : vector<8x128xf32>
    %cst_101 = arith.constant 1.000000e+00 : f32
    %261 = vector.broadcast %cst_101 : f32 to vector<8x128xf32>
    %262 = arith.cmpf oge, %260, %261 : vector<8x128xf32>
    %263 = arith.extui %262 : vector<8x128xi1> to vector<8x128xi32>
    %264 = arith.sitofp %263 : vector<8x128xi32> to vector<8x128xf32>
    %cst_102 = arith.constant 0.000000e+00 : f32
    %265 = vector.broadcast %cst_102 : f32 to vector<8x128xf32>
    %266 = arith.select %262, %265, %260 : vector<8x128xi1>, vector<8x128xf32>
    %267 = tpu.concatenate %256, %264 in 0 : vector<8x128xf32>, vector<8x128xf32> -> vector<16x128xf32>
    %268 = arith.truncf %267 : vector<16x128xf32> to vector<16x128xbf16>
    %c0_103 = arith.constant 0 : index
    %c0_104 = arith.constant 0 : index
    %269 = vector.load %arg11[%c0_103, %c0_104] : memref<128x128xbf16, #tpu.memory_space<vmem>>, vector<128x128xbf16>
    %cst_105 = arith.constant dense<0.000000e+00> : vector<16x128xf32>
    %270 = tpu.matmul %268, %269, %cst_105 {dimension_numbers = #tpu.dot_dimension_numbers<[1], [0], [0], [1], [0, 0, 1, 1], [], []>} : vector<16x128xbf16>, vector<128x128xbf16>, vector<16x128xf32> -> vector<16x128xf32>
    %271 = arith.addf %267, %270 : vector<16x128xf32>
    %272 = arith.addf %271, %17 : vector<16x128xf32>
    %273 = vector.extract_strided_slice %272 {offsets = [0, 0], sizes = [8, 128], strides = [1, 1]} : vector<16x128xf32> to vector<8x128xf32>
    %274 = arith.addf %154, %273 : vector<8x128xf32>
    %cst_106 = arith.constant 1.000000e+00 : f32
    %275 = vector.broadcast %cst_106 : f32 to vector<8x128xf32>
    %276 = arith.cmpf oge, %274, %275 : vector<8x128xf32>
    %277 = arith.extui %276 : vector<8x128xi1> to vector<8x128xi32>
    %278 = arith.sitofp %277 : vector<8x128xi32> to vector<8x128xf32>
    %cst_107 = arith.constant 0.000000e+00 : f32
    %279 = vector.broadcast %cst_107 : f32 to vector<8x128xf32>
    %280 = arith.select %276, %279, %274 : vector<8x128xi1>, vector<8x128xf32>
    %281 = vector.extract_strided_slice %272 {offsets = [8, 0], sizes = [8, 128], strides = [1, 1]} : vector<16x128xf32> to vector<8x128xf32>
    %282 = arith.addf %280, %281 : vector<8x128xf32>
    %cst_108 = arith.constant 1.000000e+00 : f32
    %283 = vector.broadcast %cst_108 : f32 to vector<8x128xf32>
    %284 = arith.cmpf oge, %282, %283 : vector<8x128xf32>
    %285 = arith.extui %284 : vector<8x128xi1> to vector<8x128xi32>
    %286 = arith.sitofp %285 : vector<8x128xi32> to vector<8x128xf32>
    %cst_109 = arith.constant 0.000000e+00 : f32
    %287 = vector.broadcast %cst_109 : f32 to vector<8x128xf32>
    %288 = arith.select %284, %287, %282 : vector<8x128xi1>, vector<8x128xf32>
    %289 = tpu.concatenate %278, %286 in 0 : vector<8x128xf32>, vector<8x128xf32> -> vector<16x128xf32>
    %290 = arith.truncf %289 : vector<16x128xf32> to vector<16x128xbf16>
    %c0_110 = arith.constant 0 : index
    %c0_111 = arith.constant 0 : index
    %291 = vector.load %arg13[%c0_110, %c0_111] : memref<128x128xbf16, #tpu.memory_space<vmem>>, vector<128x128xbf16>
    %cst_112 = arith.constant dense<0.000000e+00> : vector<16x128xf32>
    %292 = tpu.matmul %290, %291, %cst_112 {dimension_numbers = #tpu.dot_dimension_numbers<[1], [0], [0], [1], [0, 0, 1, 1], [], []>} : vector<16x128xbf16>, vector<128x128xbf16>, vector<16x128xf32> -> vector<16x128xf32>
    %293 = arith.addf %292, %20 : vector<16x128xf32>
    %c16_113 = arith.constant 16 : index
    %c0_114 = arith.constant 0 : index
    %294 = vector.load %arg15[%c16_113, %c0_114] : memref<64x128xf32, #tpu.memory_space<vmem>>, vector<16x128xf32>
    tpu.vector_store %arg15[%c16_113, %c0_114], %293 {strides = array<i32>} : memref<64x128xf32, #tpu.memory_space<vmem>>, vector<16x128xf32>,
    %c32 = arith.constant 32 : index
    %c0_115 = arith.constant 0 : index
    %295 = vector.load %arg0[%c32, %c0_115] : memref<64x128xbf16, #tpu.memory_space<vmem>>, vector<16x128xbf16>
    %c0_116 = arith.constant 0 : index
    %c0_117 = arith.constant 0 : index
    %296 = vector.load %arg1[%c0_116, %c0_117] : memref<128x128xbf16, #tpu.memory_space<vmem>>, vector<128x128xbf16>
    %cst_118 = arith.constant dense<0.000000e+00> : vector<16x128xf32>
    %297 = tpu.matmul %295, %296, %cst_118 {dimension_numbers = #tpu.dot_dimension_numbers<[1], [0], [0], [1], [0, 0, 1, 1], [], []>} : vector<16x128xbf16>, vector<128x128xbf16>, vector<16x128xf32> -> vector<16x128xf32>
    %298 = arith.addf %297, %2 : vector<16x128xf32>
    %299 = vector.extract_strided_slice %298 {offsets = [0, 0], sizes = [8, 128], strides = [1, 1]} : vector<16x128xf32> to vector<8x128xf32>
    %300 = arith.addf %180, %299 : vector<8x128xf32>
    %cst_119 = arith.constant 1.000000e+00 : f32
    %301 = vector.broadcast %cst_119 : f32 to vector<8x128xf32>
    %302 = arith.cmpf oge, %300, %301 : vector<8x128xf32>
    %303 = arith.extui %302 : vector<8x128xi1> to vector<8x128xi32>
    %304 = arith.sitofp %303 : vector<8x128xi32> to vector<8x128xf32>
    %cst_120 = arith.constant 0.000000e+00 : f32
    %305 = vector.broadcast %cst_120 : f32 to vector<8x128xf32>
    %306 = arith.select %302, %305, %300 : vector<8x128xi1>, vector<8x128xf32>
    %307 = vector.extract_strided_slice %298 {offsets = [8, 0], sizes = [8, 128], strides = [1, 1]} : vector<16x128xf32> to vector<8x128xf32>
    %308 = arith.addf %306, %307 : vector<8x128xf32>
    %cst_121 = arith.constant 1.000000e+00 : f32
    %309 = vector.broadcast %cst_121 : f32 to vector<8x128xf32>
    %310 = arith.cmpf oge, %308, %309 : vector<8x128xf32>
    %311 = arith.extui %310 : vector<8x128xi1> to vector<8x128xi32>
    %312 = arith.sitofp %311 : vector<8x128xi32> to vector<8x128xf32>
    %cst_122 = arith.constant 0.000000e+00 : f32
    %313 = vector.broadcast %cst_122 : f32 to vector<8x128xf32>
    %314 = arith.select %310, %313, %308 : vector<8x128xi1>, vector<8x128xf32>
    %315 = tpu.concatenate %304, %312 in 0 : vector<8x128xf32>, vector<8x128xf32> -> vector<16x128xf32>
    %316 = arith.truncf %315 : vector<16x128xf32> to vector<16x128xbf16>
    %c0_123 = arith.constant 0 : index
    %c0_124 = arith.constant 0 : index
    %317 = vector.load %arg3[%c0_123, %c0_124] : memref<128x128xbf16, #tpu.memory_space<vmem>>, vector<128x128xbf16>
    %cst_125 = arith.constant dense<0.000000e+00> : vector<16x128xf32>
    %318 = tpu.matmul %316, %317, %cst_125 {dimension_numbers = #tpu.dot_dimension_numbers<[1], [0], [0], [1], [0, 0, 1, 1], [], []>} : vector<16x128xbf16>, vector<128x128xbf16>, vector<16x128xf32> -> vector<16x128xf32>
    %319 = arith.addf %315, %318 : vector<16x128xf32>
    %320 = arith.addf %319, %11 : vector<16x128xf32>
    %321 = vector.extract_strided_slice %320 {offsets = [0, 0], sizes = [8, 128], strides = [1, 1]} : vector<16x128xf32> to vector<8x128xf32>
    %322 = arith.addf %202, %321 : vector<8x128xf32>
    %cst_126 = arith.constant 1.000000e+00 : f32
    %323 = vector.broadcast %cst_126 : f32 to vector<8x128xf32>
    %324 = arith.cmpf oge, %322, %323 : vector<8x128xf32>
    %325 = arith.extui %324 : vector<8x128xi1> to vector<8x128xi32>
    %326 = arith.sitofp %325 : vector<8x128xi32> to vector<8x128xf32>
    %cst_127 = arith.constant 0.000000e+00 : f32
    %327 = vector.broadcast %cst_127 : f32 to vector<8x128xf32>
    %328 = arith.select %324, %327, %322 : vector<8x128xi1>, vector<8x128xf32>
    %329 = vector.extract_strided_slice %320 {offsets = [8, 0], sizes = [8, 128], strides = [1, 1]} : vector<16x128xf32> to vector<8x128xf32>
    %330 = arith.addf %328, %329 : vector<8x128xf32>
    %cst_128 = arith.constant 1.000000e+00 : f32
    %331 = vector.broadcast %cst_128 : f32 to vector<8x128xf32>
    %332 = arith.cmpf oge, %330, %331 : vector<8x128xf32>
    %333 = arith.extui %332 : vector<8x128xi1> to vector<8x128xi32>
    %334 = arith.sitofp %333 : vector<8x128xi32> to vector<8x128xf32>
    %cst_129 = arith.constant 0.000000e+00 : f32
    %335 = vector.broadcast %cst_129 : f32 to vector<8x128xf32>
    %336 = arith.select %332, %335, %330 : vector<8x128xi1>, vector<8x128xf32>
    %337 = tpu.concatenate %326, %334 in 0 : vector<8x128xf32>, vector<8x128xf32> -> vector<16x128xf32>
    %338 = arith.truncf %337 : vector<16x128xf32> to vector<16x128xbf16>
    %c0_130 = arith.constant 0 : index
    %c0_131 = arith.constant 0 : index
    %339 = vector.load %arg5[%c0_130, %c0_131] : memref<128x128xbf16, #tpu.memory_space<vmem>>, vector<128x128xbf16>
    %cst_132 = arith.constant dense<0.000000e+00> : vector<16x128xf32>
    %340 = tpu.matmul %338, %339, %cst_132 {dimension_numbers = #tpu.dot_dimension_numbers<[1], [0], [0], [1], [0, 0, 1, 1], [], []>} : vector<16x128xbf16>, vector<128x128xbf16>, vector<16x128xf32> -> vector<16x128xf32>
    %341 = arith.addf %340, %5 : vector<16x128xf32>
    %342 = vector.extract_strided_slice %341 {offsets = [0, 0], sizes = [8, 128], strides = [1, 1]} : vector<16x128xf32> to vector<8x128xf32>
    %343 = arith.addf %223, %342 : vector<8x128xf32>
    %cst_133 = arith.constant 1.000000e+00 : f32
    %344 = vector.broadcast %cst_133 : f32 to vector<8x128xf32>
    %345 = arith.cmpf oge, %343, %344 : vector<8x128xf32>
    %346 = arith.extui %345 : vector<8x128xi1> to vector<8x128xi32>
    %347 = arith.sitofp %346 : vector<8x128xi32> to vector<8x128xf32>
    %cst_134 = arith.constant 0.000000e+00 : f32
    %348 = vector.broadcast %cst_134 : f32 to vector<8x128xf32>
    %349 = arith.select %345, %348, %343 : vector<8x128xi1>, vector<8x128xf32>
    %350 = vector.extract_strided_slice %341 {offsets = [8, 0], sizes = [8, 128], strides = [1, 1]} : vector<16x128xf32> to vector<8x128xf32>
    %351 = arith.addf %349, %350 : vector<8x128xf32>
    %cst_135 = arith.constant 1.000000e+00 : f32
    %352 = vector.broadcast %cst_135 : f32 to vector<8x128xf32>
    %353 = arith.cmpf oge, %351, %352 : vector<8x128xf32>
    %354 = arith.extui %353 : vector<8x128xi1> to vector<8x128xi32>
    %355 = arith.sitofp %354 : vector<8x128xi32> to vector<8x128xf32>
    %cst_136 = arith.constant 0.000000e+00 : f32
    %356 = vector.broadcast %cst_136 : f32 to vector<8x128xf32>
    %357 = arith.select %353, %356, %351 : vector<8x128xi1>, vector<8x128xf32>
    %358 = tpu.concatenate %347, %355 in 0 : vector<8x128xf32>, vector<8x128xf32> -> vector<16x128xf32>
    %359 = arith.truncf %358 : vector<16x128xf32> to vector<16x128xbf16>
    %c0_137 = arith.constant 0 : index
    %c0_138 = arith.constant 0 : index
    %360 = vector.load %arg7[%c0_137, %c0_138] : memref<128x128xbf16, #tpu.memory_space<vmem>>, vector<128x128xbf16>
    %cst_139 = arith.constant dense<0.000000e+00> : vector<16x128xf32>
    %361 = tpu.matmul %359, %360, %cst_139 {dimension_numbers = #tpu.dot_dimension_numbers<[1], [0], [0], [1], [0, 0, 1, 1], [], []>} : vector<16x128xbf16>, vector<128x128xbf16>, vector<16x128xf32> -> vector<16x128xf32>
    %362 = arith.addf %358, %361 : vector<16x128xf32>
    %363 = arith.addf %362, %14 : vector<16x128xf32>
    %364 = vector.extract_strided_slice %363 {offsets = [0, 0], sizes = [8, 128], strides = [1, 1]} : vector<16x128xf32> to vector<8x128xf32>
    %365 = arith.addf %245, %364 : vector<8x128xf32>
    %cst_140 = arith.constant 1.000000e+00 : f32
    %366 = vector.broadcast %cst_140 : f32 to vector<8x128xf32>
    %367 = arith.cmpf oge, %365, %366 : vector<8x128xf32>
    %368 = arith.extui %367 : vector<8x128xi1> to vector<8x128xi32>
    %369 = arith.sitofp %368 : vector<8x128xi32> to vector<8x128xf32>
    %cst_141 = arith.constant 0.000000e+00 : f32
    %370 = vector.broadcast %cst_141 : f32 to vector<8x128xf32>
    %371 = arith.select %367, %370, %365 : vector<8x128xi1>, vector<8x128xf32>
    %372 = vector.extract_strided_slice %363 {offsets = [8, 0], sizes = [8, 128], strides = [1, 1]} : vector<16x128xf32> to vector<8x128xf32>
    %373 = arith.addf %371, %372 : vector<8x128xf32>
    %cst_142 = arith.constant 1.000000e+00 : f32
    %374 = vector.broadcast %cst_142 : f32 to vector<8x128xf32>
    %375 = arith.cmpf oge, %373, %374 : vector<8x128xf32>
    %376 = arith.extui %375 : vector<8x128xi1> to vector<8x128xi32>
    %377 = arith.sitofp %376 : vector<8x128xi32> to vector<8x128xf32>
    %cst_143 = arith.constant 0.000000e+00 : f32
    %378 = vector.broadcast %cst_143 : f32 to vector<8x128xf32>
    %379 = arith.select %375, %378, %373 : vector<8x128xi1>, vector<8x128xf32>
    %380 = tpu.concatenate %369, %377 in 0 : vector<8x128xf32>, vector<8x128xf32> -> vector<16x128xf32>
    %381 = arith.truncf %380 : vector<16x128xf32> to vector<16x128xbf16>
    %c0_144 = arith.constant 0 : index
    %c0_145 = arith.constant 0 : index
    %382 = vector.load %arg9[%c0_144, %c0_145] : memref<128x128xbf16, #tpu.memory_space<vmem>>, vector<128x128xbf16>
    %cst_146 = arith.constant dense<0.000000e+00> : vector<16x128xf32>
    %383 = tpu.matmul %381, %382, %cst_146 {dimension_numbers = #tpu.dot_dimension_numbers<[1], [0], [0], [1], [0, 0, 1, 1], [], []>} : vector<16x128xbf16>, vector<128x128xbf16>, vector<16x128xf32> -> vector<16x128xf32>
    %384 = arith.addf %383, %8 : vector<16x128xf32>
    %385 = vector.extract_strided_slice %384 {offsets = [0, 0], sizes = [8, 128], strides = [1, 1]} : vector<16x128xf32> to vector<8x128xf32>
    %386 = arith.addf %266, %385 : vector<8x128xf32>
    %cst_147 = arith.constant 1.000000e+00 : f32
    %387 = vector.broadcast %cst_147 : f32 to vector<8x128xf32>
    %388 = arith.cmpf oge, %386, %387 : vector<8x128xf32>
    %389 = arith.extui %388 : vector<8x128xi1> to vector<8x128xi32>
    %390 = arith.sitofp %389 : vector<8x128xi32> to vector<8x128xf32>
    %cst_148 = arith.constant 0.000000e+00 : f32
    %391 = vector.broadcast %cst_148 : f32 to vector<8x128xf32>
    %392 = arith.select %388, %391, %386 : vector<8x128xi1>, vector<8x128xf32>
    %393 = vector.extract_strided_slice %384 {offsets = [8, 0], sizes = [8, 128], strides = [1, 1]} : vector<16x128xf32> to vector<8x128xf32>
    %394 = arith.addf %392, %393 : vector<8x128xf32>
    %cst_149 = arith.constant 1.000000e+00 : f32
    %395 = vector.broadcast %cst_149 : f32 to vector<8x128xf32>
    %396 = arith.cmpf oge, %394, %395 : vector<8x128xf32>
    %397 = arith.extui %396 : vector<8x128xi1> to vector<8x128xi32>
    %398 = arith.sitofp %397 : vector<8x128xi32> to vector<8x128xf32>
    %cst_150 = arith.constant 0.000000e+00 : f32
    %399 = vector.broadcast %cst_150 : f32 to vector<8x128xf32>
    %400 = arith.select %396, %399, %394 : vector<8x128xi1>, vector<8x128xf32>
    %401 = tpu.concatenate %390, %398 in 0 : vector<8x128xf32>, vector<8x128xf32> -> vector<16x128xf32>
    %402 = arith.truncf %401 : vector<16x128xf32> to vector<16x128xbf16>
    %c0_151 = arith.constant 0 : index
    %c0_152 = arith.constant 0 : index
    %403 = vector.load %arg11[%c0_151, %c0_152] : memref<128x128xbf16, #tpu.memory_space<vmem>>, vector<128x128xbf16>
    %cst_153 = arith.constant dense<0.000000e+00> : vector<16x128xf32>
    %404 = tpu.matmul %402, %403, %cst_153 {dimension_numbers = #tpu.dot_dimension_numbers<[1], [0], [0], [1], [0, 0, 1, 1], [], []>} : vector<16x128xbf16>, vector<128x128xbf16>, vector<16x128xf32> -> vector<16x128xf32>
    %405 = arith.addf %401, %404 : vector<16x128xf32>
    %406 = arith.addf %405, %17 : vector<16x128xf32>
    %407 = vector.extract_strided_slice %406 {offsets = [0, 0], sizes = [8, 128], strides = [1, 1]} : vector<16x128xf32> to vector<8x128xf32>
    %408 = arith.addf %288, %407 : vector<8x128xf32>
    %cst_154 = arith.constant 1.000000e+00 : f32
    %409 = vector.broadcast %cst_154 : f32 to vector<8x128xf32>
    %410 = arith.cmpf oge, %408, %409 : vector<8x128xf32>
    %411 = arith.extui %410 : vector<8x128xi1> to vector<8x128xi32>
    %412 = arith.sitofp %411 : vector<8x128xi32> to vector<8x128xf32>
    %cst_155 = arith.constant 0.000000e+00 : f32
    %413 = vector.broadcast %cst_155 : f32 to vector<8x128xf32>
    %414 = arith.select %410, %413, %408 : vector<8x128xi1>, vector<8x128xf32>
    %415 = vector.extract_strided_slice %406 {offsets = [8, 0], sizes = [8, 128], strides = [1, 1]} : vector<16x128xf32> to vector<8x128xf32>
    %416 = arith.addf %414, %415 : vector<8x128xf32>
    %cst_156 = arith.constant 1.000000e+00 : f32
    %417 = vector.broadcast %cst_156 : f32 to vector<8x128xf32>
    %418 = arith.cmpf oge, %416, %417 : vector<8x128xf32>
    %419 = arith.extui %418 : vector<8x128xi1> to vector<8x128xi32>
    %420 = arith.sitofp %419 : vector<8x128xi32> to vector<8x128xf32>
    %cst_157 = arith.constant 0.000000e+00 : f32
    %421 = vector.broadcast %cst_157 : f32 to vector<8x128xf32>
    %422 = arith.select %418, %421, %416 : vector<8x128xi1>, vector<8x128xf32>
    %423 = tpu.concatenate %412, %420 in 0 : vector<8x128xf32>, vector<8x128xf32> -> vector<16x128xf32>
    %424 = arith.truncf %423 : vector<16x128xf32> to vector<16x128xbf16>
    %c0_158 = arith.constant 0 : index
    %c0_159 = arith.constant 0 : index
    %425 = vector.load %arg13[%c0_158, %c0_159] : memref<128x128xbf16, #tpu.memory_space<vmem>>, vector<128x128xbf16>
    %cst_160 = arith.constant dense<0.000000e+00> : vector<16x128xf32>
    %426 = tpu.matmul %424, %425, %cst_160 {dimension_numbers = #tpu.dot_dimension_numbers<[1], [0], [0], [1], [0, 0, 1, 1], [], []>} : vector<16x128xbf16>, vector<128x128xbf16>, vector<16x128xf32> -> vector<16x128xf32>
    %427 = arith.addf %426, %20 : vector<16x128xf32>
    %c32_161 = arith.constant 32 : index
    %c0_162 = arith.constant 0 : index
    %428 = vector.load %arg15[%c32_161, %c0_162] : memref<64x128xf32, #tpu.memory_space<vmem>>, vector<16x128xf32>
    tpu.vector_store %arg15[%c32_161, %c0_162], %427 {strides = array<i32>} : memref<64x128xf32, #tpu.memory_space<vmem>>, vector<16x128xf32>,
    %c48 = arith.constant 48 : index
    %c0_163 = arith.constant 0 : index
    %429 = vector.load %arg0[%c48, %c0_163] : memref<64x128xbf16, #tpu.memory_space<vmem>>, vector<16x128xbf16>
    %c0_164 = arith.constant 0 : index
    %c0_165 = arith.constant 0 : index
    %430 = vector.load %arg1[%c0_164, %c0_165] : memref<128x128xbf16, #tpu.memory_space<vmem>>, vector<128x128xbf16>
    %cst_166 = arith.constant dense<0.000000e+00> : vector<16x128xf32>
    %431 = tpu.matmul %429, %430, %cst_166 {dimension_numbers = #tpu.dot_dimension_numbers<[1], [0], [0], [1], [0, 0, 1, 1], [], []>} : vector<16x128xbf16>, vector<128x128xbf16>, vector<16x128xf32> -> vector<16x128xf32>
    %432 = arith.addf %431, %2 : vector<16x128xf32>
    %433 = vector.extract_strided_slice %432 {offsets = [0, 0], sizes = [8, 128], strides = [1, 1]} : vector<16x128xf32> to vector<8x128xf32>
    %434 = arith.addf %314, %433 : vector<8x128xf32>
    %cst_167 = arith.constant 1.000000e+00 : f32
    %435 = vector.broadcast %cst_167 : f32 to vector<8x128xf32>
    %436 = arith.cmpf oge, %434, %435 : vector<8x128xf32>
    %437 = arith.extui %436 : vector<8x128xi1> to vector<8x128xi32>
    %438 = arith.sitofp %437 : vector<8x128xi32> to vector<8x128xf32>
    %cst_168 = arith.constant 0.000000e+00 : f32
    %439 = vector.broadcast %cst_168 : f32 to vector<8x128xf32>
    %440 = arith.select %436, %439, %434 : vector<8x128xi1>, vector<8x128xf32>
    %441 = vector.extract_strided_slice %432 {offsets = [8, 0], sizes = [8, 128], strides = [1, 1]} : vector<16x128xf32> to vector<8x128xf32>
    %442 = arith.addf %440, %441 : vector<8x128xf32>
    %cst_169 = arith.constant 1.000000e+00 : f32
    %443 = vector.broadcast %cst_169 : f32 to vector<8x128xf32>
    %444 = arith.cmpf oge, %442, %443 : vector<8x128xf32>
    %445 = arith.extui %444 : vector<8x128xi1> to vector<8x128xi32>
    %446 = arith.sitofp %445 : vector<8x128xi32> to vector<8x128xf32>
    %447 = tpu.concatenate %438, %446 in 0 : vector<8x128xf32>, vector<8x128xf32> -> vector<16x128xf32>
    %448 = arith.truncf %447 : vector<16x128xf32> to vector<16x128xbf16>
    %c0_170 = arith.constant 0 : index
    %c0_171 = arith.constant 0 : index
    %449 = vector.load %arg3[%c0_170, %c0_171] : memref<128x128xbf16, #tpu.memory_space<vmem>>, vector<128x128xbf16>
    %cst_172 = arith.constant dense<0.000000e+00> : vector<16x128xf32>
    %450 = tpu.matmul %448, %449, %cst_172 {dimension_numbers = #tpu.dot_dimension_numbers<[1], [0], [0], [1], [0, 0, 1, 1], [], []>} : vector<16x128xbf16>, vector<128x128xbf16>, vector<16x128xf32> -> vector<16x128xf32>
    %451 = arith.addf %447, %450 : vector<16x128xf32>
    %452 = arith.addf %451, %11 : vector<16x128xf32>
    %453 = vector.extract_strided_slice %452 {offsets = [0, 0], sizes = [8, 128], strides = [1, 1]} : vector<16x128xf32> to vector<8x128xf32>
    %454 = arith.addf %336, %453 : vector<8x128xf32>
    %cst_173 = arith.constant 1.000000e+00 : f32
    %455 = vector.broadcast %cst_173 : f32 to vector<8x128xf32>
    %456 = arith.cmpf oge, %454, %455 : vector<8x128xf32>
    %457 = arith.extui %456 : vector<8x128xi1> to vector<8x128xi32>
    %458 = arith.sitofp %457 : vector<8x128xi32> to vector<8x128xf32>
    %cst_174 = arith.constant 0.000000e+00 : f32
    %459 = vector.broadcast %cst_174 : f32 to vector<8x128xf32>
    %460 = arith.select %456, %459, %454 : vector<8x128xi1>, vector<8x128xf32>
    %461 = vector.extract_strided_slice %452 {offsets = [8, 0], sizes = [8, 128], strides = [1, 1]} : vector<16x128xf32> to vector<8x128xf32>
    %462 = arith.addf %460, %461 : vector<8x128xf32>
    %cst_175 = arith.constant 1.000000e+00 : f32
    %463 = vector.broadcast %cst_175 : f32 to vector<8x128xf32>
    %464 = arith.cmpf oge, %462, %463 : vector<8x128xf32>
    %465 = arith.extui %464 : vector<8x128xi1> to vector<8x128xi32>
    %466 = arith.sitofp %465 : vector<8x128xi32> to vector<8x128xf32>
    %467 = tpu.concatenate %458, %466 in 0 : vector<8x128xf32>, vector<8x128xf32> -> vector<16x128xf32>
    %468 = arith.truncf %467 : vector<16x128xf32> to vector<16x128xbf16>
    %c0_176 = arith.constant 0 : index
    %c0_177 = arith.constant 0 : index
    %469 = vector.load %arg5[%c0_176, %c0_177] : memref<128x128xbf16, #tpu.memory_space<vmem>>, vector<128x128xbf16>
    %cst_178 = arith.constant dense<0.000000e+00> : vector<16x128xf32>
    %470 = tpu.matmul %468, %469, %cst_178 {dimension_numbers = #tpu.dot_dimension_numbers<[1], [0], [0], [1], [0, 0, 1, 1], [], []>} : vector<16x128xbf16>, vector<128x128xbf16>, vector<16x128xf32> -> vector<16x128xf32>
    %471 = arith.addf %470, %5 : vector<16x128xf32>
    %472 = vector.extract_strided_slice %471 {offsets = [0, 0], sizes = [8, 128], strides = [1, 1]} : vector<16x128xf32> to vector<8x128xf32>
    %473 = arith.addf %357, %472 : vector<8x128xf32>
    %cst_179 = arith.constant 1.000000e+00 : f32
    %474 = vector.broadcast %cst_179 : f32 to vector<8x128xf32>
    %475 = arith.cmpf oge, %473, %474 : vector<8x128xf32>
    %476 = arith.extui %475 : vector<8x128xi1> to vector<8x128xi32>
    %477 = arith.sitofp %476 : vector<8x128xi32> to vector<8x128xf32>
    %cst_180 = arith.constant 0.000000e+00 : f32
    %478 = vector.broadcast %cst_180 : f32 to vector<8x128xf32>
    %479 = arith.select %475, %478, %473 : vector<8x128xi1>, vector<8x128xf32>
    %480 = vector.extract_strided_slice %471 {offsets = [8, 0], sizes = [8, 128], strides = [1, 1]} : vector<16x128xf32> to vector<8x128xf32>
    %481 = arith.addf %479, %480 : vector<8x128xf32>
    %cst_181 = arith.constant 1.000000e+00 : f32
    %482 = vector.broadcast %cst_181 : f32 to vector<8x128xf32>
    %483 = arith.cmpf oge, %481, %482 : vector<8x128xf32>
    %484 = arith.extui %483 : vector<8x128xi1> to vector<8x128xi32>
    %485 = arith.sitofp %484 : vector<8x128xi32> to vector<8x128xf32>
    %486 = tpu.concatenate %477, %485 in 0 : vector<8x128xf32>, vector<8x128xf32> -> vector<16x128xf32>
    %487 = arith.truncf %486 : vector<16x128xf32> to vector<16x128xbf16>
    %c0_182 = arith.constant 0 : index
    %c0_183 = arith.constant 0 : index
    %488 = vector.load %arg7[%c0_182, %c0_183] : memref<128x128xbf16, #tpu.memory_space<vmem>>, vector<128x128xbf16>
    %cst_184 = arith.constant dense<0.000000e+00> : vector<16x128xf32>
    %489 = tpu.matmul %487, %488, %cst_184 {dimension_numbers = #tpu.dot_dimension_numbers<[1], [0], [0], [1], [0, 0, 1, 1], [], []>} : vector<16x128xbf16>, vector<128x128xbf16>, vector<16x128xf32> -> vector<16x128xf32>
    %490 = arith.addf %486, %489 : vector<16x128xf32>
    %491 = arith.addf %490, %14 : vector<16x128xf32>
    %492 = vector.extract_strided_slice %491 {offsets = [0, 0], sizes = [8, 128], strides = [1, 1]} : vector<16x128xf32> to vector<8x128xf32>
    %493 = arith.addf %379, %492 : vector<8x128xf32>
    %cst_185 = arith.constant 1.000000e+00 : f32
    %494 = vector.broadcast %cst_185 : f32 to vector<8x128xf32>
    %495 = arith.cmpf oge, %493, %494 : vector<8x128xf32>
    %496 = arith.extui %495 : vector<8x128xi1> to vector<8x128xi32>
    %497 = arith.sitofp %496 : vector<8x128xi32> to vector<8x128xf32>
    %cst_186 = arith.constant 0.000000e+00 : f32
    %498 = vector.broadcast %cst_186 : f32 to vector<8x128xf32>
    %499 = arith.select %495, %498, %493 : vector<8x128xi1>, vector<8x128xf32>
    %500 = vector.extract_strided_slice %491 {offsets = [8, 0], sizes = [8, 128], strides = [1, 1]} : vector<16x128xf32> to vector<8x128xf32>
    %501 = arith.addf %499, %500 : vector<8x128xf32>
    %cst_187 = arith.constant 1.000000e+00 : f32
    %502 = vector.broadcast %cst_187 : f32 to vector<8x128xf32>
    %503 = arith.cmpf oge, %501, %502 : vector<8x128xf32>
    %504 = arith.extui %503 : vector<8x128xi1> to vector<8x128xi32>
    %505 = arith.sitofp %504 : vector<8x128xi32> to vector<8x128xf32>
    %506 = tpu.concatenate %497, %505 in 0 : vector<8x128xf32>, vector<8x128xf32> -> vector<16x128xf32>
    %507 = arith.truncf %506 : vector<16x128xf32> to vector<16x128xbf16>
    %c0_188 = arith.constant 0 : index
    %c0_189 = arith.constant 0 : index
    %508 = vector.load %arg9[%c0_188, %c0_189] : memref<128x128xbf16, #tpu.memory_space<vmem>>, vector<128x128xbf16>
    %cst_190 = arith.constant dense<0.000000e+00> : vector<16x128xf32>
    %509 = tpu.matmul %507, %508, %cst_190 {dimension_numbers = #tpu.dot_dimension_numbers<[1], [0], [0], [1], [0, 0, 1, 1], [], []>} : vector<16x128xbf16>, vector<128x128xbf16>, vector<16x128xf32> -> vector<16x128xf32>
    %510 = arith.addf %509, %8 : vector<16x128xf32>
    %511 = vector.extract_strided_slice %510 {offsets = [0, 0], sizes = [8, 128], strides = [1, 1]} : vector<16x128xf32> to vector<8x128xf32>
    %512 = arith.addf %400, %511 : vector<8x128xf32>
    %cst_191 = arith.constant 1.000000e+00 : f32
    %513 = vector.broadcast %cst_191 : f32 to vector<8x128xf32>
    %514 = arith.cmpf oge, %512, %513 : vector<8x128xf32>
    %515 = arith.extui %514 : vector<8x128xi1> to vector<8x128xi32>
    %516 = arith.sitofp %515 : vector<8x128xi32> to vector<8x128xf32>
    %cst_192 = arith.constant 0.000000e+00 : f32
    %517 = vector.broadcast %cst_192 : f32 to vector<8x128xf32>
    %518 = arith.select %514, %517, %512 : vector<8x128xi1>, vector<8x128xf32>
    %519 = vector.extract_strided_slice %510 {offsets = [8, 0], sizes = [8, 128], strides = [1, 1]} : vector<16x128xf32> to vector<8x128xf32>
    %520 = arith.addf %518, %519 : vector<8x128xf32>
    %cst_193 = arith.constant 1.000000e+00 : f32
    %521 = vector.broadcast %cst_193 : f32 to vector<8x128xf32>
    %522 = arith.cmpf oge, %520, %521 : vector<8x128xf32>
    %523 = arith.extui %522 : vector<8x128xi1> to vector<8x128xi32>
    %524 = arith.sitofp %523 : vector<8x128xi32> to vector<8x128xf32>
    %525 = tpu.concatenate %516, %524 in 0 : vector<8x128xf32>, vector<8x128xf32> -> vector<16x128xf32>
    %526 = arith.truncf %525 : vector<16x128xf32> to vector<16x128xbf16>
    %c0_194 = arith.constant 0 : index
    %c0_195 = arith.constant 0 : index
    %527 = vector.load %arg11[%c0_194, %c0_195] : memref<128x128xbf16, #tpu.memory_space<vmem>>, vector<128x128xbf16>
    %cst_196 = arith.constant dense<0.000000e+00> : vector<16x128xf32>
    %528 = tpu.matmul %526, %527, %cst_196 {dimension_numbers = #tpu.dot_dimension_numbers<[1], [0], [0], [1], [0, 0, 1, 1], [], []>} : vector<16x128xbf16>, vector<128x128xbf16>, vector<16x128xf32> -> vector<16x128xf32>
    %529 = arith.addf %525, %528 : vector<16x128xf32>
    %530 = arith.addf %529, %17 : vector<16x128xf32>
    %531 = vector.extract_strided_slice %530 {offsets = [0, 0], sizes = [8, 128], strides = [1, 1]} : vector<16x128xf32> to vector<8x128xf32>
    %532 = arith.addf %422, %531 : vector<8x128xf32>
    %cst_197 = arith.constant 1.000000e+00 : f32
    %533 = vector.broadcast %cst_197 : f32 to vector<8x128xf32>
    %534 = arith.cmpf oge, %532, %533 : vector<8x128xf32>
    %535 = arith.extui %534 : vector<8x128xi1> to vector<8x128xi32>
    %536 = arith.sitofp %535 : vector<8x128xi32> to vector<8x128xf32>
    %cst_198 = arith.constant 0.000000e+00 : f32
    %537 = vector.broadcast %cst_198 : f32 to vector<8x128xf32>
    %538 = arith.select %534, %537, %532 : vector<8x128xi1>, vector<8x128xf32>
    %539 = vector.extract_strided_slice %530 {offsets = [8, 0], sizes = [8, 128], strides = [1, 1]} : vector<16x128xf32> to vector<8x128xf32>
    %540 = arith.addf %538, %539 : vector<8x128xf32>
    %cst_199 = arith.constant 1.000000e+00 : f32
    %541 = vector.broadcast %cst_199 : f32 to vector<8x128xf32>
    %542 = arith.cmpf oge, %540, %541 : vector<8x128xf32>
    %543 = arith.extui %542 : vector<8x128xi1> to vector<8x128xi32>
    %544 = arith.sitofp %543 : vector<8x128xi32> to vector<8x128xf32>
    %545 = tpu.concatenate %536, %544 in 0 : vector<8x128xf32>, vector<8x128xf32> -> vector<16x128xf32>
    %546 = arith.truncf %545 : vector<16x128xf32> to vector<16x128xbf16>
    %c0_200 = arith.constant 0 : index
    %c0_201 = arith.constant 0 : index
    %547 = vector.load %arg13[%c0_200, %c0_201] : memref<128x128xbf16, #tpu.memory_space<vmem>>, vector<128x128xbf16>
    %cst_202 = arith.constant dense<0.000000e+00> : vector<16x128xf32>
    %548 = tpu.matmul %546, %547, %cst_202 {dimension_numbers = #tpu.dot_dimension_numbers<[1], [0], [0], [1], [0, 0, 1, 1], [], []>} : vector<16x128xbf16>, vector<128x128xbf16>, vector<16x128xf32> -> vector<16x128xf32>
    %549 = arith.addf %548, %20 : vector<16x128xf32>
    %c48_203 = arith.constant 48 : index
    %c0_204 = arith.constant 0 : index
    %550 = vector.load %arg15[%c48_203, %c0_204] : memref<64x128xf32, #tpu.memory_space<vmem>>, vector<16x128xf32>
    tpu.vector_store %arg15[%c48_203, %c0_204], %549 {strides = array<i32>} : memref<64x128xf32, #tpu.memory_space<vmem>>, vector<16x128xf32>,
    return
  }
}

</mosaic_0001>

<llo_original>
// kernel: tpu_custom_call.1
$region0: #{tpu_custom_call.1}
  #allocation0 [shape = 'u32[]', space=smem, size = 0x4, offset = 0x4, fixed_abs, tag = 'smem constant byte address 0x4 - core index']
  #allocation1 [shape = 'u32[144,128]{1,0:T(1,128)}', space=vmem, size = 0x12000, scoped, tag = 'internal scratch']
  %s0 = inlined_call_operand.hbm [shape: bf16[64,128], index: 0, kind: input, shape index: {}]
  %s1 = inlined_call_operand.hbm [shape: bf16[128,128], index: 1, kind: input, shape index: {}]
  %s2 = inlined_call_operand.vmem [shape: f32[1,128], index: 2, kind: input, shape index: {}]
  %s3 = inlined_call_operand.hbm [shape: bf16[128,128], index: 3, kind: input, shape index: {}]
  %s4 = inlined_call_operand.vmem [shape: f32[1,128], index: 4, kind: input, shape index: {}]
  %s5 = inlined_call_operand.hbm [shape: bf16[128,128], index: 5, kind: input, shape index: {}]
  %s6 = inlined_call_operand.vmem [shape: f32[1,128], index: 6, kind: input, shape index: {}]
  %s7 = inlined_call_operand.hbm [shape: bf16[128,128], index: 7, kind: input, shape index: {}]
  %s8 = inlined_call_operand.vmem [shape: f32[1,128], index: 8, kind: input, shape index: {}]
  %s9 = inlined_call_operand.hbm [shape: bf16[128,128], index: 9, kind: input, shape index: {}]
  %s10 = inlined_call_operand.vmem [shape: f32[1,128], index: 10, kind: input, shape index: {}]
  %s11 = inlined_call_operand.hbm [shape: bf16[128,128], index: 11, kind: input, shape index: {}]
  %s12 = inlined_call_operand.vmem [shape: f32[1,128], index: 12, kind: input, shape index: {}]
  %s13 = inlined_call_operand.hbm [shape: bf16[128,128], index: 13, kind: input, shape index: {}]
  %s14 = inlined_call_operand.vmem [shape: f32[1,128], index: 14, kind: input, shape index: {}]
  %s15 = inlined_call_operand.hbm [shape: f32[64,128], index: 15, kind: output, shape index: {}]
  %s16 = sld [smem:[#allocation0]]
  $region102: #{tpu_custom_call.1} parent=0
    _
  %s18 = ssub.s32 1, %s16
  %s19 = scalar_select 0, %s18, %s16
  $region1: #{tpu_custom_call.1} parent=0
    #allocation2 [shape = 'u8[16384]{0}', space=vmem, size = 0x4000, scoped, tag = 'input window, operand 0, single buffered']
    #allocation3 [shape = 's32[1]{0}', space=sflag, size = 0x4, scoped, tag = 'scoped memory for tpu_custom_call.1']
    #allocation4 [shape = 's32[1]{0}', space=sflag, size = 0x4, scoped, tag = 'scoped memory for tpu_custom_call.1']
    #allocation5 [shape = 'u8[32768]{0}', space=vmem, size = 0x8000, scoped, tag = 'input window, operand 1, single buffered']
    #allocation6 [shape = 's32[1]{0}', space=sflag, size = 0x4, scoped, tag = 'scoped memory for tpu_custom_call.1']
    #allocation7 [shape = 'u8[32768]{0}', space=vmem, size = 0x8000, scoped, tag = 'input window, operand 3, single buffered']
    #allocation8 [shape = 'u8[32768]{0}', space=vmem, size = 0x8000, scoped, tag = 'input window, operand 5, single buffered']
    #allocation9 [shape = 's32[1]{0}', space=sflag, size = 0x4, scoped, tag = 'scoped memory for tpu_custom_call.1']
    #allocation10 [shape = 'u8[32768]{0}', space=vmem, size = 0x8000, scoped, tag = 'input window, operand 7, single buffered']
    #allocation11 [shape = 'u8[32768]{0}', space=vmem, size = 0x8000, scoped, tag = 'input window, operand 9, single buffered']
    #allocation12 [shape = 's32[1]{0}', space=sflag, size = 0x4, scoped, tag = 'scoped memory for tpu_custom_call.1']
    #allocation13 [shape = 'u8[32768]{0}', space=vmem, size = 0x8000, scoped, tag = 'input window, operand 11, single buffered']
    #allocation14 [shape = 'u8[32768]{0}', space=vmem, size = 0x8000, scoped, tag = 'input window, operand 13, single buffered']
    #allocation15 [shape = 's32[1]{0}', space=sflag, size = 0x4, scoped, tag = 'scoped memory for tpu_custom_call.1']
    #allocation16 [shape = 'u8[32768]{0}', space=vmem, size = 0x8000, scoped, tag = 'output window, operand 0, single buffered']
    %20 = vsyncpa [#allocation3], 0
    %21 = vsyncpa [#allocation6], 0
    %22 = vsyncpa [#allocation9], 0
    %23 = vsyncpa [#allocation12], 0
    %24 = vsyncpa [#allocation15], 0
    %25 = vsyncpa [#allocation4], 0
    // Predicated region
    $region2: #{tpu_custom_call.1} parent=1 // pred_check
      _
    $region3: #{tpu_custom_call.1} parent=1 // pred_check_branch
      %27 = sbr.rel (0) target = $region5
    $region4: #{tpu_custom_call.1} parent=1 // pred_region
      %s29 = ssub.s32 512, 512
      %30 = vsyncadd [#allocation3], %s29
      %s31 = sshll.u32 [#allocation2], 4
      %s32 = int_to_ptr.vmem [resolvable:$true] %s31
      %37 = dma.hbm_to_vmem [thread:$0]  %s0, 512, %s32, [#allocation3], 64, 64, 4
    $region5: #{tpu_custom_call.1} parent=1 // pred_fallthru
      _
    // Predicated region
    $region6: #{tpu_custom_call.1} parent=1 // pred_check
      _
    $region7: #{tpu_custom_call.1} parent=1 // pred_check_branch
      %39 = sbr.rel (0) target = $region9
    $region8: #{tpu_custom_call.1} parent=1 // pred_region
      %s41 = ssub.s32 1024, 1024
      %42 = vsyncadd [#allocation6], %s41
      %s43 = sshll.u32 [#allocation5], 4
      %s44 = int_to_ptr.vmem [resolvable:$true] %s43
      %49 = dma.hbm_to_vmem [thread:$0]  %s1, 1024, %s44, [#allocation6], 64, 64, 4
    $region9: #{tpu_custom_call.1} parent=1 // pred_fallthru
      _
    // Predicated region
    $region10: #{tpu_custom_call.1} parent=1 // pred_check
      _
    $region11: #{tpu_custom_call.1} parent=1 // pred_check_branch
      %51 = sbr.rel (0) target = $region13
    $region12: #{tpu_custom_call.1} parent=1 // pred_region
      _
    $region13: #{tpu_custom_call.1} parent=1 // pred_fallthru
      _
    // Predicated region
    $region14: #{tpu_custom_call.1} parent=1 // pred_check
      _
    $region15: #{tpu_custom_call.1} parent=1 // pred_check_branch
      %53 = sbr.rel (0) target = $region17
    $region16: #{tpu_custom_call.1} parent=1 // pred_region
      %s55 = ssub.s32 1024, 1024
      %56 = vsyncadd [#allocation6], %s55
      %s57 = sshll.u32 [#allocation7], 4
      %s58 = int_to_ptr.vmem [resolvable:$true] %s57
      %63 = dma.hbm_to_vmem [thread:$0]  %s3, 1024, %s58, [#allocation6], 64, 64, 4
    $region17: #{tpu_custom_call.1} parent=1 // pred_fallthru
      _
    // Predicated region
    $region18: #{tpu_custom_call.1} parent=1 // pred_check
      _
    $region19: #{tpu_custom_call.1} parent=1 // pred_check_branch
      %65 = sbr.rel (0) target = $region21
    $region20: #{tpu_custom_call.1} parent=1 // pred_region
      _
    $region21: #{tpu_custom_call.1} parent=1 // pred_fallthru
      _
    // Predicated region
    $region22: #{tpu_custom_call.1} parent=1 // pred_check
      _
    $region23: #{tpu_custom_call.1} parent=1 // pred_check_branch
      %67 = sbr.rel (0) target = $region25
    $region24: #{tpu_custom_call.1} parent=1 // pred_region
      %s69 = ssub.s32 1024, 1024
      %70 = vsyncadd [#allocation9], %s69
      %s71 = sshll.u32 [#allocation8], 4
      %s72 = int_to_ptr.vmem [resolvable:$true] %s71
      %77 = dma.hbm_to_vmem [thread:$0]  %s5, 1024, %s72, [#allocation9], 64, 64, 4
    $region25: #{tpu_custom_call.1} parent=1 // pred_fallthru
      _
    // Predicated region
    $region26: #{tpu_custom_call.1} parent=1 // pred_check
      _
    $region27: #{tpu_custom_call.1} parent=1 // pred_check_branch
      %79 = sbr.rel (0) target = $region29
    $region28: #{tpu_custom_call.1} parent=1 // pred_region
      _
    $region29: #{tpu_custom_call.1} parent=1 // pred_fallthru
      _
    // Predicated region
    $region30: #{tpu_custom_call.1} parent=1 // pred_check
      _
    $region31: #{tpu_custom_call.1} parent=1 // pred_check_branch
      %81 = sbr.rel (0) target = $region33
    $region32: #{tpu_custom_call.1} parent=1 // pred_region
      %s83 = ssub.s32 1024, 1024
      %84 = vsyncadd [#allocation9], %s83
      %s85 = sshll.u32 [#allocation10], 4
      %s86 = int_to_ptr.vmem [resolvable:$true] %s85
      %91 = dma.hbm_to_vmem [thread:$0]  %s7, 1024, %s86, [#allocation9], 64, 64, 4
    $region33: #{tpu_custom_call.1} parent=1 // pred_fallthru
      _
    // Predicated region
    $region34: #{tpu_custom_call.1} parent=1 // pred_check
      _
    $region35: #{tpu_custom_call.1} parent=1 // pred_check_branch
      %93 = sbr.rel (0) target = $region37
    $region36: #{tpu_custom_call.1} parent=1 // pred_region
      _
    $region37: #{tpu_custom_call.1} parent=1 // pred_fallthru
      _
    // Predicated region
    $region38: #{tpu_custom_call.1} parent=1 // pred_check
      _
    $region39: #{tpu_custom_call.1} parent=1 // pred_check_branch
      %95 = sbr.rel (0) target = $region41
    $region40: #{tpu_custom_call.1} parent=1 // pred_region
      %s97 = ssub.s32 1024, 1024
      %98 = vsyncadd [#allocation12], %s97
      %s99 = sshll.u32 [#allocation11], 4
      %s100 = int_to_ptr.vmem [resolvable:$true] %s99
      %105 = dma.hbm_to_vmem [thread:$0]  %s9, 1024, %s100, [#allocation12], 64, 64, 4
    $region41: #{tpu_custom_call.1} parent=1 // pred_fallthru
      _
    // Predicated region
    $region42: #{tpu_custom_call.1} parent=1 // pred_check
      _
    $region43: #{tpu_custom_call.1} parent=1 // pred_check_branch
      %107 = sbr.rel (0) target = $region45
    $region44: #{tpu_custom_call.1} parent=1 // pred_region
      _
    $region45: #{tpu_custom_call.1} parent=1 // pred_fallthru
      _
    // Predicated region
    $region46: #{tpu_custom_call.1} parent=1 // pred_check
      _
    $region47: #{tpu_custom_call.1} parent=1 // pred_check_branch
      %109 = sbr.rel (0) target = $region49
    $region48: #{tpu_custom_call.1} parent=1 // pred_region
      %s111 = ssub.s32 1024, 1024
      %112 = vsyncadd [#allocation12], %s111
      %s113 = sshll.u32 [#allocation13], 4
      %s114 = int_to_ptr.vmem [resolvable:$true] %s113
      %119 = dma.hbm_to_vmem [thread:$0]  %s11, 1024, %s114, [#allocation12], 64, 64, 4
    $region49: #{tpu_custom_call.1} parent=1 // pred_fallthru
      _
    // Predicated region
    $region50: #{tpu_custom_call.1} parent=1 // pred_check
      _
    $region51: #{tpu_custom_call.1} parent=1 // pred_check_branch
      %121 = sbr.rel (0) target = $region53
    $region52: #{tpu_custom_call.1} parent=1 // pred_region
      _
    $region53: #{tpu_custom_call.1} parent=1 // pred_fallthru
      _
    // Predicated region
    $region54: #{tpu_custom_call.1} parent=1 // pred_check
      _
    $region55: #{tpu_custom_call.1} parent=1 // pred_check_branch
      %123 = sbr.rel (0) target = $region57
    $region56: #{tpu_custom_call.1} parent=1 // pred_region
      %s125 = ssub.s32 1024, 1024
      %126 = vsyncadd [#allocation15], %s125
      %s127 = sshll.u32 [#allocation14], 4
      %s128 = int_to_ptr.vmem [resolvable:$true] %s127
      %133 = dma.hbm_to_vmem [thread:$0]  %s13, 1024, %s128, [#allocation15], 64, 64, 4
    $region57: #{tpu_custom_call.1} parent=1 // pred_fallthru
      _
    // Predicated region
    $region58: #{tpu_custom_call.1} parent=1 // pred_check
      _
    $region59: #{tpu_custom_call.1} parent=1 // pred_check_branch
      %135 = sbr.rel (0) target = $region61
    $region60: #{tpu_custom_call.1} parent=1 // pred_region
      _
    $region61: #{tpu_custom_call.1} parent=1 // pred_fallthru
      _
    // Predicated region
    $region62: #{tpu_custom_call.1} parent=1 // pred_check
      _
    $region63: #{tpu_custom_call.1} parent=1 // pred_check_branch
      %137 = sbr.rel (0) target = $region65
    $region64: #{tpu_custom_call.1} parent=1 // pred_region
      %138 = dma.done [#allocation3], 512
    $region65: #{tpu_custom_call.1} parent=1 // pred_fallthru
      _
    // Predicated region
    $region66: #{tpu_custom_call.1} parent=1 // pred_check
      _
    $region67: #{tpu_custom_call.1} parent=1 // pred_check_branch
      %140 = sbr.rel (0) target = $region69
    $region68: #{tpu_custom_call.1} parent=1 // pred_region
      %141 = dma.done [#allocation6], 1024
    $region69: #{tpu_custom_call.1} parent=1 // pred_fallthru
      _
    // Predicated region
    $region70: #{tpu_custom_call.1} parent=1 // pred_check
      _
    $region71: #{tpu_custom_call.1} parent=1 // pred_check_branch
      %143 = sbr.rel (0) target = $region73
    $region72: #{tpu_custom_call.1} parent=1 // pred_region
      %144 = dma.done [#allocation6], 1024
    $region73: #{tpu_custom_call.1} parent=1 // pred_fallthru
      _
    // Predicated region
    $region74: #{tpu_custom_call.1} parent=1 // pred_check
      _
    $region75: #{tpu_custom_call.1} parent=1 // pred_check_branch
      %146 = sbr.rel (0) target = $region77
    $region76: #{tpu_custom_call.1} parent=1 // pred_region
      %147 = dma.done [#allocation9], 1024
    $region77: #{tpu_custom_call.1} parent=1 // pred_fallthru
      _
    // Predicated region
    $region78: #{tpu_custom_call.1} parent=1 // pred_check
      _
    $region79: #{tpu_custom_call.1} parent=1 // pred_check_branch
      %149 = sbr.rel (0) target = $region81
    $region80: #{tpu_custom_call.1} parent=1 // pred_region
      %150 = dma.done [#allocation9], 1024
    $region81: #{tpu_custom_call.1} parent=1 // pred_fallthru
      _
    // Predicated region
    $region82: #{tpu_custom_call.1} parent=1 // pred_check
      _
    $region83: #{tpu_custom_call.1} parent=1 // pred_check_branch
      %152 = sbr.rel (0) target = $region85
    $region84: #{tpu_custom_call.1} parent=1 // pred_region
      %153 = dma.done [#allocation12], 1024
    $region85: #{tpu_custom_call.1} parent=1 // pred_fallthru
      _
    // Predicated region
    $region86: #{tpu_custom_call.1} parent=1 // pred_check
      _
    $region87: #{tpu_custom_call.1} parent=1 // pred_check_branch
      %155 = sbr.rel (0) target = $region89
    $region88: #{tpu_custom_call.1} parent=1 // pred_region
      %156 = dma.done [#allocation12], 1024
    $region89: #{tpu_custom_call.1} parent=1 // pred_fallthru
      _
    // Predicated region
    $region90: #{tpu_custom_call.1} parent=1 // pred_check
      _
    $region91: #{tpu_custom_call.1} parent=1 // pred_check_branch
      %158 = sbr.rel (0) target = $region93
    $region92: #{tpu_custom_call.1} parent=1 // pred_region
      %159 = dma.done [#allocation15], 1024
    $region93: #{tpu_custom_call.1} parent=1 // pred_fallthru
      _
    %v161 = vld [vmem:[%s2] sm:$0x1]
    %v163 = vlaneseq
    %v164 = vshrl.u32 %v163, 7
    %v165 = vsub.s32 0, %v164
    %v166 = vrot.slane %v161, %v165
    %v168 = vld [vmem:[%s6] sm:$0x1]
    %v170 = vlaneseq
    %v171 = vshrl.u32 %v170, 7
    %v172 = vsub.s32 0, %v171
    %v173 = vrot.slane %v168, %v172
    %v175 = vld [vmem:[%s10] sm:$0x1]
    %v177 = vlaneseq
    %v178 = vshrl.u32 %v177, 7
    %v179 = vsub.s32 0, %v178
    %v180 = vrot.slane %v175, %v179
    %v182 = vld [vmem:[%s4] sm:$0x1]
    %v184 = vlaneseq
    %v185 = vshrl.u32 %v184, 7
    %v186 = vsub.s32 0, %v185
    %v187 = vrot.slane %v182, %v186
    %v189 = vld [vmem:[%s8] sm:$0x1]
    %v191 = vlaneseq
    %v192 = vshrl.u32 %v191, 7
    %v193 = vsub.s32 0, %v192
    %v194 = vrot.slane %v189, %v193
    %v196 = vld [vmem:[%s12] sm:$0x1]
    %v198 = vlaneseq
    %v199 = vshrl.u32 %v198, 7
    %v200 = vsub.s32 0, %v199
    %v201 = vrot.slane %v196, %v200
    %v203 = vld [vmem:[%s14] sm:$0x1]
    %v205 = vlaneseq
    %v206 = vshrl.u32 %v205, 7
    %v207 = vsub.s32 0, %v206
    %v208 = vrot.slane %v203, %v207
    %v210 = vld [vmem:[#allocation2] sm:$0xf]
    %v211 = vld [vmem:[#allocation2 + $0x4] sm:$0xf]
    %v212 = vld [vmem:[#allocation5] sm:$0xf]
    %v213 = vld [vmem:[#allocation5 + $0x4] sm:$0xf]
    %v214 = vld [vmem:[#allocation5 + $0x8] sm:$0xf]
    %v215 = vld [vmem:[#allocation5 + $0xc] sm:$0xf]
    %v216 = vld [vmem:[#allocation5 + $0x10] sm:$0xf]
    %v217 = vld [vmem:[#allocation5 + $0x14] sm:$0xf]
    %v218 = vld [vmem:[#allocation5 + $0x18] sm:$0xf]
    %v219 = vld [vmem:[#allocation5 + $0x1c] sm:$0xf]
    %v220 = vld [vmem:[#allocation5 + $0x20] sm:$0xf]
    %v221 = vld [vmem:[#allocation5 + $0x24] sm:$0xf]
    %v222 = vld [vmem:[#allocation5 + $0x28] sm:$0xf]
    %v223 = vld [vmem:[#allocation5 + $0x2c] sm:$0xf]
    %v224 = vld [vmem:[#allocation5 + $0x30] sm:$0xf]
    %v225 = vld [vmem:[#allocation5 + $0x34] sm:$0xf]
    %v226 = vld [vmem:[#allocation5 + $0x38] sm:$0xf]
    %v227 = vld [vmem:[#allocation5 + $0x3c] sm:$0xf]
    %v230 = vunpack.c.l.b16 %v210
    %v231 = vunpack.c.l.b16 %v211
    %v232 = vpack.c.b16 %v231, %v230
    %v250 = vunpack.c.l.b16 %v212
    %v251 = vunpack.c.l.b16 %v213
    %v252 = vunpack.c.l.b16 %v214
    %v253 = vunpack.c.l.b16 %v215
    %v254 = vunpack.c.l.b16 %v216
    %v255 = vunpack.c.l.b16 %v217
    %v256 = vunpack.c.l.b16 %v218
    %v257 = vunpack.c.l.b16 %v219
    %v258 = vunpack.c.l.b16 %v220
    %v259 = vunpack.c.l.b16 %v221
    %v260 = vunpack.c.l.b16 %v222
    %v261 = vunpack.c.l.b16 %v223
    %v262 = vunpack.c.l.b16 %v224
    %v263 = vunpack.c.l.b16 %v225
    %v264 = vunpack.c.l.b16 %v226
    %v265 = vunpack.c.l.b16 %v227
    %v266 = vpack.c.b16 %v251, %v250
    %v267 = vpack.c.b16 %v253, %v252
    %v268 = vpack.c.b16 %v255, %v254
    %v269 = vpack.c.b16 %v257, %v256
    %v270 = vpack.c.b16 %v259, %v258
    %v271 = vpack.c.b16 %v261, %v260
    %v272 = vpack.c.b16 %v263, %v262
    %v273 = vpack.c.b16 %v265, %v264
    %282 = vmatprep.subr.bf16.mxu0 0
    %283 = vmatpush1.bf16.msra.mxu0 %v266
    %284 = vmatprep.subr.bf16.mxu0 0
    %285 = vmatpush1.bf16.msra.mxu0 %v267
    %286 = vmatprep.subr.bf16.mxu0 0
    %287 = vmatpush1.bf16.msra.mxu0 %v268
    %288 = vmatprep.subr.bf16.mxu0 0
    %289 = vmatpush1.bf16.msra.mxu0 %v269
    %290 = vmatprep.subr.bf16.mxu0 0
    %291 = vmatpush1.bf16.msra.mxu0 %v270
    %292 = vmatprep.subr.bf16.mxu0 0
    %293 = vmatpush1.bf16.msra.mxu0 %v271
    %294 = vmatprep.subr.bf16.mxu0 0
    %295 = vmatpush1.bf16.msra.mxu0 %v272
    %296 = vmatprep.subr.bf16.mxu0 0
    %297 = vmatpush1.bf16.msra.mxu0 %v273
    %298 = vmatprep.subr.bf16.mxu0 0
    %299 = vmatpush1.bf16.msra.mxu0 0
    %300 = vmatprep.subr.bf16.mxu0 0
    %301 = vmatpush1.bf16.msra.mxu0 0
    %302 = vmatprep.subr.bf16.mxu0 0
    %303 = vmatpush1.bf16.msra.mxu0 0
    %304 = vmatprep.subr.bf16.mxu0 0
    %305 = vmatpush1.bf16.msra.mxu0 0
    %306 = vmatprep.subr.bf16.mxu0 0
    %307 = vmatpush1.bf16.msra.mxu0 0
    %308 = vmatprep.subr.bf16.mxu0 0
    %309 = vmatpush1.bf16.msra.mxu0 0
    %310 = vmatprep.subr.bf16.mxu0 0
    %311 = vmatpush1.bf16.msra.mxu0 0
    %312 = vmatprep.subr.bf16.mxu0 0
    %313 = vmatpush1.bf16.msra.mxu0 0
    %314 = vmatprep.mubr.bf16.mxu0 0
    %315 = vmatmul.mubr.bf16.gmra.mrb[0].mxu0 %v232
    %v316 = vpop.f32.mrb[0].mxu0
    %v317 = vadd.f32 %v166, %v316
    %v318 = vpop.f32.mrb[0].mxu0
    %v319 = vpop.f32.mrb[0].mxu0
    %v320 = vadd.f32 %v166, %v319
    %v321 = vpop.f32.mrb[0].mxu0
    %322 = vdwg.mxu0
    %v323 = vadd.f32 %v317, 0.0
    %vm324 = vcmp.ge.f32.partialorder %v323, 1.0
    %v325 = vsel %vm324, 1, 0
    %v326 = vcvt.s32.f32 %v325
    %v327 = vsel %vm324, 0.0, %v323
    %v328 = vadd.f32 %v327, %v320
    %vm329 = vcmp.ge.f32.partialorder %v328, 1.0
    %v330 = vsel %vm329, 1, 0
    %v331 = vcvt.s32.f32 %v330
    %v332 = vsel %vm329, 0.0, %v328
    %v333 = vpack.c.bf16 %v331, %v326
    %v334 = vld [vmem:[#allocation7] sm:$0xf]
    %v335 = vld [vmem:[#allocation7 + $0x4] sm:$0xf]
    %v336 = vld [vmem:[#allocation7 + $0x8] sm:$0xf]
    %v337 = vld [vmem:[#allocation7 + $0xc] sm:$0xf]
    %v338 = vld [vmem:[#allocation7 + $0x10] sm:$0xf]
    %v339 = vld [vmem:[#allocation7 + $0x14] sm:$0xf]
    %v340 = vld [vmem:[#allocation7 + $0x18] sm:$0xf]
    %v341 = vld [vmem:[#allocation7 + $0x1c] sm:$0xf]
    %v342 = vld [vmem:[#allocation7 + $0x20] sm:$0xf]
    %v343 = vld [vmem:[#allocation7 + $0x24] sm:$0xf]
    %v344 = vld [vmem:[#allocation7 + $0x28] sm:$0xf]
    %v345 = vld [vmem:[#allocation7 + $0x2c] sm:$0xf]
    %v346 = vld [vmem:[#allocation7 + $0x30] sm:$0xf]
    %v347 = vld [vmem:[#allocation7 + $0x34] sm:$0xf]
    %v348 = vld [vmem:[#allocation7 + $0x38] sm:$0xf]
    %v349 = vld [vmem:[#allocation7 + $0x3c] sm:$0xf]
    %v366 = vunpack.c.l.b16 %v334
    %v367 = vunpack.c.l.b16 %v335
    %v368 = vunpack.c.l.b16 %v336
    %v369 = vunpack.c.l.b16 %v337
    %v370 = vunpack.c.l.b16 %v338
    %v371 = vunpack.c.l.b16 %v339
    %v372 = vunpack.c.l.b16 %v340
    %v373 = vunpack.c.l.b16 %v341
    %v374 = vunpack.c.l.b16 %v342
    %v375 = vunpack.c.l.b16 %v343
    %v376 = vunpack.c.l.b16 %v344
    %v377 = vunpack.c.l.b16 %v345
    %v378 = vunpack.c.l.b16 %v346
    %v379 = vunpack.c.l.b16 %v347
    %v380 = vunpack.c.l.b16 %v348
    %v381 = vunpack.c.l.b16 %v349
    %v382 = vpack.c.b16 %v367, %v366
    %v383 = vpack.c.b16 %v369, %v368
    %v384 = vpack.c.b16 %v371, %v370
    %v385 = vpack.c.b16 %v373, %v372
    %v386 = vpack.c.b16 %v375, %v374
    %v387 = vpack.c.b16 %v377, %v376
    %v388 = vpack.c.b16 %v379, %v378
    %v389 = vpack.c.b16 %v381, %v380
    %398 = vmatprep.subr.bf16.mxu0 0
    %399 = vmatpush1.bf16.msra.mxu0 %v382
    %400 = vmatprep.subr.bf16.mxu0 0
    %401 = vmatpush1.bf16.msra.mxu0 %v383
    %402 = vmatprep.subr.bf16.mxu0 0
    %403 = vmatpush1.bf16.msra.mxu0 %v384
    %404 = vmatprep.subr.bf16.mxu0 0
    %405 = vmatpush1.bf16.msra.mxu0 %v385
    %406 = vmatprep.subr.bf16.mxu0 0
    %407 = vmatpush1.bf16.msra.mxu0 %v386
    %408 = vmatprep.subr.bf16.mxu0 0
    %409 = vmatpush1.bf16.msra.mxu0 %v387
    %410 = vmatprep.subr.bf16.mxu0 0
    %411 = vmatpush1.bf16.msra.mxu0 %v388
    %412 = vmatprep.subr.bf16.mxu0 0
    %413 = vmatpush1.bf16.msra.mxu0 %v389
    %414 = vmatprep.subr.bf16.mxu0 0
    %415 = vmatpush1.bf16.msra.mxu0 0
    %416 = vmatprep.subr.bf16.mxu0 0
    %417 = vmatpush1.bf16.msra.mxu0 0
    %418 = vmatprep.subr.bf16.mxu0 0
    %419 = vmatpush1.bf16.msra.mxu0 0
    %420 = vmatprep.subr.bf16.mxu0 0
    %421 = vmatpush1.bf16.msra.mxu0 0
    %422 = vmatprep.subr.bf16.mxu0 0
    %423 = vmatpush1.bf16.msra.mxu0 0
    %424 = vmatprep.subr.bf16.mxu0 0
    %425 = vmatpush1.bf16.msra.mxu0 0
    %426 = vmatprep.subr.bf16.mxu0 0
    %427 = vmatpush1.bf16.msra.mxu0 0
    %428 = vmatprep.subr.bf16.mxu0 0
    %429 = vmatpush1.bf16.msra.mxu0 0
    %430 = vmatprep.mubr.bf16.mxu0 0
    %431 = vmatmul.mubr.bf16.gmra.mrb[0].mxu0 %v333
    %v432 = vpop.f32.mrb[0].mxu0
    %v433 = vadd.f32 0.0, %v432
    %v434 = vpop.f32.mrb[0].mxu0
    %v435 = vpop.f32.mrb[0].mxu0
    %v436 = vadd.f32 0.0, %v435
    %v437 = vpop.f32.mrb[0].mxu0
    %438 = vdwg.mxu0
    %v439 = vadd.f32 %v326, %v433
    %v440 = vadd.f32 %v331, %v436
    %v441 = vadd.f32 %v439, %v187
    %v442 = vadd.f32 %v440, %v187
    %v443 = vadd.f32 %v441, 0.0
    %vm444 = vcmp.ge.f32.partialorder %v443, 1.0
    %v445 = vsel %vm444, 1, 0
    %v446 = vcvt.s32.f32 %v445
    %v447 = vsel %vm444, 0.0, %v443
    %v448 = vadd.f32 %v447, %v442
    %vm449 = vcmp.ge.f32.partialorder %v448, 1.0
    %v450 = vsel %vm449, 1, 0
    %v451 = vcvt.s32.f32 %v450
    %v452 = vsel %vm449, 0.0, %v448
    %v453 = vpack.c.bf16 %v451, %v446
    %v454 = vld [vmem:[#allocation8] sm:$0xf]
    %v455 = vld [vmem:[#allocation8 + $0x4] sm:$0xf]
    %v456 = vld [vmem:[#allocation8 + $0x8] sm:$0xf]
    %v457 = vld [vmem:[#allocation8 + $0xc] sm:$0xf]
    %v458 = vld [vmem:[#allocation8 + $0x10] sm:$0xf]
    %v459 = vld [vmem:[#allocation8 + $0x14] sm:$0xf]
    %v460 = vld [vmem:[#allocation8 + $0x18] sm:$0xf]
    %v461 = vld [vmem:[#allocation8 + $0x1c] sm:$0xf]
    %v462 = vld [vmem:[#allocation8 + $0x20] sm:$0xf]
    %v463 = vld [vmem:[#allocation8 + $0x24] sm:$0xf]
    %v464 = vld [vmem:[#allocation8 + $0x28] sm:$0xf]
    %v465 = vld [vmem:[#allocation8 + $0x2c] sm:$0xf]
    %v466 = vld [vmem:[#allocation8 + $0x30] sm:$0xf]
    %v467 = vld [vmem:[#allocation8 + $0x34] sm:$0xf]
    %v468 = vld [vmem:[#allocation8 + $0x38] sm:$0xf]
    %v469 = vld [vmem:[#allocation8 + $0x3c] sm:$0xf]
    %v486 = vunpack.c.l.b16 %v454
    %v487 = vunpack.c.l.b16 %v455
    %v488 = vunpack.c.l.b16 %v456
    %v489 = vunpack.c.l.b16 %v457
    %v490 = vunpack.c.l.b16 %v458
    %v491 = vunpack.c.l.b16 %v459
    %v492 = vunpack.c.l.b16 %v460
    %v493 = vunpack.c.l.b16 %v461
    %v494 = vunpack.c.l.b16 %v462
    %v495 = vunpack.c.l.b16 %v463
    %v496 = vunpack.c.l.b16 %v464
    %v497 = vunpack.c.l.b16 %v465
    %v498 = vunpack.c.l.b16 %v466
    %v499 = vunpack.c.l.b16 %v467
    %v500 = vunpack.c.l.b16 %v468
    %v501 = vunpack.c.l.b16 %v469
    %v502 = vpack.c.b16 %v487, %v486
    %v503 = vpack.c.b16 %v489, %v488
    %v504 = vpack.c.b16 %v491, %v490
    %v505 = vpack.c.b16 %v493, %v492
    %v506 = vpack.c.b16 %v495, %v494
    %v507 = vpack.c.b16 %v497, %v496
    %v508 = vpack.c.b16 %v499, %v498
    %v509 = vpack.c.b16 %v501, %v500
    %518 = vmatprep.subr.bf16.mxu0 0
    %519 = vmatpush1.bf16.msra.mxu0 %v502
    %520 = vmatprep.subr.bf16.mxu0 0
    %521 = vmatpush1.bf16.msra.mxu0 %v503
    %522 = vmatprep.subr.bf16.mxu0 0
    %523 = vmatpush1.bf16.msra.mxu0 %v504
    %524 = vmatprep.subr.bf16.mxu0 0
    %525 = vmatpush1.bf16.msra.mxu0 %v505
    %526 = vmatprep.subr.bf16.mxu0 0
    %527 = vmatpush1.bf16.msra.mxu0 %v506
    %528 = vmatprep.subr.bf16.mxu0 0
    %529 = vmatpush1.bf16.msra.mxu0 %v507
    %530 = vmatprep.subr.bf16.mxu0 0
    %531 = vmatpush1.bf16.msra.mxu0 %v508
    %532 = vmatprep.subr.bf16.mxu0 0
    %533 = vmatpush1.bf16.msra.mxu0 %v509
    %534 = vmatprep.subr.bf16.mxu0 0
    %535 = vmatpush1.bf16.msra.mxu0 0
    %536 = vmatprep.subr.bf16.mxu0 0
    %537 = vmatpush1.bf16.msra.mxu0 0
    %538 = vmatprep.subr.bf16.mxu0 0
    %539 = vmatpush1.bf16.msra.mxu0 0
    %540 = vmatprep.subr.bf16.mxu0 0
    %541 = vmatpush1.bf16.msra.mxu0 0
    %542 = vmatprep.subr.bf16.mxu0 0
    %543 = vmatpush1.bf16.msra.mxu0 0
    %544 = vmatprep.subr.bf16.mxu0 0
    %545 = vmatpush1.bf16.msra.mxu0 0
    %546 = vmatprep.subr.bf16.mxu0 0
    %547 = vmatpush1.bf16.msra.mxu0 0
    %548 = vmatprep.subr.bf16.mxu0 0
    %549 = vmatpush1.bf16.msra.mxu0 0
    %550 = vmatprep.mubr.bf16.mxu0 0
    %551 = vmatmul.mubr.bf16.gmra.mrb[0].mxu0 %v453
    %v552 = vpop.f32.mrb[0].mxu0
    %v553 = vadd.f32 %v173, %v552
    %v554 = vpop.f32.mrb[0].mxu0
    %v555 = vpop.f32.mrb[0].mxu0
    %v556 = vadd.f32 %v173, %v555
    %v557 = vpop.f32.mrb[0].mxu0
    %558 = vdwg.mxu0
    %v559 = vadd.f32 %v553, 0.0
    %vm560 = vcmp.ge.f32.partialorder %v559, 1.0
    %v561 = vsel %vm560, 1, 0
    %v562 = vcvt.s32.f32 %v561
    %v563 = vsel %vm560, 0.0, %v559
    %v564 = vadd.f32 %v563, %v556
    %vm565 = vcmp.ge.f32.partialorder %v564, 1.0
    %v566 = vsel %vm565, 1, 0
    %v567 = vcvt.s32.f32 %v566
    %v568 = vsel %vm565, 0.0, %v564
    %v569 = vpack.c.bf16 %v567, %v562
    %v570 = vld [vmem:[#allocation10] sm:$0xf]
    %v571 = vld [vmem:[#allocation10 + $0x4] sm:$0xf]
    %v572 = vld [vmem:[#allocation10 + $0x8] sm:$0xf]
    %v573 = vld [vmem:[#allocation10 + $0xc] sm:$0xf]
    %v574 = vld [vmem:[#allocation10 + $0x10] sm:$0xf]
    %v575 = vld [vmem:[#allocation10 + $0x14] sm:$0xf]
    %v576 = vld [vmem:[#allocation10 + $0x18] sm:$0xf]
    %v577 = vld [vmem:[#allocation10 + $0x1c] sm:$0xf]
    %v578 = vld [vmem:[#allocation10 + $0x20] sm:$0xf]
    %v579 = vld [vmem:[#allocation10 + $0x24] sm:$0xf]
    %v580 = vld [vmem:[#allocation10 + $0x28] sm:$0xf]
    %v581 = vld [vmem:[#allocation10 + $0x2c] sm:$0xf]
    %v582 = vld [vmem:[#allocation10 + $0x30] sm:$0xf]
    %v583 = vld [vmem:[#allocation10 + $0x34] sm:$0xf]
    %v584 = vld [vmem:[#allocation10 + $0x38] sm:$0xf]
    %v585 = vld [vmem:[#allocation10 + $0x3c] sm:$0xf]
    %v602 = vunpack.c.l.b16 %v570
    %v603 = vunpack.c.l.b16 %v571
    %v604 = vunpack.c.l.b16 %v572
    %v605 = vunpack.c.l.b16 %v573
    %v606 = vunpack.c.l.b16 %v574
    %v607 = vunpack.c.l.b16 %v575
    %v608 = vunpack.c.l.b16 %v576
    %v609 = vunpack.c.l.b16 %v577
    %v610 = vunpack.c.l.b16 %v578
    %v611 = vunpack.c.l.b16 %v579
    %v612 = vunpack.c.l.b16 %v580
    %v613 = vunpack.c.l.b16 %v581
    %v614 = vunpack.c.l.b16 %v582
    %v615 = vunpack.c.l.b16 %v583
    %v616 = vunpack.c.l.b16 %v584
    %v617 = vunpack.c.l.b16 %v585
    %v618 = vpack.c.b16 %v603, %v602
    %v619 = vpack.c.b16 %v605, %v604
    %v620 = vpack.c.b16 %v607, %v606
    %v621 = vpack.c.b16 %v609, %v608
    %v622 = vpack.c.b16 %v611, %v610
    %v623 = vpack.c.b16 %v613, %v612
    %v624 = vpack.c.b16 %v615, %v614
    %v625 = vpack.c.b16 %v617, %v616
    %634 = vmatprep.subr.bf16.mxu0 0
    %635 = vmatpush1.bf16.msra.mxu0 %v618
    %636 = vmatprep.subr.bf16.mxu0 0
    %637 = vmatpush1.bf16.msra.mxu0 %v619
    %638 = vmatprep.subr.bf16.mxu0 0
    %639 = vmatpush1.bf16.msra.mxu0 %v620
    %640 = vmatprep.subr.bf16.mxu0 0
    %641 = vmatpush1.bf16.msra.mxu0 %v621
    %642 = vmatprep.subr.bf16.mxu0 0
    %643 = vmatpush1.bf16.msra.mxu0 %v622
    %644 = vmatprep.subr.bf16.mxu0 0
    %645 = vmatpush1.bf16.msra.mxu0 %v623
    %646 = vmatprep.subr.bf16.mxu0 0
    %647 = vmatpush1.bf16.msra.mxu0 %v624
    %648 = vmatprep.subr.bf16.mxu0 0
    %649 = vmatpush1.bf16.msra.mxu0 %v625
    %650 = vmatprep.subr.bf16.mxu0 0
    %651 = vmatpush1.bf16.msra.mxu0 0
    %652 = vmatprep.subr.bf16.mxu0 0
    %653 = vmatpush1.bf16.msra.mxu0 0
    %654 = vmatprep.subr.bf16.mxu0 0
    %655 = vmatpush1.bf16.msra.mxu0 0
    %656 = vmatprep.subr.bf16.mxu0 0
    %657 = vmatpush1.bf16.msra.mxu0 0
    %658 = vmatprep.subr.bf16.mxu0 0
    %659 = vmatpush1.bf16.msra.mxu0 0
    %660 = vmatprep.subr.bf16.mxu0 0
    %661 = vmatpush1.bf16.msra.mxu0 0
    %662 = vmatprep.subr.bf16.mxu0 0
    %663 = vmatpush1.bf16.msra.mxu0 0
    %664 = vmatprep.subr.bf16.mxu0 0
    %665 = vmatpush1.bf16.msra.mxu0 0
    %666 = vmatprep.mubr.bf16.mxu0 0
    %667 = vmatmul.mubr.bf16.gmra.mrb[0].mxu0 %v569
    %v668 = vpop.f32.mrb[0].mxu0
    %v669 = vadd.f32 0.0, %v668
    %v670 = vpop.f32.mrb[0].mxu0
    %v671 = vpop.f32.mrb[0].mxu0
    %v672 = vadd.f32 0.0, %v671
    %v673 = vpop.f32.mrb[0].mxu0
    %674 = vdwg.mxu0
    %v675 = vadd.f32 %v562, %v669
    %v676 = vadd.f32 %v567, %v672
    %v677 = vadd.f32 %v675, %v194
    %v678 = vadd.f32 %v676, %v194
    %v679 = vadd.f32 %v677, 0.0
    %vm680 = vcmp.ge.f32.partialorder %v679, 1.0
    %v681 = vsel %vm680, 1, 0
    %v682 = vcvt.s32.f32 %v681
    %v683 = vsel %vm680, 0.0, %v679
    %v684 = vadd.f32 %v683, %v678
    %vm685 = vcmp.ge.f32.partialorder %v684, 1.0
    %v686 = vsel %vm685, 1, 0
    %v687 = vcvt.s32.f32 %v686
    %v688 = vsel %vm685, 0.0, %v684
    %v689 = vpack.c.bf16 %v687, %v682
    %v690 = vld [vmem:[#allocation11] sm:$0xf]
    %v691 = vld [vmem:[#allocation11 + $0x4] sm:$0xf]
    %v692 = vld [vmem:[#allocation11 + $0x8] sm:$0xf]
    %v693 = vld [vmem:[#allocation11 + $0xc] sm:$0xf]
    %v694 = vld [vmem:[#allocation11 + $0x10] sm:$0xf]
    %v695 = vld [vmem:[#allocation11 + $0x14] sm:$0xf]
    %v696 = vld [vmem:[#allocation11 + $0x18] sm:$0xf]
    %v697 = vld [vmem:[#allocation11 + $0x1c] sm:$0xf]
    %v698 = vld [vmem:[#allocation11 + $0x20] sm:$0xf]
    %v699 = vld [vmem:[#allocation11 + $0x24] sm:$0xf]
    %v700 = vld [vmem:[#allocation11 + $0x28] sm:$0xf]
    %v701 = vld [vmem:[#allocation11 + $0x2c] sm:$0xf]
    %v702 = vld [vmem:[#allocation11 + $0x30] sm:$0xf]
    %v703 = vld [vmem:[#allocation11 + $0x34] sm:$0xf]
    %v704 = vld [vmem:[#allocation11 + $0x38] sm:$0xf]
    %v705 = vld [vmem:[#allocation11 + $0x3c] sm:$0xf]
    %v722 = vunpack.c.l.b16 %v690
    %v723 = vunpack.c.l.b16 %v691
    %v724 = vunpack.c.l.b16 %v692
    %v725 = vunpack.c.l.b16 %v693
    %v726 = vunpack.c.l.b16 %v694
    %v727 = vunpack.c.l.b16 %v695
    %v728 = vunpack.c.l.b16 %v696
    %v729 = vunpack.c.l.b16 %v697
    %v730 = vunpack.c.l.b16 %v698
    %v731 = vunpack.c.l.b16 %v699
    %v732 = vunpack.c.l.b16 %v700
    %v733 = vunpack.c.l.b16 %v701
    %v734 = vunpack.c.l.b16 %v702
    %v735 = vunpack.c.l.b16 %v703
    %v736 = vunpack.c.l.b16 %v704
    %v737 = vunpack.c.l.b16 %v705
    %v738 = vpack.c.b16 %v723, %v722
    %v739 = vpack.c.b16 %v725, %v724
    %v740 = vpack.c.b16 %v727, %v726
    %v741 = vpack.c.b16 %v729, %v728
    %v742 = vpack.c.b16 %v731, %v730
    %v743 = vpack.c.b16 %v733, %v732
    %v744 = vpack.c.b16 %v735, %v734
    %v745 = vpack.c.b16 %v737, %v736
    %754 = vmatprep.subr.bf16.mxu0 0
    %755 = vmatpush1.bf16.msra.mxu0 %v738
    %756 = vmatprep.subr.bf16.mxu0 0
    %757 = vmatpush1.bf16.msra.mxu0 %v739
    %758 = vmatprep.subr.bf16.mxu0 0
    %759 = vmatpush1.bf16.msra.mxu0 %v740
    %760 = vmatprep.subr.bf16.mxu0 0
    %761 = vmatpush1.bf16.msra.mxu0 %v741
    %762 = vmatprep.subr.bf16.mxu0 0
    %763 = vmatpush1.bf16.msra.mxu0 %v742
    %764 = vmatprep.subr.bf16.mxu0 0
    %765 = vmatpush1.bf16.msra.mxu0 %v743
    %766 = vmatprep.subr.bf16.mxu0 0
    %767 = vmatpush1.bf16.msra.mxu0 %v744
    %768 = vmatprep.subr.bf16.mxu0 0
    %769 = vmatpush1.bf16.msra.mxu0 %v745
    %770 = vmatprep.subr.bf16.mxu0 0
    %771 = vmatpush1.bf16.msra.mxu0 0
    %772 = vmatprep.subr.bf16.mxu0 0
    %773 = vmatpush1.bf16.msra.mxu0 0
    %774 = vmatprep.subr.bf16.mxu0 0
    %775 = vmatpush1.bf16.msra.mxu0 0
    %776 = vmatprep.subr.bf16.mxu0 0
    %777 = vmatpush1.bf16.msra.mxu0 0
    %778 = vmatprep.subr.bf16.mxu0 0
    %779 = vmatpush1.bf16.msra.mxu0 0
    %780 = vmatprep.subr.bf16.mxu0 0
    %781 = vmatpush1.bf16.msra.mxu0 0
    %782 = vmatprep.subr.bf16.mxu0 0
    %783 = vmatpush1.bf16.msra.mxu0 0
    %784 = vmatprep.subr.bf16.mxu0 0
    %785 = vmatpush1.bf16.msra.mxu0 0
    %786 = vmatprep.mubr.bf16.mxu0 0
    %787 = vmatmul.mubr.bf16.gmra.mrb[0].mxu0 %v689
    %v788 = vpop.f32.mrb[0].mxu0
    %v789 = vadd.f32 %v180, %v788
    %v790 = vpop.f32.mrb[0].mxu0
    %v791 = vpop.f32.mrb[0].mxu0
    %v792 = vadd.f32 %v180, %v791
    %v793 = vpop.f32.mrb[0].mxu0
    %794 = vdwg.mxu0
    %v795 = vadd.f32 %v789, 0.0
    %vm796 = vcmp.ge.f32.partialorder %v795, 1.0
    %v797 = vsel %vm796, 1, 0
    %v798 = vcvt.s32.f32 %v797
    %v799 = vsel %vm796, 0.0, %v795
    %v800 = vadd.f32 %v799, %v792
    %vm801 = vcmp.ge.f32.partialorder %v800, 1.0
    %v802 = vsel %vm801, 1, 0
    %v803 = vcvt.s32.f32 %v802
    %v804 = vsel %vm801, 0.0, %v800
    %v805 = vpack.c.bf16 %v803, %v798
    %v806 = vld [vmem:[#allocation13] sm:$0xf]
    %v807 = vld [vmem:[#allocation13 + $0x4] sm:$0xf]
    %v808 = vld [vmem:[#allocation13 + $0x8] sm:$0xf]
    %v809 = vld [vmem:[#allocation13 + $0xc] sm:$0xf]
    %v810 = vld [vmem:[#allocation13 + $0x10] sm:$0xf]
    %v811 = vld [vmem:[#allocation13 + $0x14] sm:$0xf]
    %v812 = vld [vmem:[#allocation13 + $0x18] sm:$0xf]
    %v813 = vld [vmem:[#allocation13 + $0x1c] sm:$0xf]
    %v814 = vld [vmem:[#allocation13 + $0x20] sm:$0xf]
    %v815 = vld [vmem:[#allocation13 + $0x24] sm:$0xf]
    %v816 = vld [vmem:[#allocation13 + $0x28] sm:$0xf]
    %v817 = vld [vmem:[#allocation13 + $0x2c] sm:$0xf]
    %v818 = vld [vmem:[#allocation13 + $0x30] sm:$0xf]
    %v819 = vld [vmem:[#allocation13 + $0x34] sm:$0xf]
    %v820 = vld [vmem:[#allocation13 + $0x38] sm:$0xf]
    %v821 = vld [vmem:[#allocation13 + $0x3c] sm:$0xf]
    %v838 = vunpack.c.l.b16 %v806
    %v839 = vunpack.c.l.b16 %v807
    %v840 = vunpack.c.l.b16 %v808
    %v841 = vunpack.c.l.b16 %v809
    %v842 = vunpack.c.l.b16 %v810
    %v843 = vunpack.c.l.b16 %v811
    %v844 = vunpack.c.l.b16 %v812
    %v845 = vunpack.c.l.b16 %v813
    %v846 = vunpack.c.l.b16 %v814
    %v847 = vunpack.c.l.b16 %v815
    %v848 = vunpack.c.l.b16 %v816
    %v849 = vunpack.c.l.b16 %v817
    %v850 = vunpack.c.l.b16 %v818
    %v851 = vunpack.c.l.b16 %v819
    %v852 = vunpack.c.l.b16 %v820
    %v853 = vunpack.c.l.b16 %v821
    %v854 = vpack.c.b16 %v839, %v838
    %v855 = vpack.c.b16 %v841, %v840
    %v856 = vpack.c.b16 %v843, %v842
    %v857 = vpack.c.b16 %v845, %v844
    %v858 = vpack.c.b16 %v847, %v846
    %v859 = vpack.c.b16 %v849, %v848
    %v860 = vpack.c.b16 %v851, %v850
    %v861 = vpack.c.b16 %v853, %v852
    %870 = vmatprep.subr.bf16.mxu0 0
    %871 = vmatpush1.bf16.msra.mxu0 %v854
    %872 = vmatprep.subr.bf16.mxu0 0
    %873 = vmatpush1.bf16.msra.mxu0 %v855
    %874 = vmatprep.subr.bf16.mxu0 0
    %875 = vmatpush1.bf16.msra.mxu0 %v856
    %876 = vmatprep.subr.bf16.mxu0 0
    %877 = vmatpush1.bf16.msra.mxu0 %v857
    %878 = vmatprep.subr.bf16.mxu0 0
    %879 = vmatpush1.bf16.msra.mxu0 %v858
    %880 = vmatprep.subr.bf16.mxu0 0
    %881 = vmatpush1.bf16.msra.mxu0 %v859
    %882 = vmatprep.subr.bf16.mxu0 0
    %883 = vmatpush1.bf16.msra.mxu0 %v860
    %884 = vmatprep.subr.bf16.mxu0 0
    %885 = vmatpush1.bf16.msra.mxu0 %v861
    %886 = vmatprep.subr.bf16.mxu0 0
    %887 = vmatpush1.bf16.msra.mxu0 0
    %888 = vmatprep.subr.bf16.mxu0 0
    %889 = vmatpush1.bf16.msra.mxu0 0
    %890 = vmatprep.subr.bf16.mxu0 0
    %891 = vmatpush1.bf16.msra.mxu0 0
    %892 = vmatprep.subr.bf16.mxu0 0
    %893 = vmatpush1.bf16.msra.mxu0 0
    %894 = vmatprep.subr.bf16.mxu0 0
    %895 = vmatpush1.bf16.msra.mxu0 0
    %896 = vmatprep.subr.bf16.mxu0 0
    %897 = vmatpush1.bf16.msra.mxu0 0
    %898 = vmatprep.subr.bf16.mxu0 0
    %899 = vmatpush1.bf16.msra.mxu0 0
    %900 = vmatprep.subr.bf16.mxu0 0
    %901 = vmatpush1.bf16.msra.mxu0 0
    %902 = vmatprep.mubr.bf16.mxu0 0
    %903 = vmatmul.mubr.bf16.gmra.mrb[0].mxu0 %v805
    %v904 = vpop.f32.mrb[0].mxu0
    %v905 = vadd.f32 0.0, %v904
    %v906 = vpop.f32.mrb[0].mxu0
    %v907 = vpop.f32.mrb[0].mxu0
    %v908 = vadd.f32 0.0, %v907
    %v909 = vpop.f32.mrb[0].mxu0
    %910 = vdwg.mxu0
    %v911 = vadd.f32 %v798, %v905
    %v912 = vadd.f32 %v803, %v908
    %v913 = vadd.f32 %v911, %v201
    %v914 = vadd.f32 %v912, %v201
    %v915 = vadd.f32 %v913, 0.0
    %vm916 = vcmp.ge.f32.partialorder %v915, 1.0
    %v917 = vsel %vm916, 1, 0
    %v918 = vcvt.s32.f32 %v917
    %v919 = vsel %vm916, 0.0, %v915
    %v920 = vadd.f32 %v919, %v914
    %vm921 = vcmp.ge.f32.partialorder %v920, 1.0
    %v922 = vsel %vm921, 1, 0
    %v923 = vcvt.s32.f32 %v922
    %v924 = vsel %vm921, 0.0, %v920
    %v925 = vpack.c.bf16 %v923, %v918
    %v926 = vld [vmem:[#allocation14] sm:$0xf]
    %v927 = vld [vmem:[#allocation14 + $0x4] sm:$0xf]
    %v928 = vld [vmem:[#allocation14 + $0x8] sm:$0xf]
    %v929 = vld [vmem:[#allocation14 + $0xc] sm:$0xf]
    %v930 = vld [vmem:[#allocation14 + $0x10] sm:$0xf]
    %v931 = vld [vmem:[#allocation14 + $0x14] sm:$0xf]
    %v932 = vld [vmem:[#allocation14 + $0x18] sm:$0xf]
    %v933 = vld [vmem:[#allocation14 + $0x1c] sm:$0xf]
    %v934 = vld [vmem:[#allocation14 + $0x20] sm:$0xf]
    %v935 = vld [vmem:[#allocation14 + $0x24] sm:$0xf]
    %v936 = vld [vmem:[#allocation14 + $0x28] sm:$0xf]
    %v937 = vld [vmem:[#allocation14 + $0x2c] sm:$0xf]
    %v938 = vld [vmem:[#allocation14 + $0x30] sm:$0xf]
    %v939 = vld [vmem:[#allocation14 + $0x34] sm:$0xf]
    %v940 = vld [vmem:[#allocation14 + $0x38] sm:$0xf]
    %v941 = vld [vmem:[#allocation14 + $0x3c] sm:$0xf]
    %v958 = vunpack.c.l.b16 %v926
    %v959 = vunpack.c.l.b16 %v927
    %v960 = vunpack.c.l.b16 %v928
    %v961 = vunpack.c.l.b16 %v929
    %v962 = vunpack.c.l.b16 %v930
    %v963 = vunpack.c.l.b16 %v931
    %v964 = vunpack.c.l.b16 %v932
    %v965 = vunpack.c.l.b16 %v933
    %v966 = vunpack.c.l.b16 %v934
    %v967 = vunpack.c.l.b16 %v935
    %v968 = vunpack.c.l.b16 %v936
    %v969 = vunpack.c.l.b16 %v937
    %v970 = vunpack.c.l.b16 %v938
    %v971 = vunpack.c.l.b16 %v939
    %v972 = vunpack.c.l.b16 %v940
    %v973 = vunpack.c.l.b16 %v941
    %v974 = vpack.c.b16 %v959, %v958
    %v975 = vpack.c.b16 %v961, %v960
    %v976 = vpack.c.b16 %v963, %v962
    %v977 = vpack.c.b16 %v965, %v964
    %v978 = vpack.c.b16 %v967, %v966
    %v979 = vpack.c.b16 %v969, %v968
    %v980 = vpack.c.b16 %v971, %v970
    %v981 = vpack.c.b16 %v973, %v972
    %990 = vmatprep.subr.bf16.mxu0 0
    %991 = vmatpush1.bf16.msra.mxu0 %v974
    %992 = vmatprep.subr.bf16.mxu0 0
    %993 = vmatpush1.bf16.msra.mxu0 %v975
    %994 = vmatprep.subr.bf16.mxu0 0
    %995 = vmatpush1.bf16.msra.mxu0 %v976
    %996 = vmatprep.subr.bf16.mxu0 0
    %997 = vmatpush1.bf16.msra.mxu0 %v977
    %998 = vmatprep.subr.bf16.mxu0 0
    %999 = vmatpush1.bf16.msra.mxu0 %v978
    %1000 = vmatprep.subr.bf16.mxu0 0
    %1001 = vmatpush1.bf16.msra.mxu0 %v979
    %1002 = vmatprep.subr.bf16.mxu0 0
    %1003 = vmatpush1.bf16.msra.mxu0 %v980
    %1004 = vmatprep.subr.bf16.mxu0 0
    %1005 = vmatpush1.bf16.msra.mxu0 %v981
    %1006 = vmatprep.subr.bf16.mxu0 0
    %1007 = vmatpush1.bf16.msra.mxu0 0
    %1008 = vmatprep.subr.bf16.mxu0 0
    %1009 = vmatpush1.bf16.msra.mxu0 0
    %1010 = vmatprep.subr.bf16.mxu0 0
    %1011 = vmatpush1.bf16.msra.mxu0 0
    %1012 = vmatprep.subr.bf16.mxu0 0
    %1013 = vmatpush1.bf16.msra.mxu0 0
    %1014 = vmatprep.subr.bf16.mxu0 0
    %1015 = vmatpush1.bf16.msra.mxu0 0
    %1016 = vmatprep.subr.bf16.mxu0 0
    %1017 = vmatpush1.bf16.msra.mxu0 0
    %1018 = vmatprep.subr.bf16.mxu0 0
    %1019 = vmatpush1.bf16.msra.mxu0 0
    %1020 = vmatprep.subr.bf16.mxu0 0
    %1021 = vmatpush1.bf16.msra.mxu0 0
    %1022 = vmatprep.mubr.bf16.mxu0 0
    %1023 = vmatmul.mubr.bf16.gmra.mrb[0].mxu0 %v925
    %v1024 = vpop.f32.mrb[0].mxu0
    %v1025 = vadd.f32 %v208, %v1024
    %v1026 = vpop.f32.mrb[0].mxu0
    %v1027 = vpop.f32.mrb[0].mxu0
    %v1028 = vadd.f32 %v208, %v1027
    %v1029 = vpop.f32.mrb[0].mxu0
    %1030 = vdwg.mxu0
    %1031 = vst [vmem:[#allocation16] sm:$0xff] %v1025
    %1032 = vst [vmem:[#allocation16 + $0x8] sm:$0xff] %v1028
    %v1033 = vld [vmem:[#allocation2 + $0x8] sm:$0xf]
    %v1034 = vld [vmem:[#allocation2 + $0xc] sm:$0xf]
    %v1035 = vld [vmem:[#allocation5] sm:$0xf]
    %v1036 = vld [vmem:[#allocation5 + $0x4] sm:$0xf]
    %v1037 = vld [vmem:[#allocation5 + $0x8] sm:$0xf]
    %v1038 = vld [vmem:[#allocation5 + $0xc] sm:$0xf]
    %v1039 = vld [vmem:[#allocation5 + $0x10] sm:$0xf]
    %v1040 = vld [vmem:[#allocation5 + $0x14] sm:$0xf]
    %v1041 = vld [vmem:[#allocation5 + $0x18] sm:$0xf]
    %v1042 = vld [vmem:[#allocation5 + $0x1c] sm:$0xf]
    %v1043 = vld [vmem:[#allocation5 + $0x20] sm:$0xf]
    %v1044 = vld [vmem:[#allocation5 + $0x24] sm:$0xf]
    %v1045 = vld [vmem:[#allocation5 + $0x28] sm:$0xf]
    %v1046 = vld [vmem:[#allocation5 + $0x2c] sm:$0xf]
    %v1047 = vld [vmem:[#allocation5 + $0x30] sm:$0xf]
    %v1048 = vld [vmem:[#allocation5 + $0x34] sm:$0xf]
    %v1049 = vld [vmem:[#allocation5 + $0x38] sm:$0xf]
    %v1050 = vld [vmem:[#allocation5 + $0x3c] sm:$0xf]
    %v1053 = vunpack.c.l.b16 %v1033
    %v1054 = vunpack.c.l.b16 %v1034
    %v1055 = vpack.c.b16 %v1054, %v1053
    %v1073 = vunpack.c.l.b16 %v1035
    %v1074 = vunpack.c.l.b16 %v1036
    %v1075 = vunpack.c.l.b16 %v1037
    %v1076 = vunpack.c.l.b16 %v1038
    %v1077 = vunpack.c.l.b16 %v1039
    %v1078 = vunpack.c.l.b16 %v1040
    %v1079 = vunpack.c.l.b16 %v1041
    %v1080 = vunpack.c.l.b16 %v1042
    %v1081 = vunpack.c.l.b16 %v1043
    %v1082 = vunpack.c.l.b16 %v1044
    %v1083 = vunpack.c.l.b16 %v1045
    %v1084 = vunpack.c.l.b16 %v1046
    %v1085 = vunpack.c.l.b16 %v1047
    %v1086 = vunpack.c.l.b16 %v1048
    %v1087 = vunpack.c.l.b16 %v1049
    %v1088 = vunpack.c.l.b16 %v1050
    %v1089 = vpack.c.b16 %v1074, %v1073
    %v1090 = vpack.c.b16 %v1076, %v1075
    %v1091 = vpack.c.b16 %v1078, %v1077
    %v1092 = vpack.c.b16 %v1080, %v1079
    %v1093 = vpack.c.b16 %v1082, %v1081
    %v1094 = vpack.c.b16 %v1084, %v1083
    %v1095 = vpack.c.b16 %v1086, %v1085
    %v1096 = vpack.c.b16 %v1088, %v1087
    %1105 = vmatprep.subr.bf16.mxu0 0
    %1106 = vmatpush1.bf16.msra.mxu0 %v1089
    %1107 = vmatprep.subr.bf16.mxu0 0
    %1108 = vmatpush1.bf16.msra.mxu0 %v1090
    %1109 = vmatprep.subr.bf16.mxu0 0
    %1110 = vmatpush1.bf16.msra.mxu0 %v1091
    %1111 = vmatprep.subr.bf16.mxu0 0
    %1112 = vmatpush1.bf16.msra.mxu0 %v1092
    %1113 = vmatprep.subr.bf16.mxu0 0
    %1114 = vmatpush1.bf16.msra.mxu0 %v1093
    %1115 = vmatprep.subr.bf16.mxu0 0
    %1116 = vmatpush1.bf16.msra.mxu0 %v1094
    %1117 = vmatprep.subr.bf16.mxu0 0
    %1118 = vmatpush1.bf16.msra.mxu0 %v1095
    %1119 = vmatprep.subr.bf16.mxu0 0
    %1120 = vmatpush1.bf16.msra.mxu0 %v1096
    %1121 = vmatprep.subr.bf16.mxu0 0
    %1122 = vmatpush1.bf16.msra.mxu0 0
    %1123 = vmatprep.subr.bf16.mxu0 0
    %1124 = vmatpush1.bf16.msra.mxu0 0
    %1125 = vmatprep.subr.bf16.mxu0 0
    %1126 = vmatpush1.bf16.msra.mxu0 0
    %1127 = vmatprep.subr.bf16.mxu0 0
    %1128 = vmatpush1.bf16.msra.mxu0 0
    %1129 = vmatprep.subr.bf16.mxu0 0
    %1130 = vmatpush1.bf16.msra.mxu0 0
    %1131 = vmatprep.subr.bf16.mxu0 0
    %1132 = vmatpush1.bf16.msra.mxu0 0
    %1133 = vmatprep.subr.bf16.mxu0 0
    %1134 = vmatpush1.bf16.msra.mxu0 0
    %1135 = vmatprep.subr.bf16.mxu0 0
    %1136 = vmatpush1.bf16.msra.mxu0 0
    %1137 = vmatprep.mubr.bf16.mxu0 0
    %1138 = vmatmul.mubr.bf16.gmra.mrb[0].mxu0 %v1055
    %v1139 = vpop.f32.mrb[0].mxu0
    %v1140 = vadd.f32 %v166, %v1139
    %v1141 = vpop.f32.mrb[0].mxu0
    %v1142 = vpop.f32.mrb[0].mxu0
    %v1143 = vadd.f32 %v166, %v1142
    %v1144 = vpop.f32.mrb[0].mxu0
    %1145 = vdwg.mxu0
    %v1146 = vadd.f32 %v332, %v1140
    %vm1147 = vcmp.ge.f32.partialorder %v1146, 1.0
    %v1148 = vsel %vm1147, 1, 0
    %v1149 = vcvt.s32.f32 %v1148
    %v1150 = vsel %vm1147, 0.0, %v1146
    %v1151 = vadd.f32 %v1150, %v1143
    %vm1152 = vcmp.ge.f32.partialorder %v1151, 1.0
    %v1153 = vsel %vm1152, 1, 0
    %v1154 = vcvt.s32.f32 %v1153
    %v1155 = vsel %vm1152, 0.0, %v1151
    %v1156 = vpack.c.bf16 %v1154, %v1149
    %v1157 = vld [vmem:[#allocation7] sm:$0xf]
    %v1158 = vld [vmem:[#allocation7 + $0x4] sm:$0xf]
    %v1159 = vld [vmem:[#allocation7 + $0x8] sm:$0xf]
    %v1160 = vld [vmem:[#allocation7 + $0xc] sm:$0xf]
    %v1161 = vld [vmem:[#allocation7 + $0x10] sm:$0xf]
    %v1162 = vld [vmem:[#allocation7 + $0x14] sm:$0xf]
    %v1163 = vld [vmem:[#allocation7 + $0x18] sm:$0xf]
    %v1164 = vld [vmem:[#allocation7 + $0x1c] sm:$0xf]
    %v1165 = vld [vmem:[#allocation7 + $0x20] sm:$0xf]
    %v1166 = vld [vmem:[#allocation7 + $0x24] sm:$0xf]
    %v1167 = vld [vmem:[#allocation7 + $0x28] sm:$0xf]
    %v1168 = vld [vmem:[#allocation7 + $0x2c] sm:$0xf]
    %v1169 = vld [vmem:[#allocation7 + $0x30] sm:$0xf]
    %v1170 = vld [vmem:[#allocation7 + $0x34] sm:$0xf]
    %v1171 = vld [vmem:[#allocation7 + $0x38] sm:$0xf]
    %v1172 = vld [vmem:[#allocation7 + $0x3c] sm:$0xf]
    %v1189 = vunpack.c.l.b16 %v1157
    %v1190 = vunpack.c.l.b16 %v1158
    %v1191 = vunpack.c.l.b16 %v1159
    %v1192 = vunpack.c.l.b16 %v1160
    %v1193 = vunpack.c.l.b16 %v1161
    %v1194 = vunpack.c.l.b16 %v1162
    %v1195 = vunpack.c.l.b16 %v1163
    %v1196 = vunpack.c.l.b16 %v1164
    %v1197 = vunpack.c.l.b16 %v1165
    %v1198 = vunpack.c.l.b16 %v1166
    %v1199 = vunpack.c.l.b16 %v1167
    %v1200 = vunpack.c.l.b16 %v1168
    %v1201 = vunpack.c.l.b16 %v1169
    %v1202 = vunpack.c.l.b16 %v1170
    %v1203 = vunpack.c.l.b16 %v1171
    %v1204 = vunpack.c.l.b16 %v1172
    %v1205 = vpack.c.b16 %v1190, %v1189
    %v1206 = vpack.c.b16 %v1192, %v1191
    %v1207 = vpack.c.b16 %v1194, %v1193
    %v1208 = vpack.c.b16 %v1196, %v1195
    %v1209 = vpack.c.b16 %v1198, %v1197
    %v1210 = vpack.c.b16 %v1200, %v1199
    %v1211 = vpack.c.b16 %v1202, %v1201
    %v1212 = vpack.c.b16 %v1204, %v1203
    %1221 = vmatprep.subr.bf16.mxu0 0
    %1222 = vmatpush1.bf16.msra.mxu0 %v1205
    %1223 = vmatprep.subr.bf16.mxu0 0
    %1224 = vmatpush1.bf16.msra.mxu0 %v1206
    %1225 = vmatprep.subr.bf16.mxu0 0
    %1226 = vmatpush1.bf16.msra.mxu0 %v1207
    %1227 = vmatprep.subr.bf16.mxu0 0
    %1228 = vmatpush1.bf16.msra.mxu0 %v1208
    %1229 = vmatprep.subr.bf16.mxu0 0
    %1230 = vmatpush1.bf16.msra.mxu0 %v1209
    %1231 = vmatprep.subr.bf16.mxu0 0
    %1232 = vmatpush1.bf16.msra.mxu0 %v1210
    %1233 = vmatprep.subr.bf16.mxu0 0
    %1234 = vmatpush1.bf16.msra.mxu0 %v1211
    %1235 = vmatprep.subr.bf16.mxu0 0
    %1236 = vmatpush1.bf16.msra.mxu0 %v1212
    %1237 = vmatprep.subr.bf16.mxu0 0
    %1238 = vmatpush1.bf16.msra.mxu0 0
    %1239 = vmatprep.subr.bf16.mxu0 0
    %1240 = vmatpush1.bf16.msra.mxu0 0
    %1241 = vmatprep.subr.bf16.mxu0 0
    %1242 = vmatpush1.bf16.msra.mxu0 0
    %1243 = vmatprep.subr.bf16.mxu0 0
    %1244 = vmatpush1.bf16.msra.mxu0 0
    %1245 = vmatprep.subr.bf16.mxu0 0
    %1246 = vmatpush1.bf16.msra.mxu0 0
    %1247 = vmatprep.subr.bf16.mxu0 0
    %1248 = vmatpush1.bf16.msra.mxu0 0
    %1249 = vmatprep.subr.bf16.mxu0 0
    %1250 = vmatpush1.bf16.msra.mxu0 0
    %1251 = vmatprep.subr.bf16.mxu0 0
    %1252 = vmatpush1.bf16.msra.mxu0 0
    %1253 = vmatprep.mubr.bf16.mxu0 0
    %1254 = vmatmul.mubr.bf16.gmra.mrb[0].mxu0 %v1156
    %v1255 = vpop.f32.mrb[0].mxu0
    %v1256 = vadd.f32 0.0, %v1255
    %v1257 = vpop.f32.mrb[0].mxu0
    %v1258 = vpop.f32.mrb[0].mxu0
    %v1259 = vadd.f32 0.0, %v1258
    %v1260 = vpop.f32.mrb[0].mxu0
    %1261 = vdwg.mxu0
    %v1262 = vadd.f32 %v1149, %v1256
    %v1263 = vadd.f32 %v1154, %v1259
    %v1264 = vadd.f32 %v1262, %v187
    %v1265 = vadd.f32 %v1263, %v187
    %v1266 = vadd.f32 %v452, %v1264
    %vm1267 = vcmp.ge.f32.partialorder %v1266, 1.0
    %v1268 = vsel %vm1267, 1, 0
    %v1269 = vcvt.s32.f32 %v1268
    %v1270 = vsel %vm1267, 0.0, %v1266
    %v1271 = vadd.f32 %v1270, %v1265
    %vm1272 = vcmp.ge.f32.partialorder %v1271, 1.0
    %v1273 = vsel %vm1272, 1, 0
    %v1274 = vcvt.s32.f32 %v1273
    %v1275 = vsel %vm1272, 0.0, %v1271
    %v1276 = vpack.c.bf16 %v1274, %v1269
    %v1277 = vld [vmem:[#allocation8] sm:$0xf]
    %v1278 = vld [vmem:[#allocation8 + $0x4] sm:$0xf]
    %v1279 = vld [vmem:[#allocation8 + $0x8] sm:$0xf]
    %v1280 = vld [vmem:[#allocation8 + $0xc] sm:$0xf]
    %v1281 = vld [vmem:[#allocation8 + $0x10] sm:$0xf]
    %v1282 = vld [vmem:[#allocation8 + $0x14] sm:$0xf]
    %v1283 = vld [vmem:[#allocation8 + $0x18] sm:$0xf]
    %v1284 = vld [vmem:[#allocation8 + $0x1c] sm:$0xf]
    %v1285 = vld [vmem:[#allocation8 + $0x20] sm:$0xf]
    %v1286 = vld [vmem:[#allocation8 + $0x24] sm:$0xf]
    %v1287 = vld [vmem:[#allocation8 + $0x28] sm:$0xf]
    %v1288 = vld [vmem:[#allocation8 + $0x2c] sm:$0xf]
    %v1289 = vld [vmem:[#allocation8 + $0x30] sm:$0xf]
    %v1290 = vld [vmem:[#allocation8 + $0x34] sm:$0xf]
    %v1291 = vld [vmem:[#allocation8 + $0x38] sm:$0xf]
    %v1292 = vld [vmem:[#allocation8 + $0x3c] sm:$0xf]
    %v1309 = vunpack.c.l.b16 %v1277
    %v1310 = vunpack.c.l.b16 %v1278
    %v1311 = vunpack.c.l.b16 %v1279
    %v1312 = vunpack.c.l.b16 %v1280
    %v1313 = vunpack.c.l.b16 %v1281
    %v1314 = vunpack.c.l.b16 %v1282
    %v1315 = vunpack.c.l.b16 %v1283
    %v1316 = vunpack.c.l.b16 %v1284
    %v1317 = vunpack.c.l.b16 %v1285
    %v1318 = vunpack.c.l.b16 %v1286
    %v1319 = vunpack.c.l.b16 %v1287
    %v1320 = vunpack.c.l.b16 %v1288
    %v1321 = vunpack.c.l.b16 %v1289
    %v1322 = vunpack.c.l.b16 %v1290
    %v1323 = vunpack.c.l.b16 %v1291
    %v1324 = vunpack.c.l.b16 %v1292
    %v1325 = vpack.c.b16 %v1310, %v1309
    %v1326 = vpack.c.b16 %v1312, %v1311
    %v1327 = vpack.c.b16 %v1314, %v1313
    %v1328 = vpack.c.b16 %v1316, %v1315
    %v1329 = vpack.c.b16 %v1318, %v1317
    %v1330 = vpack.c.b16 %v1320, %v1319
    %v1331 = vpack.c.b16 %v1322, %v1321
    %v1332 = vpack.c.b16 %v1324, %v1323
    %1341 = vmatprep.subr.bf16.mxu0 0
    %1342 = vmatpush1.bf16.msra.mxu0 %v1325
    %1343 = vmatprep.subr.bf16.mxu0 0
    %1344 = vmatpush1.bf16.msra.mxu0 %v1326
    %1345 = vmatprep.subr.bf16.mxu0 0
    %1346 = vmatpush1.bf16.msra.mxu0 %v1327
    %1347 = vmatprep.subr.bf16.mxu0 0
    %1348 = vmatpush1.bf16.msra.mxu0 %v1328
    %1349 = vmatprep.subr.bf16.mxu0 0
    %1350 = vmatpush1.bf16.msra.mxu0 %v1329
    %1351 = vmatprep.subr.bf16.mxu0 0
    %1352 = vmatpush1.bf16.msra.mxu0 %v1330
    %1353 = vmatprep.subr.bf16.mxu0 0
    %1354 = vmatpush1.bf16.msra.mxu0 %v1331
    %1355 = vmatprep.subr.bf16.mxu0 0
    %1356 = vmatpush1.bf16.msra.mxu0 %v1332
    %1357 = vmatprep.subr.bf16.mxu0 0
    %1358 = vmatpush1.bf16.msra.mxu0 0
    %1359 = vmatprep.subr.bf16.mxu0 0
    %1360 = vmatpush1.bf16.msra.mxu0 0
    %1361 = vmatprep.subr.bf16.mxu0 0
    %1362 = vmatpush1.bf16.msra.mxu0 0
    %1363 = vmatprep.subr.bf16.mxu0 0
    %1364 = vmatpush1.bf16.msra.mxu0 0
    %1365 = vmatprep.subr.bf16.mxu0 0
    %1366 = vmatpush1.bf16.msra.mxu0 0
    %1367 = vmatprep.subr.bf16.mxu0 0
    %1368 = vmatpush1.bf16.msra.mxu0 0
    %1369 = vmatprep.subr.bf16.mxu0 0
    %1370 = vmatpush1.bf16.msra.mxu0 0
    %1371 = vmatprep.subr.bf16.mxu0 0
    %1372 = vmatpush1.bf16.msra.mxu0 0
    %1373 = vmatprep.mubr.bf16.mxu0 0
    %1374 = vmatmul.mubr.bf16.gmra.mrb[0].mxu0 %v1276
    %v1375 = vpop.f32.mrb[0].mxu0
    %v1376 = vadd.f32 %v173, %v1375
    %v1377 = vpop.f32.mrb[0].mxu0
    %v1378 = vpop.f32.mrb[0].mxu0
    %v1379 = vadd.f32 %v173, %v1378
    %v1380 = vpop.f32.mrb[0].mxu0
    %1381 = vdwg.mxu0
    %v1382 = vadd.f32 %v568, %v1376
    %vm1383 = vcmp.ge.f32.partialorder %v1382, 1.0
    %v1384 = vsel %vm1383, 1, 0
    %v1385 = vcvt.s32.f32 %v1384
    %v1386 = vsel %vm1383, 0.0, %v1382
    %v1387 = vadd.f32 %v1386, %v1379
    %vm1388 = vcmp.ge.f32.partialorder %v1387, 1.0
    %v1389 = vsel %vm1388, 1, 0
    %v1390 = vcvt.s32.f32 %v1389
    %v1391 = vsel %vm1388, 0.0, %v1387
    %v1392 = vpack.c.bf16 %v1390, %v1385
    %v1393 = vld [vmem:[#allocation10] sm:$0xf]
    %v1394 = vld [vmem:[#allocation10 + $0x4] sm:$0xf]
    %v1395 = vld [vmem:[#allocation10 + $0x8] sm:$0xf]
    %v1396 = vld [vmem:[#allocation10 + $0xc] sm:$0xf]
    %v1397 = vld [vmem:[#allocation10 + $0x10] sm:$0xf]
    %v1398 = vld [vmem:[#allocation10 + $0x14] sm:$0xf]
    %v1399 = vld [vmem:[#allocation10 + $0x18] sm:$0xf]
    %v1400 = vld [vmem:[#allocation10 + $0x1c] sm:$0xf]
    %v1401 = vld [vmem:[#allocation10 + $0x20] sm:$0xf]
    %v1402 = vld [vmem:[#allocation10 + $0x24] sm:$0xf]
    %v1403 = vld [vmem:[#allocation10 + $0x28] sm:$0xf]
    %v1404 = vld [vmem:[#allocation10 + $0x2c] sm:$0xf]
    %v1405 = vld [vmem:[#allocation10 + $0x30] sm:$0xf]
    %v1406 = vld [vmem:[#allocation10 + $0x34] sm:$0xf]
    %v1407 = vld [vmem:[#allocation10 + $0x38] sm:$0xf]
    %v1408 = vld [vmem:[#allocation10 + $0x3c] sm:$0xf]
    %v1425 = vunpack.c.l.b16 %v1393
    %v1426 = vunpack.c.l.b16 %v1394
    %v1427 = vunpack.c.l.b16 %v1395
    %v1428 = vunpack.c.l.b16 %v1396
    %v1429 = vunpack.c.l.b16 %v1397
    %v1430 = vunpack.c.l.b16 %v1398
    %v1431 = vunpack.c.l.b16 %v1399
    %v1432 = vunpack.c.l.b16 %v1400
    %v1433 = vunpack.c.l.b16 %v1401
    %v1434 = vunpack.c.l.b16 %v1402
    %v1435 = vunpack.c.l.b16 %v1403
    %v1436 = vunpack.c.l.b16 %v1404
    %v1437 = vunpack.c.l.b16 %v1405
    %v1438 = vunpack.c.l.b16 %v1406
    %v1439 = vunpack.c.l.b16 %v1407
    %v1440 = vunpack.c.l.b16 %v1408
    %v1441 = vpack.c.b16 %v1426, %v1425
    %v1442 = vpack.c.b16 %v1428, %v1427
    %v1443 = vpack.c.b16 %v1430, %v1429
    %v1444 = vpack.c.b16 %v1432, %v1431
    %v1445 = vpack.c.b16 %v1434, %v1433
    %v1446 = vpack.c.b16 %v1436, %v1435
    %v1447 = vpack.c.b16 %v1438, %v1437
    %v1448 = vpack.c.b16 %v1440, %v1439
    %1457 = vmatprep.subr.bf16.mxu0 0
    %1458 = vmatpush1.bf16.msra.mxu0 %v1441
    %1459 = vmatprep.subr.bf16.mxu0 0
    %1460 = vmatpush1.bf16.msra.mxu0 %v1442
    %1461 = vmatprep.subr.bf16.mxu0 0
    %1462 = vmatpush1.bf16.msra.mxu0 %v1443
    %1463 = vmatprep.subr.bf16.mxu0 0
    %1464 = vmatpush1.bf16.msra.mxu0 %v1444
    %1465 = vmatprep.subr.bf16.mxu0 0
    %1466 = vmatpush1.bf16.msra.mxu0 %v1445
    %1467 = vmatprep.subr.bf16.mxu0 0
    %1468 = vmatpush1.bf16.msra.mxu0 %v1446
    %1469 = vmatprep.subr.bf16.mxu0 0
    %1470 = vmatpush1.bf16.msra.mxu0 %v1447
    %1471 = vmatprep.subr.bf16.mxu0 0
    %1472 = vmatpush1.bf16.msra.mxu0 %v1448
    %1473 = vmatprep.subr.bf16.mxu0 0
    %1474 = vmatpush1.bf16.msra.mxu0 0
    %1475 = vmatprep.subr.bf16.mxu0 0
    %1476 = vmatpush1.bf16.msra.mxu0 0
    %1477 = vmatprep.subr.bf16.mxu0 0
    %1478 = vmatpush1.bf16.msra.mxu0 0
    %1479 = vmatprep.subr.bf16.mxu0 0
    %1480 = vmatpush1.bf16.msra.mxu0 0
    %1481 = vmatprep.subr.bf16.mxu0 0
    %1482 = vmatpush1.bf16.msra.mxu0 0
    %1483 = vmatprep.subr.bf16.mxu0 0
    %1484 = vmatpush1.bf16.msra.mxu0 0
    %1485 = vmatprep.subr.bf16.mxu0 0
    %1486 = vmatpush1.bf16.msra.mxu0 0
    %1487 = vmatprep.subr.bf16.mxu0 0
    %1488 = vmatpush1.bf16.msra.mxu0 0
    %1489 = vmatprep.mubr.bf16.mxu0 0
    %1490 = vmatmul.mubr.bf16.gmra.mrb[0].mxu0 %v1392
    %v1491 = vpop.f32.mrb[0].mxu0
    %v1492 = vadd.f32 0.0, %v1491
    %v1493 = vpop.f32.mrb[0].mxu0
    %v1494 = vpop.f32.mrb[0].mxu0
    %v1495 = vadd.f32 0.0, %v1494
    %v1496 = vpop.f32.mrb[0].mxu0
    %1497 = vdwg.mxu0
    %v1498 = vadd.f32 %v1385, %v1492
    %v1499 = vadd.f32 %v1390, %v1495
    %v1500 = vadd.f32 %v1498, %v194
    %v1501 = vadd.f32 %v1499, %v194
    %v1502 = vadd.f32 %v688, %v1500
    %vm1503 = vcmp.ge.f32.partialorder %v1502, 1.0
    %v1504 = vsel %vm1503, 1, 0
    %v1505 = vcvt.s32.f32 %v1504
    %v1506 = vsel %vm1503, 0.0, %v1502
    %v1507 = vadd.f32 %v1506, %v1501
    %vm1508 = vcmp.ge.f32.partialorder %v1507, 1.0
    %v1509 = vsel %vm1508, 1, 0
    %v1510 = vcvt.s32.f32 %v1509
    %v1511 = vsel %vm1508, 0.0, %v1507
    %v1512 = vpack.c.bf16 %v1510, %v1505
    %v1513 = vld [vmem:[#allocation11] sm:$0xf]
    %v1514 = vld [vmem:[#allocation11 + $0x4] sm:$0xf]
    %v1515 = vld [vmem:[#allocation11 + $0x8] sm:$0xf]
    %v1516 = vld [vmem:[#allocation11 + $0xc] sm:$0xf]
    %v1517 = vld [vmem:[#allocation11 + $0x10] sm:$0xf]
    %v1518 = vld [vmem:[#allocation11 + $0x14] sm:$0xf]
    %v1519 = vld [vmem:[#allocation11 + $0x18] sm:$0xf]
    %v1520 = vld [vmem:[#allocation11 + $0x1c] sm:$0xf]
    %v1521 = vld [vmem:[#allocation11 + $0x20] sm:$0xf]
    %v1522 = vld [vmem:[#allocation11 + $0x24] sm:$0xf]
    %v1523 = vld [vmem:[#allocation11 + $0x28] sm:$0xf]
    %v1524 = vld [vmem:[#allocation11 + $0x2c] sm:$0xf]
    %v1525 = vld [vmem:[#allocation11 + $0x30] sm:$0xf]
    %v1526 = vld [vmem:[#allocation11 + $0x34] sm:$0xf]
    %v1527 = vld [vmem:[#allocation11 + $0x38] sm:$0xf]
    %v1528 = vld [vmem:[#allocation11 + $0x3c] sm:$0xf]
    %v1545 = vunpack.c.l.b16 %v1513
    %v1546 = vunpack.c.l.b16 %v1514
    %v1547 = vunpack.c.l.b16 %v1515
    %v1548 = vunpack.c.l.b16 %v1516
    %v1549 = vunpack.c.l.b16 %v1517
    %v1550 = vunpack.c.l.b16 %v1518
    %v1551 = vunpack.c.l.b16 %v1519
    %v1552 = vunpack.c.l.b16 %v1520
    %v1553 = vunpack.c.l.b16 %v1521
    %v1554 = vunpack.c.l.b16 %v1522
    %v1555 = vunpack.c.l.b16 %v1523
    %v1556 = vunpack.c.l.b16 %v1524
    %v1557 = vunpack.c.l.b16 %v1525
    %v1558 = vunpack.c.l.b16 %v1526
    %v1559 = vunpack.c.l.b16 %v1527
    %v1560 = vunpack.c.l.b16 %v1528
    %v1561 = vpack.c.b16 %v1546, %v1545
    %v1562 = vpack.c.b16 %v1548, %v1547
    %v1563 = vpack.c.b16 %v1550, %v1549
    %v1564 = vpack.c.b16 %v1552, %v1551
    %v1565 = vpack.c.b16 %v1554, %v1553
    %v1566 = vpack.c.b16 %v1556, %v1555
    %v1567 = vpack.c.b16 %v1558, %v1557
    %v1568 = vpack.c.b16 %v1560, %v1559
    %1577 = vmatprep.subr.bf16.mxu0 0
    %1578 = vmatpush1.bf16.msra.mxu0 %v1561
    %1579 = vmatprep.subr.bf16.mxu0 0
    %1580 = vmatpush1.bf16.msra.mxu0 %v1562
    %1581 = vmatprep.subr.bf16.mxu0 0
    %1582 = vmatpush1.bf16.msra.mxu0 %v1563
    %1583 = vmatprep.subr.bf16.mxu0 0
    %1584 = vmatpush1.bf16.msra.mxu0 %v1564
    %1585 = vmatprep.subr.bf16.mxu0 0
    %1586 = vmatpush1.bf16.msra.mxu0 %v1565
    %1587 = vmatprep.subr.bf16.mxu0 0
    %1588 = vmatpush1.bf16.msra.mxu0 %v1566
    %1589 = vmatprep.subr.bf16.mxu0 0
    %1590 = vmatpush1.bf16.msra.mxu0 %v1567
    %1591 = vmatprep.subr.bf16.mxu0 0
    %1592 = vmatpush1.bf16.msra.mxu0 %v1568
    %1593 = vmatprep.subr.bf16.mxu0 0
    %1594 = vmatpush1.bf16.msra.mxu0 0
    %1595 = vmatprep.subr.bf16.mxu0 0
    %1596 = vmatpush1.bf16.msra.mxu0 0
    %1597 = vmatprep.subr.bf16.mxu0 0
    %1598 = vmatpush1.bf16.msra.mxu0 0
    %1599 = vmatprep.subr.bf16.mxu0 0
    %1600 = vmatpush1.bf16.msra.mxu0 0
    %1601 = vmatprep.subr.bf16.mxu0 0
    %1602 = vmatpush1.bf16.msra.mxu0 0
    %1603 = vmatprep.subr.bf16.mxu0 0
    %1604 = vmatpush1.bf16.msra.mxu0 0
    %1605 = vmatprep.subr.bf16.mxu0 0
    %1606 = vmatpush1.bf16.msra.mxu0 0
    %1607 = vmatprep.subr.bf16.mxu0 0
    %1608 = vmatpush1.bf16.msra.mxu0 0
    %1609 = vmatprep.mubr.bf16.mxu0 0
    %1610 = vmatmul.mubr.bf16.gmra.mrb[0].mxu0 %v1512
    %v1611 = vpop.f32.mrb[0].mxu0
    %v1612 = vadd.f32 %v180, %v1611
    %v1613 = vpop.f32.mrb[0].mxu0
    %v1614 = vpop.f32.mrb[0].mxu0
    %v1615 = vadd.f32 %v180, %v1614
    %v1616 = vpop.f32.mrb[0].mxu0
    %1617 = vdwg.mxu0
    %v1618 = vadd.f32 %v804, %v1612
    %vm1619 = vcmp.ge.f32.partialorder %v1618, 1.0
    %v1620 = vsel %vm1619, 1, 0
    %v1621 = vcvt.s32.f32 %v1620
    %v1622 = vsel %vm1619, 0.0, %v1618
    %v1623 = vadd.f32 %v1622, %v1615
    %vm1624 = vcmp.ge.f32.partialorder %v1623, 1.0
    %v1625 = vsel %vm1624, 1, 0
    %v1626 = vcvt.s32.f32 %v1625
    %v1627 = vsel %vm1624, 0.0, %v1623
    %v1628 = vpack.c.bf16 %v1626, %v1621
    %v1629 = vld [vmem:[#allocation13] sm:$0xf]
    %v1630 = vld [vmem:[#allocation13 + $0x4] sm:$0xf]
    %v1631 = vld [vmem:[#allocation13 + $0x8] sm:$0xf]
    %v1632 = vld [vmem:[#allocation13 + $0xc] sm:$0xf]
    %v1633 = vld [vmem:[#allocation13 + $0x10] sm:$0xf]
    %v1634 = vld [vmem:[#allocation13 + $0x14] sm:$0xf]
    %v1635 = vld [vmem:[#allocation13 + $0x18] sm:$0xf]
    %v1636 = vld [vmem:[#allocation13 + $0x1c] sm:$0xf]
    %v1637 = vld [vmem:[#allocation13 + $0x20] sm:$0xf]
    %v1638 = vld [vmem:[#allocation13 + $0x24] sm:$0xf]
    %v1639 = vld [vmem:[#allocation13 + $0x28] sm:$0xf]
    %v1640 = vld [vmem:[#allocation13 + $0x2c] sm:$0xf]
    %v1641 = vld [vmem:[#allocation13 + $0x30] sm:$0xf]
    %v1642 = vld [vmem:[#allocation13 + $0x34] sm:$0xf]
    %v1643 = vld [vmem:[#allocation13 + $0x38] sm:$0xf]
    %v1644 = vld [vmem:[#allocation13 + $0x3c] sm:$0xf]
    %v1661 = vunpack.c.l.b16 %v1629
    %v1662 = vunpack.c.l.b16 %v1630
    %v1663 = vunpack.c.l.b16 %v1631
    %v1664 = vunpack.c.l.b16 %v1632
    %v1665 = vunpack.c.l.b16 %v1633
    %v1666 = vunpack.c.l.b16 %v1634
    %v1667 = vunpack.c.l.b16 %v1635
    %v1668 = vunpack.c.l.b16 %v1636
    %v1669 = vunpack.c.l.b16 %v1637
    %v1670 = vunpack.c.l.b16 %v1638
    %v1671 = vunpack.c.l.b16 %v1639
    %v1672 = vunpack.c.l.b16 %v1640
    %v1673 = vunpack.c.l.b16 %v1641
    %v1674 = vunpack.c.l.b16 %v1642
    %v1675 = vunpack.c.l.b16 %v1643
    %v1676 = vunpack.c.l.b16 %v1644
    %v1677 = vpack.c.b16 %v1662, %v1661
    %v1678 = vpack.c.b16 %v1664, %v1663
    %v1679 = vpack.c.b16 %v1666, %v1665
    %v1680 = vpack.c.b16 %v1668, %v1667
    %v1681 = vpack.c.b16 %v1670, %v1669
    %v1682 = vpack.c.b16 %v1672, %v1671
    %v1683 = vpack.c.b16 %v1674, %v1673
    %v1684 = vpack.c.b16 %v1676, %v1675
    %1693 = vmatprep.subr.bf16.mxu0 0
    %1694 = vmatpush1.bf16.msra.mxu0 %v1677
    %1695 = vmatprep.subr.bf16.mxu0 0
    %1696 = vmatpush1.bf16.msra.mxu0 %v1678
    %1697 = vmatprep.subr.bf16.mxu0 0
    %1698 = vmatpush1.bf16.msra.mxu0 %v1679
    %1699 = vmatprep.subr.bf16.mxu0 0
    %1700 = vmatpush1.bf16.msra.mxu0 %v1680
    %1701 = vmatprep.subr.bf16.mxu0 0
    %1702 = vmatpush1.bf16.msra.mxu0 %v1681
    %1703 = vmatprep.subr.bf16.mxu0 0
    %1704 = vmatpush1.bf16.msra.mxu0 %v1682
    %1705 = vmatprep.subr.bf16.mxu0 0
    %1706 = vmatpush1.bf16.msra.mxu0 %v1683
    %1707 = vmatprep.subr.bf16.mxu0 0
    %1708 = vmatpush1.bf16.msra.mxu0 %v1684
    %1709 = vmatprep.subr.bf16.mxu0 0
    %1710 = vmatpush1.bf16.msra.mxu0 0
    %1711 = vmatprep.subr.bf16.mxu0 0
    %1712 = vmatpush1.bf16.msra.mxu0 0
    %1713 = vmatprep.subr.bf16.mxu0 0
    %1714 = vmatpush1.bf16.msra.mxu0 0
    %1715 = vmatprep.subr.bf16.mxu0 0
    %1716 = vmatpush1.bf16.msra.mxu0 0
    %1717 = vmatprep.subr.bf16.mxu0 0
    %1718 = vmatpush1.bf16.msra.mxu0 0
    %1719 = vmatprep.subr.bf16.mxu0 0
    %1720 = vmatpush1.bf16.msra.mxu0 0
    %1721 = vmatprep.subr.bf16.mxu0 0
    %1722 = vmatpush1.bf16.msra.mxu0 0
    %1723 = vmatprep.subr.bf16.mxu0 0
    %1724 = vmatpush1.bf16.msra.mxu0 0
    %1725 = vmatprep.mubr.bf16.mxu0 0
    %1726 = vmatmul.mubr.bf16.gmra.mrb[0].mxu0 %v1628
    %v1727 = vpop.f32.mrb[0].mxu0
    %v1728 = vadd.f32 0.0, %v1727
    %v1729 = vpop.f32.mrb[0].mxu0
    %v1730 = vpop.f32.mrb[0].mxu0
    %v1731 = vadd.f32 0.0, %v1730
    %v1732 = vpop.f32.mrb[0].mxu0
    %1733 = vdwg.mxu0
    %v1734 = vadd.f32 %v1621, %v1728
    %v1735 = vadd.f32 %v1626, %v1731
    %v1736 = vadd.f32 %v1734, %v201
    %v1737 = vadd.f32 %v1735, %v201
    %v1738 = vadd.f32 %v924, %v1736
    %vm1739 = vcmp.ge.f32.partialorder %v1738, 1.0
    %v1740 = vsel %vm1739, 1, 0
    %v1741 = vcvt.s32.f32 %v1740
    %v1742 = vsel %vm1739, 0.0, %v1738
    %v1743 = vadd.f32 %v1742, %v1737
    %vm1744 = vcmp.ge.f32.partialorder %v1743, 1.0
    %v1745 = vsel %vm1744, 1, 0
    %v1746 = vcvt.s32.f32 %v1745
    %v1747 = vsel %vm1744, 0.0, %v1743
    %v1748 = vpack.c.bf16 %v1746, %v1741
    %v1749 = vld [vmem:[#allocation14] sm:$0xf]
    %v1750 = vld [vmem:[#allocation14 + $0x4] sm:$0xf]
    %v1751 = vld [vmem:[#allocation14 + $0x8] sm:$0xf]
    %v1752 = vld [vmem:[#allocation14 + $0xc] sm:$0xf]
    %v1753 = vld [vmem:[#allocation14 + $0x10] sm:$0xf]
    %v1754 = vld [vmem:[#allocation14 + $0x14] sm:$0xf]
    %v1755 = vld [vmem:[#allocation14 + $0x18] sm:$0xf]
    %v1756 = vld [vmem:[#allocation14 + $0x1c] sm:$0xf]
    %v1757 = vld [vmem:[#allocation14 + $0x20] sm:$0xf]
    %v1758 = vld [vmem:[#allocation14 + $0x24] sm:$0xf]
    %v1759 = vld [vmem:[#allocation14 + $0x28] sm:$0xf]
    %v1760 = vld [vmem:[#allocation14 + $0x2c] sm:$0xf]
    %v1761 = vld [vmem:[#allocation14 + $0x30] sm:$0xf]
    %v1762 = vld [vmem:[#allocation14 + $0x34] sm:$0xf]
    %v1763 = vld [vmem:[#allocation14 + $0x38] sm:$0xf]
    %v1764 = vld [vmem:[#allocation14 + $0x3c] sm:$0xf]
    %v1781 = vunpack.c.l.b16 %v1749
    %v1782 = vunpack.c.l.b16 %v1750
    %v1783 = vunpack.c.l.b16 %v1751
    %v1784 = vunpack.c.l.b16 %v1752
    %v1785 = vunpack.c.l.b16 %v1753
    %v1786 = vunpack.c.l.b16 %v1754
    %v1787 = vunpack.c.l.b16 %v1755
    %v1788 = vunpack.c.l.b16 %v1756
    %v1789 = vunpack.c.l.b16 %v1757
    %v1790 = vunpack.c.l.b16 %v1758
    %v1791 = vunpack.c.l.b16 %v1759
    %v1792 = vunpack.c.l.b16 %v1760
    %v1793 = vunpack.c.l.b16 %v1761
    %v1794 = vunpack.c.l.b16 %v1762
    %v1795 = vunpack.c.l.b16 %v1763
    %v1796 = vunpack.c.l.b16 %v1764
    %v1797 = vpack.c.b16 %v1782, %v1781
    %v1798 = vpack.c.b16 %v1784, %v1783
    %v1799 = vpack.c.b16 %v1786, %v1785
    %v1800 = vpack.c.b16 %v1788, %v1787
    %v1801 = vpack.c.b16 %v1790, %v1789
    %v1802 = vpack.c.b16 %v1792, %v1791
    %v1803 = vpack.c.b16 %v1794, %v1793
    %v1804 = vpack.c.b16 %v1796, %v1795
    %1813 = vmatprep.subr.bf16.mxu0 0
    %1814 = vmatpush1.bf16.msra.mxu0 %v1797
    %1815 = vmatprep.subr.bf16.mxu0 0
    %1816 = vmatpush1.bf16.msra.mxu0 %v1798
    %1817 = vmatprep.subr.bf16.mxu0 0
    %1818 = vmatpush1.bf16.msra.mxu0 %v1799
    %1819 = vmatprep.subr.bf16.mxu0 0
    %1820 = vmatpush1.bf16.msra.mxu0 %v1800
    %1821 = vmatprep.subr.bf16.mxu0 0
    %1822 = vmatpush1.bf16.msra.mxu0 %v1801
    %1823 = vmatprep.subr.bf16.mxu0 0
    %1824 = vmatpush1.bf16.msra.mxu0 %v1802
    %1825 = vmatprep.subr.bf16.mxu0 0
    %1826 = vmatpush1.bf16.msra.mxu0 %v1803
    %1827 = vmatprep.subr.bf16.mxu0 0
    %1828 = vmatpush1.bf16.msra.mxu0 %v1804
    %1829 = vmatprep.subr.bf16.mxu0 0
    %1830 = vmatpush1.bf16.msra.mxu0 0
    %1831 = vmatprep.subr.bf16.mxu0 0
    %1832 = vmatpush1.bf16.msra.mxu0 0
    %1833 = vmatprep.subr.bf16.mxu0 0
    %1834 = vmatpush1.bf16.msra.mxu0 0
    %1835 = vmatprep.subr.bf16.mxu0 0
    %1836 = vmatpush1.bf16.msra.mxu0 0
    %1837 = vmatprep.subr.bf16.mxu0 0
    %1838 = vmatpush1.bf16.msra.mxu0 0
    %1839 = vmatprep.subr.bf16.mxu0 0
    %1840 = vmatpush1.bf16.msra.mxu0 0
    %1841 = vmatprep.subr.bf16.mxu0 0
    %1842 = vmatpush1.bf16.msra.mxu0 0
    %1843 = vmatprep.subr.bf16.mxu0 0
    %1844 = vmatpush1.bf16.msra.mxu0 0
    %1845 = vmatprep.mubr.bf16.mxu0 0
    %1846 = vmatmul.mubr.bf16.gmra.mrb[0].mxu0 %v1748
    %v1847 = vpop.f32.mrb[0].mxu0
    %v1848 = vadd.f32 %v208, %v1847
    %v1849 = vpop.f32.mrb[0].mxu0
    %v1850 = vpop.f32.mrb[0].mxu0
    %v1851 = vadd.f32 %v208, %v1850
    %v1852 = vpop.f32.mrb[0].mxu0
    %1853 = vdwg.mxu0
    %1854 = vst [vmem:[#allocation16 + $0x10] sm:$0xff] %v1848
    %1855 = vst [vmem:[#allocation16 + $0x18] sm:$0xff] %v1851
    %v1856 = vld [vmem:[#allocation2 + $0x10] sm:$0xf]
    %v1857 = vld [vmem:[#allocation2 + $0x14] sm:$0xf]
    %v1858 = vld [vmem:[#allocation5] sm:$0xf]
    %v1859 = vld [vmem:[#allocation5 + $0x4] sm:$0xf]
    %v1860 = vld [vmem:[#allocation5 + $0x8] sm:$0xf]
    %v1861 = vld [vmem:[#allocation5 + $0xc] sm:$0xf]
    %v1862 = vld [vmem:[#allocation5 + $0x10] sm:$0xf]
    %v1863 = vld [vmem:[#allocation5 + $0x14] sm:$0xf]
    %v1864 = vld [vmem:[#allocation5 + $0x18] sm:$0xf]
    %v1865 = vld [vmem:[#allocation5 + $0x1c] sm:$0xf]
    %v1866 = vld [vmem:[#allocation5 + $0x20] sm:$0xf]
    %v1867 = vld [vmem:[#allocation5 + $0x24] sm:$0xf]
    %v1868 = vld [vmem:[#allocation5 + $0x28] sm:$0xf]
    %v1869 = vld [vmem:[#allocation5 + $0x2c] sm:$0xf]
    %v1870 = vld [vmem:[#allocation5 + $0x30] sm:$0xf]
    %v1871 = vld [vmem:[#allocation5 + $0x34] sm:$0xf]
    %v1872 = vld [vmem:[#allocation5 + $0x38] sm:$0xf]
    %v1873 = vld [vmem:[#allocation5 + $0x3c] sm:$0xf]
    %v1876 = vunpack.c.l.b16 %v1856
    %v1877 = vunpack.c.l.b16 %v1857
    %v1878 = vpack.c.b16 %v1877, %v1876
    %v1896 = vunpack.c.l.b16 %v1858
    %v1897 = vunpack.c.l.b16 %v1859
    %v1898 = vunpack.c.l.b16 %v1860
    %v1899 = vunpack.c.l.b16 %v1861
    %v1900 = vunpack.c.l.b16 %v1862
    %v1901 = vunpack.c.l.b16 %v1863
    %v1902 = vunpack.c.l.b16 %v1864
    %v1903 = vunpack.c.l.b16 %v1865
    %v1904 = vunpack.c.l.b16 %v1866
    %v1905 = vunpack.c.l.b16 %v1867
    %v1906 = vunpack.c.l.b16 %v1868
    %v1907 = vunpack.c.l.b16 %v1869
    %v1908 = vunpack.c.l.b16 %v1870
    %v1909 = vunpack.c.l.b16 %v1871
    %v1910 = vunpack.c.l.b16 %v1872
    %v1911 = vunpack.c.l.b16 %v1873
    %v1912 = vpack.c.b16 %v1897, %v1896
    %v1913 = vpack.c.b16 %v1899, %v1898
    %v1914 = vpack.c.b16 %v1901, %v1900
    %v1915 = vpack.c.b16 %v1903, %v1902
    %v1916 = vpack.c.b16 %v1905, %v1904
    %v1917 = vpack.c.b16 %v1907, %v1906
    %v1918 = vpack.c.b16 %v1909, %v1908
    %v1919 = vpack.c.b16 %v1911, %v1910
    %1928 = vmatprep.subr.bf16.mxu0 0
    %1929 = vmatpush1.bf16.msra.mxu0 %v1912
    %1930 = vmatprep.subr.bf16.mxu0 0
    %1931 = vmatpush1.bf16.msra.mxu0 %v1913
    %1932 = vmatprep.subr.bf16.mxu0 0
    %1933 = vmatpush1.bf16.msra.mxu0 %v1914
    %1934 = vmatprep.subr.bf16.mxu0 0
    %1935 = vmatpush1.bf16.msra.mxu0 %v1915
    %1936 = vmatprep.subr.bf16.mxu0 0
    %1937 = vmatpush1.bf16.msra.mxu0 %v1916
    %1938 = vmatprep.subr.bf16.mxu0 0
    %1939 = vmatpush1.bf16.msra.mxu0 %v1917
    %1940 = vmatprep.subr.bf16.mxu0 0
    %1941 = vmatpush1.bf16.msra.mxu0 %v1918
    %1942 = vmatprep.subr.bf16.mxu0 0
    %1943 = vmatpush1.bf16.msra.mxu0 %v1919
    %1944 = vmatprep.subr.bf16.mxu0 0
    %1945 = vmatpush1.bf16.msra.mxu0 0
    %1946 = vmatprep.subr.bf16.mxu0 0
    %1947 = vmatpush1.bf16.msra.mxu0 0
    %1948 = vmatprep.subr.bf16.mxu0 0
    %1949 = vmatpush1.bf16.msra.mxu0 0
    %1950 = vmatprep.subr.bf16.mxu0 0
    %1951 = vmatpush1.bf16.msra.mxu0 0
    %1952 = vmatprep.subr.bf16.mxu0 0
    %1953 = vmatpush1.bf16.msra.mxu0 0
    %1954 = vmatprep.subr.bf16.mxu0 0
    %1955 = vmatpush1.bf16.msra.mxu0 0
    %1956 = vmatprep.subr.bf16.mxu0 0
    %1957 = vmatpush1.bf16.msra.mxu0 0
    %1958 = vmatprep.subr.bf16.mxu0 0
    %1959 = vmatpush1.bf16.msra.mxu0 0
    %1960 = vmatprep.mubr.bf16.mxu0 0
    %1961 = vmatmul.mubr.bf16.gmra.mrb[0].mxu0 %v1878
    %v1962 = vpop.f32.mrb[0].mxu0
    %v1963 = vadd.f32 %v166, %v1962
    %v1964 = vpop.f32.mrb[0].mxu0
    %v1965 = vpop.f32.mrb[0].mxu0
    %v1966 = vadd.f32 %v166, %v1965
    %v1967 = vpop.f32.mrb[0].mxu0
    %1968 = vdwg.mxu0
    %v1969 = vadd.f32 %v1155, %v1963
    %vm1970 = vcmp.ge.f32.partialorder %v1969, 1.0
    %v1971 = vsel %vm1970, 1, 0
    %v1972 = vcvt.s32.f32 %v1971
    %v1973 = vsel %vm1970, 0.0, %v1969
    %v1974 = vadd.f32 %v1973, %v1966
    %vm1975 = vcmp.ge.f32.partialorder %v1974, 1.0
    %v1976 = vsel %vm1975, 1, 0
    %v1977 = vcvt.s32.f32 %v1976
    %v1978 = vsel %vm1975, 0.0, %v1974
    %v1979 = vpack.c.bf16 %v1977, %v1972
    %v1980 = vld [vmem:[#allocation7] sm:$0xf]
    %v1981 = vld [vmem:[#allocation7 + $0x4] sm:$0xf]
    %v1982 = vld [vmem:[#allocation7 + $0x8] sm:$0xf]
    %v1983 = vld [vmem:[#allocation7 + $0xc] sm:$0xf]
    %v1984 = vld [vmem:[#allocation7 + $0x10] sm:$0xf]
    %v1985 = vld [vmem:[#allocation7 + $0x14] sm:$0xf]
    %v1986 = vld [vmem:[#allocation7 + $0x18] sm:$0xf]
    %v1987 = vld [vmem:[#allocation7 + $0x1c] sm:$0xf]
    %v1988 = vld [vmem:[#allocation7 + $0x20] sm:$0xf]
    %v1989 = vld [vmem:[#allocation7 + $0x24] sm:$0xf]
    %v1990 = vld [vmem:[#allocation7 + $0x28] sm:$0xf]
    %v1991 = vld [vmem:[#allocation7 + $0x2c] sm:$0xf]
    %v1992 = vld [vmem:[#allocation7 + $0x30] sm:$0xf]
    %v1993 = vld [vmem:[#allocation7 + $0x34] sm:$0xf]
    %v1994 = vld [vmem:[#allocation7 + $0x38] sm:$0xf]
    %v1995 = vld [vmem:[#allocation7 + $0x3c] sm:$0xf]
    %v2012 = vunpack.c.l.b16 %v1980
    %v2013 = vunpack.c.l.b16 %v1981
    %v2014 = vunpack.c.l.b16 %v1982
    %v2015 = vunpack.c.l.b16 %v1983
    %v2016 = vunpack.c.l.b16 %v1984
    %v2017 = vunpack.c.l.b16 %v1985
    %v2018 = vunpack.c.l.b16 %v1986
    %v2019 = vunpack.c.l.b16 %v1987
    %v2020 = vunpack.c.l.b16 %v1988
    %v2021 = vunpack.c.l.b16 %v1989
    %v2022 = vunpack.c.l.b16 %v1990
    %v2023 = vunpack.c.l.b16 %v1991
    %v2024 = vunpack.c.l.b16 %v1992
    %v2025 = vunpack.c.l.b16 %v1993
    %v2026 = vunpack.c.l.b16 %v1994
    %v2027 = vunpack.c.l.b16 %v1995
    %v2028 = vpack.c.b16 %v2013, %v2012
    %v2029 = vpack.c.b16 %v2015, %v2014
    %v2030 = vpack.c.b16 %v2017, %v2016
    %v2031 = vpack.c.b16 %v2019, %v2018
    %v2032 = vpack.c.b16 %v2021, %v2020
    %v2033 = vpack.c.b16 %v2023, %v2022
    %v2034 = vpack.c.b16 %v2025, %v2024
    %v2035 = vpack.c.b16 %v2027, %v2026
    %2044 = vmatprep.subr.bf16.mxu0 0
    %2045 = vmatpush1.bf16.msra.mxu0 %v2028
    %2046 = vmatprep.subr.bf16.mxu0 0
    %2047 = vmatpush1.bf16.msra.mxu0 %v2029
    %2048 = vmatprep.subr.bf16.mxu0 0
    %2049 = vmatpush1.bf16.msra.mxu0 %v2030
    %2050 = vmatprep.subr.bf16.mxu0 0
    %2051 = vmatpush1.bf16.msra.mxu0 %v2031
    %2052 = vmatprep.subr.bf16.mxu0 0
    %2053 = vmatpush1.bf16.msra.mxu0 %v2032
    %2054 = vmatprep.subr.bf16.mxu0 0
    %2055 = vmatpush1.bf16.msra.mxu0 %v2033
    %2056 = vmatprep.subr.bf16.mxu0 0
    %2057 = vmatpush1.bf16.msra.mxu0 %v2034
    %2058 = vmatprep.subr.bf16.mxu0 0
    %2059 = vmatpush1.bf16.msra.mxu0 %v2035
    %2060 = vmatprep.subr.bf16.mxu0 0
    %2061 = vmatpush1.bf16.msra.mxu0 0
    %2062 = vmatprep.subr.bf16.mxu0 0
    %2063 = vmatpush1.bf16.msra.mxu0 0
    %2064 = vmatprep.subr.bf16.mxu0 0
    %2065 = vmatpush1.bf16.msra.mxu0 0
    %2066 = vmatprep.subr.bf16.mxu0 0
    %2067 = vmatpush1.bf16.msra.mxu0 0
    %2068 = vmatprep.subr.bf16.mxu0 0
    %2069 = vmatpush1.bf16.msra.mxu0 0
    %2070 = vmatprep.subr.bf16.mxu0 0
    %2071 = vmatpush1.bf16.msra.mxu0 0
    %2072 = vmatprep.subr.bf16.mxu0 0
    %2073 = vmatpush1.bf16.msra.mxu0 0
    %2074 = vmatprep.subr.bf16.mxu0 0
    %2075 = vmatpush1.bf16.msra.mxu0 0
    %2076 = vmatprep.mubr.bf16.mxu0 0
    %2077 = vmatmul.mubr.bf16.gmra.mrb[0].mxu0 %v1979
    %v2078 = vpop.f32.mrb[0].mxu0
    %v2079 = vadd.f32 0.0, %v2078
    %v2080 = vpop.f32.mrb[0].mxu0
    %v2081 = vpop.f32.mrb[0].mxu0
    %v2082 = vadd.f32 0.0, %v2081
    %v2083 = vpop.f32.mrb[0].mxu0
    %2084 = vdwg.mxu0
    %v2085 = vadd.f32 %v1972, %v2079
    %v2086 = vadd.f32 %v1977, %v2082
    %v2087 = vadd.f32 %v2085, %v187
    %v2088 = vadd.f32 %v2086, %v187
    %v2089 = vadd.f32 %v1275, %v2087
    %vm2090 = vcmp.ge.f32.partialorder %v2089, 1.0
    %v2091 = vsel %vm2090, 1, 0
    %v2092 = vcvt.s32.f32 %v2091
    %v2093 = vsel %vm2090, 0.0, %v2089
    %v2094 = vadd.f32 %v2093, %v2088
    %vm2095 = vcmp.ge.f32.partialorder %v2094, 1.0
    %v2096 = vsel %vm2095, 1, 0
    %v2097 = vcvt.s32.f32 %v2096
    %v2098 = vsel %vm2095, 0.0, %v2094
    %v2099 = vpack.c.bf16 %v2097, %v2092
    %v2100 = vld [vmem:[#allocation8] sm:$0xf]
    %v2101 = vld [vmem:[#allocation8 + $0x4] sm:$0xf]
    %v2102 = vld [vmem:[#allocation8 + $0x8] sm:$0xf]
    %v2103 = vld [vmem:[#allocation8 + $0xc] sm:$0xf]
    %v2104 = vld [vmem:[#allocation8 + $0x10] sm:$0xf]
    %v2105 = vld [vmem:[#allocation8 + $0x14] sm:$0xf]
    %v2106 = vld [vmem:[#allocation8 + $0x18] sm:$0xf]
    %v2107 = vld [vmem:[#allocation8 + $0x1c] sm:$0xf]
    %v2108 = vld [vmem:[#allocation8 + $0x20] sm:$0xf]
    %v2109 = vld [vmem:[#allocation8 + $0x24] sm:$0xf]
    %v2110 = vld [vmem:[#allocation8 + $0x28] sm:$0xf]
    %v2111 = vld [vmem:[#allocation8 + $0x2c] sm:$0xf]
    %v2112 = vld [vmem:[#allocation8 + $0x30] sm:$0xf]
    %v2113 = vld [vmem:[#allocation8 + $0x34] sm:$0xf]
    %v2114 = vld [vmem:[#allocation8 + $0x38] sm:$0xf]
    %v2115 = vld [vmem:[#allocation8 + $0x3c] sm:$0xf]
    %v2132 = vunpack.c.l.b16 %v2100
    %v2133 = vunpack.c.l.b16 %v2101
    %v2134 = vunpack.c.l.b16 %v2102
    %v2135 = vunpack.c.l.b16 %v2103
    %v2136 = vunpack.c.l.b16 %v2104
    %v2137 = vunpack.c.l.b16 %v2105
    %v2138 = vunpack.c.l.b16 %v2106
    %v2139 = vunpack.c.l.b16 %v2107
    %v2140 = vunpack.c.l.b16 %v2108
    %v2141 = vunpack.c.l.b16 %v2109
    %v2142 = vunpack.c.l.b16 %v2110
    %v2143 = vunpack.c.l.b16 %v2111
    %v2144 = vunpack.c.l.b16 %v2112
    %v2145 = vunpack.c.l.b16 %v2113
    %v2146 = vunpack.c.l.b16 %v2114
    %v2147 = vunpack.c.l.b16 %v2115
    %v2148 = vpack.c.b16 %v2133, %v2132
    %v2149 = vpack.c.b16 %v2135, %v2134
    %v2150 = vpack.c.b16 %v2137, %v2136
    %v2151 = vpack.c.b16 %v2139, %v2138
    %v2152 = vpack.c.b16 %v2141, %v2140
    %v2153 = vpack.c.b16 %v2143, %v2142
    %v2154 = vpack.c.b16 %v2145, %v2144
    %v2155 = vpack.c.b16 %v2147, %v2146
    %2164 = vmatprep.subr.bf16.mxu0 0
    %2165 = vmatpush1.bf16.msra.mxu0 %v2148
    %2166 = vmatprep.subr.bf16.mxu0 0
    %2167 = vmatpush1.bf16.msra.mxu0 %v2149
    %2168 = vmatprep.subr.bf16.mxu0 0
    %2169 = vmatpush1.bf16.msra.mxu0 %v2150
    %2170 = vmatprep.subr.bf16.mxu0 0
    %2171 = vmatpush1.bf16.msra.mxu0 %v2151
    %2172 = vmatprep.subr.bf16.mxu0 0
    %2173 = vmatpush1.bf16.msra.mxu0 %v2152
    %2174 = vmatprep.subr.bf16.mxu0 0
    %2175 = vmatpush1.bf16.msra.mxu0 %v2153
    %2176 = vmatprep.subr.bf16.mxu0 0
    %2177 = vmatpush1.bf16.msra.mxu0 %v2154
    %2178 = vmatprep.subr.bf16.mxu0 0
    %2179 = vmatpush1.bf16.msra.mxu0 %v2155
    %2180 = vmatprep.subr.bf16.mxu0 0
    %2181 = vmatpush1.bf16.msra.mxu0 0
    %2182 = vmatprep.subr.bf16.mxu0 0
    %2183 = vmatpush1.bf16.msra.mxu0 0
    %2184 = vmatprep.subr.bf16.mxu0 0
    %2185 = vmatpush1.bf16.msra.mxu0 0
    %2186 = vmatprep.subr.bf16.mxu0 0
    %2187 = vmatpush1.bf16.msra.mxu0 0
    %2188 = vmatprep.subr.bf16.mxu0 0
    %2189 = vmatpush1.bf16.msra.mxu0 0
    %2190 = vmatprep.subr.bf16.mxu0 0
    %2191 = vmatpush1.bf16.msra.mxu0 0
    %2192 = vmatprep.subr.bf16.mxu0 0
    %2193 = vmatpush1.bf16.msra.mxu0 0
    %2194 = vmatprep.subr.bf16.mxu0 0
    %2195 = vmatpush1.bf16.msra.mxu0 0
    %2196 = vmatprep.mubr.bf16.mxu0 0
    %2197 = vmatmul.mubr.bf16.gmra.mrb[0].mxu0 %v2099
    %v2198 = vpop.f32.mrb[0].mxu0
    %v2199 = vadd.f32 %v173, %v2198
    %v2200 = vpop.f32.mrb[0].mxu0
    %v2201 = vpop.f32.mrb[0].mxu0
    %v2202 = vadd.f32 %v173, %v2201
    %v2203 = vpop.f32.mrb[0].mxu0
    %2204 = vdwg.mxu0
    %v2205 = vadd.f32 %v1391, %v2199
    %vm2206 = vcmp.ge.f32.partialorder %v2205, 1.0
    %v2207 = vsel %vm2206, 1, 0
    %v2208 = vcvt.s32.f32 %v2207
    %v2209 = vsel %vm2206, 0.0, %v2205
    %v2210 = vadd.f32 %v2209, %v2202
    %vm2211 = vcmp.ge.f32.partialorder %v2210, 1.0
    %v2212 = vsel %vm2211, 1, 0
    %v2213 = vcvt.s32.f32 %v2212
    %v2214 = vsel %vm2211, 0.0, %v2210
    %v2215 = vpack.c.bf16 %v2213, %v2208
    %v2216 = vld [vmem:[#allocation10] sm:$0xf]
    %v2217 = vld [vmem:[#allocation10 + $0x4] sm:$0xf]
    %v2218 = vld [vmem:[#allocation10 + $0x8] sm:$0xf]
    %v2219 = vld [vmem:[#allocation10 + $0xc] sm:$0xf]
    %v2220 = vld [vmem:[#allocation10 + $0x10] sm:$0xf]
    %v2221 = vld [vmem:[#allocation10 + $0x14] sm:$0xf]
    %v2222 = vld [vmem:[#allocation10 + $0x18] sm:$0xf]
    %v2223 = vld [vmem:[#allocation10 + $0x1c] sm:$0xf]
    %v2224 = vld [vmem:[#allocation10 + $0x20] sm:$0xf]
    %v2225 = vld [vmem:[#allocation10 + $0x24] sm:$0xf]
    %v2226 = vld [vmem:[#allocation10 + $0x28] sm:$0xf]
    %v2227 = vld [vmem:[#allocation10 + $0x2c] sm:$0xf]
    %v2228 = vld [vmem:[#allocation10 + $0x30] sm:$0xf]
    %v2229 = vld [vmem:[#allocation10 + $0x34] sm:$0xf]
    %v2230 = vld [vmem:[#allocation10 + $0x38] sm:$0xf]
    %v2231 = vld [vmem:[#allocation10 + $0x3c] sm:$0xf]
    %v2248 = vunpack.c.l.b16 %v2216
    %v2249 = vunpack.c.l.b16 %v2217
    %v2250 = vunpack.c.l.b16 %v2218
    %v2251 = vunpack.c.l.b16 %v2219
    %v2252 = vunpack.c.l.b16 %v2220
    %v2253 = vunpack.c.l.b16 %v2221
    %v2254 = vunpack.c.l.b16 %v2222
    %v2255 = vunpack.c.l.b16 %v2223
    %v2256 = vunpack.c.l.b16 %v2224
    %v2257 = vunpack.c.l.b16 %v2225
    %v2258 = vunpack.c.l.b16 %v2226
    %v2259 = vunpack.c.l.b16 %v2227
    %v2260 = vunpack.c.l.b16 %v2228
    %v2261 = vunpack.c.l.b16 %v2229
    %v2262 = vunpack.c.l.b16 %v2230
    %v2263 = vunpack.c.l.b16 %v2231
    %v2264 = vpack.c.b16 %v2249, %v2248
    %v2265 = vpack.c.b16 %v2251, %v2250
    %v2266 = vpack.c.b16 %v2253, %v2252
    %v2267 = vpack.c.b16 %v2255, %v2254
    %v2268 = vpack.c.b16 %v2257, %v2256
    %v2269 = vpack.c.b16 %v2259, %v2258
    %v2270 = vpack.c.b16 %v2261, %v2260
    %v2271 = vpack.c.b16 %v2263, %v2262
    %2280 = vmatprep.subr.bf16.mxu0 0
    %2281 = vmatpush1.bf16.msra.mxu0 %v2264
    %2282 = vmatprep.subr.bf16.mxu0 0
    %2283 = vmatpush1.bf16.msra.mxu0 %v2265
    %2284 = vmatprep.subr.bf16.mxu0 0
    %2285 = vmatpush1.bf16.msra.mxu0 %v2266
    %2286 = vmatprep.subr.bf16.mxu0 0
    %2287 = vmatpush1.bf16.msra.mxu0 %v2267
    %2288 = vmatprep.subr.bf16.mxu0 0
    %2289 = vmatpush1.bf16.msra.mxu0 %v2268
    %2290 = vmatprep.subr.bf16.mxu0 0
    %2291 = vmatpush1.bf16.msra.mxu0 %v2269
    %2292 = vmatprep.subr.bf16.mxu0 0
    %2293 = vmatpush1.bf16.msra.mxu0 %v2270
    %2294 = vmatprep.subr.bf16.mxu0 0
    %2295 = vmatpush1.bf16.msra.mxu0 %v2271
    %2296 = vmatprep.subr.bf16.mxu0 0
    %2297 = vmatpush1.bf16.msra.mxu0 0
    %2298 = vmatprep.subr.bf16.mxu0 0
    %2299 = vmatpush1.bf16.msra.mxu0 0
    %2300 = vmatprep.subr.bf16.mxu0 0
    %2301 = vmatpush1.bf16.msra.mxu0 0
    %2302 = vmatprep.subr.bf16.mxu0 0
    %2303 = vmatpush1.bf16.msra.mxu0 0
    %2304 = vmatprep.subr.bf16.mxu0 0
    %2305 = vmatpush1.bf16.msra.mxu0 0
    %2306 = vmatprep.subr.bf16.mxu0 0
    %2307 = vmatpush1.bf16.msra.mxu0 0
    %2308 = vmatprep.subr.bf16.mxu0 0
    %2309 = vmatpush1.bf16.msra.mxu0 0
    %2310 = vmatprep.subr.bf16.mxu0 0
    %2311 = vmatpush1.bf16.msra.mxu0 0
    %2312 = vmatprep.mubr.bf16.mxu0 0
    %2313 = vmatmul.mubr.bf16.gmra.mrb[0].mxu0 %v2215
    %v2314 = vpop.f32.mrb[0].mxu0
    %v2315 = vadd.f32 0.0, %v2314
    %v2316 = vpop.f32.mrb[0].mxu0
    %v2317 = vpop.f32.mrb[0].mxu0
    %v2318 = vadd.f32 0.0, %v2317
    %v2319 = vpop.f32.mrb[0].mxu0
    %2320 = vdwg.mxu0
    %v2321 = vadd.f32 %v2208, %v2315
    %v2322 = vadd.f32 %v2213, %v2318
    %v2323 = vadd.f32 %v2321, %v194
    %v2324 = vadd.f32 %v2322, %v194
    %v2325 = vadd.f32 %v1511, %v2323
    %vm2326 = vcmp.ge.f32.partialorder %v2325, 1.0
    %v2327 = vsel %vm2326, 1, 0
    %v2328 = vcvt.s32.f32 %v2327
    %v2329 = vsel %vm2326, 0.0, %v2325
    %v2330 = vadd.f32 %v2329, %v2324
    %vm2331 = vcmp.ge.f32.partialorder %v2330, 1.0
    %v2332 = vsel %vm2331, 1, 0
    %v2333 = vcvt.s32.f32 %v2332
    %v2334 = vsel %vm2331, 0.0, %v2330
    %v2335 = vpack.c.bf16 %v2333, %v2328
    %v2336 = vld [vmem:[#allocation11] sm:$0xf]
    %v2337 = vld [vmem:[#allocation11 + $0x4] sm:$0xf]
    %v2338 = vld [vmem:[#allocation11 + $0x8] sm:$0xf]
    %v2339 = vld [vmem:[#allocation11 + $0xc] sm:$0xf]
    %v2340 = vld [vmem:[#allocation11 + $0x10] sm:$0xf]
    %v2341 = vld [vmem:[#allocation11 + $0x14] sm:$0xf]
    %v2342 = vld [vmem:[#allocation11 + $0x18] sm:$0xf]
    %v2343 = vld [vmem:[#allocation11 + $0x1c] sm:$0xf]
    %v2344 = vld [vmem:[#allocation11 + $0x20] sm:$0xf]
    %v2345 = vld [vmem:[#allocation11 + $0x24] sm:$0xf]
    %v2346 = vld [vmem:[#allocation11 + $0x28] sm:$0xf]
    %v2347 = vld [vmem:[#allocation11 + $0x2c] sm:$0xf]
    %v2348 = vld [vmem:[#allocation11 + $0x30] sm:$0xf]
    %v2349 = vld [vmem:[#allocation11 + $0x34] sm:$0xf]
    %v2350 = vld [vmem:[#allocation11 + $0x38] sm:$0xf]
    %v2351 = vld [vmem:[#allocation11 + $0x3c] sm:$0xf]
    %v2368 = vunpack.c.l.b16 %v2336
    %v2369 = vunpack.c.l.b16 %v2337
    %v2370 = vunpack.c.l.b16 %v2338
    %v2371 = vunpack.c.l.b16 %v2339
    %v2372 = vunpack.c.l.b16 %v2340
    %v2373 = vunpack.c.l.b16 %v2341
    %v2374 = vunpack.c.l.b16 %v2342
    %v2375 = vunpack.c.l.b16 %v2343
    %v2376 = vunpack.c.l.b16 %v2344
    %v2377 = vunpack.c.l.b16 %v2345
    %v2378 = vunpack.c.l.b16 %v2346
    %v2379 = vunpack.c.l.b16 %v2347
    %v2380 = vunpack.c.l.b16 %v2348
    %v2381 = vunpack.c.l.b16 %v2349
    %v2382 = vunpack.c.l.b16 %v2350
    %v2383 = vunpack.c.l.b16 %v2351
    %v2384 = vpack.c.b16 %v2369, %v2368
    %v2385 = vpack.c.b16 %v2371, %v2370
    %v2386 = vpack.c.b16 %v2373, %v2372
    %v2387 = vpack.c.b16 %v2375, %v2374
    %v2388 = vpack.c.b16 %v2377, %v2376
    %v2389 = vpack.c.b16 %v2379, %v2378
    %v2390 = vpack.c.b16 %v2381, %v2380
    %v2391 = vpack.c.b16 %v2383, %v2382
    %2400 = vmatprep.subr.bf16.mxu0 0
    %2401 = vmatpush1.bf16.msra.mxu0 %v2384
    %2402 = vmatprep.subr.bf16.mxu0 0
    %2403 = vmatpush1.bf16.msra.mxu0 %v2385
    %2404 = vmatprep.subr.bf16.mxu0 0
    %2405 = vmatpush1.bf16.msra.mxu0 %v2386
    %2406 = vmatprep.subr.bf16.mxu0 0
    %2407 = vmatpush1.bf16.msra.mxu0 %v2387
    %2408 = vmatprep.subr.bf16.mxu0 0
    %2409 = vmatpush1.bf16.msra.mxu0 %v2388
    %2410 = vmatprep.subr.bf16.mxu0 0
    %2411 = vmatpush1.bf16.msra.mxu0 %v2389
    %2412 = vmatprep.subr.bf16.mxu0 0
    %2413 = vmatpush1.bf16.msra.mxu0 %v2390
    %2414 = vmatprep.subr.bf16.mxu0 0
    %2415 = vmatpush1.bf16.msra.mxu0 %v2391
    %2416 = vmatprep.subr.bf16.mxu0 0
    %2417 = vmatpush1.bf16.msra.mxu0 0
    %2418 = vmatprep.subr.bf16.mxu0 0
    %2419 = vmatpush1.bf16.msra.mxu0 0
    %2420 = vmatprep.subr.bf16.mxu0 0
    %2421 = vmatpush1.bf16.msra.mxu0 0
    %2422 = vmatprep.subr.bf16.mxu0 0
    %2423 = vmatpush1.bf16.msra.mxu0 0
    %2424 = vmatprep.subr.bf16.mxu0 0
    %2425 = vmatpush1.bf16.msra.mxu0 0
    %2426 = vmatprep.subr.bf16.mxu0 0
    %2427 = vmatpush1.bf16.msra.mxu0 0
    %2428 = vmatprep.subr.bf16.mxu0 0
    %2429 = vmatpush1.bf16.msra.mxu0 0
    %2430 = vmatprep.subr.bf16.mxu0 0
    %2431 = vmatpush1.bf16.msra.mxu0 0
    %2432 = vmatprep.mubr.bf16.mxu0 0
    %2433 = vmatmul.mubr.bf16.gmra.mrb[0].mxu0 %v2335
    %v2434 = vpop.f32.mrb[0].mxu0
    %v2435 = vadd.f32 %v180, %v2434
    %v2436 = vpop.f32.mrb[0].mxu0
    %v2437 = vpop.f32.mrb[0].mxu0
    %v2438 = vadd.f32 %v180, %v2437
    %v2439 = vpop.f32.mrb[0].mxu0
    %2440 = vdwg.mxu0
    %v2441 = vadd.f32 %v1627, %v2435
    %vm2442 = vcmp.ge.f32.partialorder %v2441, 1.0
    %v2443 = vsel %vm2442, 1, 0
    %v2444 = vcvt.s32.f32 %v2443
    %v2445 = vsel %vm2442, 0.0, %v2441
    %v2446 = vadd.f32 %v2445, %v2438
    %vm2447 = vcmp.ge.f32.partialorder %v2446, 1.0
    %v2448 = vsel %vm2447, 1, 0
    %v2449 = vcvt.s32.f32 %v2448
    %v2450 = vsel %vm2447, 0.0, %v2446
    %v2451 = vpack.c.bf16 %v2449, %v2444
    %v2452 = vld [vmem:[#allocation13] sm:$0xf]
    %v2453 = vld [vmem:[#allocation13 + $0x4] sm:$0xf]
    %v2454 = vld [vmem:[#allocation13 + $0x8] sm:$0xf]
    %v2455 = vld [vmem:[#allocation13 + $0xc] sm:$0xf]
    %v2456 = vld [vmem:[#allocation13 + $0x10] sm:$0xf]
    %v2457 = vld [vmem:[#allocation13 + $0x14] sm:$0xf]
    %v2458 = vld [vmem:[#allocation13 + $0x18] sm:$0xf]
    %v2459 = vld [vmem:[#allocation13 + $0x1c] sm:$0xf]
    %v2460 = vld [vmem:[#allocation13 + $0x20] sm:$0xf]
    %v2461 = vld [vmem:[#allocation13 + $0x24] sm:$0xf]
    %v2462 = vld [vmem:[#allocation13 + $0x28] sm:$0xf]
    %v2463 = vld [vmem:[#allocation13 + $0x2c] sm:$0xf]
    %v2464 = vld [vmem:[#allocation13 + $0x30] sm:$0xf]
    %v2465 = vld [vmem:[#allocation13 + $0x34] sm:$0xf]
    %v2466 = vld [vmem:[#allocation13 + $0x38] sm:$0xf]
    %v2467 = vld [vmem:[#allocation13 + $0x3c] sm:$0xf]
    %v2484 = vunpack.c.l.b16 %v2452
    %v2485 = vunpack.c.l.b16 %v2453
    %v2486 = vunpack.c.l.b16 %v2454
    %v2487 = vunpack.c.l.b16 %v2455
    %v2488 = vunpack.c.l.b16 %v2456
    %v2489 = vunpack.c.l.b16 %v2457
    %v2490 = vunpack.c.l.b16 %v2458
    %v2491 = vunpack.c.l.b16 %v2459
    %v2492 = vunpack.c.l.b16 %v2460
    %v2493 = vunpack.c.l.b16 %v2461
    %v2494 = vunpack.c.l.b16 %v2462
    %v2495 = vunpack.c.l.b16 %v2463
    %v2496 = vunpack.c.l.b16 %v2464
    %v2497 = vunpack.c.l.b16 %v2465
    %v2498 = vunpack.c.l.b16 %v2466
    %v2499 = vunpack.c.l.b16 %v2467
    %v2500 = vpack.c.b16 %v2485, %v2484
    %v2501 = vpack.c.b16 %v2487, %v2486
    %v2502 = vpack.c.b16 %v2489, %v2488
    %v2503 = vpack.c.b16 %v2491, %v2490
    %v2504 = vpack.c.b16 %v2493, %v2492
    %v2505 = vpack.c.b16 %v2495, %v2494
    %v2506 = vpack.c.b16 %v2497, %v2496
    %v2507 = vpack.c.b16 %v2499, %v2498
    %2516 = vmatprep.subr.bf16.mxu0 0
    %2517 = vmatpush1.bf16.msra.mxu0 %v2500
    %2518 = vmatprep.subr.bf16.mxu0 0
    %2519 = vmatpush1.bf16.msra.mxu0 %v2501
    %2520 = vmatprep.subr.bf16.mxu0 0
    %2521 = vmatpush1.bf16.msra.mxu0 %v2502
    %2522 = vmatprep.subr.bf16.mxu0 0
    %2523 = vmatpush1.bf16.msra.mxu0 %v2503
    %2524 = vmatprep.subr.bf16.mxu0 0
    %2525 = vmatpush1.bf16.msra.mxu0 %v2504
    %2526 = vmatprep.subr.bf16.mxu0 0
    %2527 = vmatpush1.bf16.msra.mxu0 %v2505
    %2528 = vmatprep.subr.bf16.mxu0 0
    %2529 = vmatpush1.bf16.msra.mxu0 %v2506
    %2530 = vmatprep.subr.bf16.mxu0 0
    %2531 = vmatpush1.bf16.msra.mxu0 %v2507
    %2532 = vmatprep.subr.bf16.mxu0 0
    %2533 = vmatpush1.bf16.msra.mxu0 0
    %2534 = vmatprep.subr.bf16.mxu0 0
    %2535 = vmatpush1.bf16.msra.mxu0 0
    %2536 = vmatprep.subr.bf16.mxu0 0
    %2537 = vmatpush1.bf16.msra.mxu0 0
    %2538 = vmatprep.subr.bf16.mxu0 0
    %2539 = vmatpush1.bf16.msra.mxu0 0
    %2540 = vmatprep.subr.bf16.mxu0 0
    %2541 = vmatpush1.bf16.msra.mxu0 0
    %2542 = vmatprep.subr.bf16.mxu0 0
    %2543 = vmatpush1.bf16.msra.mxu0 0
    %2544 = vmatprep.subr.bf16.mxu0 0
    %2545 = vmatpush1.bf16.msra.mxu0 0
    %2546 = vmatprep.subr.bf16.mxu0 0
    %2547 = vmatpush1.bf16.msra.mxu0 0
    %2548 = vmatprep.mubr.bf16.mxu0 0
    %2549 = vmatmul.mubr.bf16.gmra.mrb[0].mxu0 %v2451
    %v2550 = vpop.f32.mrb[0].mxu0
    %v2551 = vadd.f32 0.0, %v2550
    %v2552 = vpop.f32.mrb[0].mxu0
    %v2553 = vpop.f32.mrb[0].mxu0
    %v2554 = vadd.f32 0.0, %v2553
    %v2555 = vpop.f32.mrb[0].mxu0
    %2556 = vdwg.mxu0
    %v2557 = vadd.f32 %v2444, %v2551
    %v2558 = vadd.f32 %v2449, %v2554
    %v2559 = vadd.f32 %v2557, %v201
    %v2560 = vadd.f32 %v2558, %v201
    %v2561 = vadd.f32 %v1747, %v2559
    %vm2562 = vcmp.ge.f32.partialorder %v2561, 1.0
    %v2563 = vsel %vm2562, 1, 0
    %v2564 = vcvt.s32.f32 %v2563
    %v2565 = vsel %vm2562, 0.0, %v2561
    %v2566 = vadd.f32 %v2565, %v2560
    %vm2567 = vcmp.ge.f32.partialorder %v2566, 1.0
    %v2568 = vsel %vm2567, 1, 0
    %v2569 = vcvt.s32.f32 %v2568
    %v2570 = vsel %vm2567, 0.0, %v2566
    %v2571 = vpack.c.bf16 %v2569, %v2564
    %v2572 = vld [vmem:[#allocation14] sm:$0xf]
    %v2573 = vld [vmem:[#allocation14 + $0x4] sm:$0xf]
    %v2574 = vld [vmem:[#allocation14 + $0x8] sm:$0xf]
    %v2575 = vld [vmem:[#allocation14 + $0xc] sm:$0xf]
    %v2576 = vld [vmem:[#allocation14 + $0x10] sm:$0xf]
    %v2577 = vld [vmem:[#allocation14 + $0x14] sm:$0xf]
    %v2578 = vld [vmem:[#allocation14 + $0x18] sm:$0xf]
    %v2579 = vld [vmem:[#allocation14 + $0x1c] sm:$0xf]
    %v2580 = vld [vmem:[#allocation14 + $0x20] sm:$0xf]
    %v2581 = vld [vmem:[#allocation14 + $0x24] sm:$0xf]
    %v2582 = vld [vmem:[#allocation14 + $0x28] sm:$0xf]
    %v2583 = vld [vmem:[#allocation14 + $0x2c] sm:$0xf]
    %v2584 = vld [vmem:[#allocation14 + $0x30] sm:$0xf]
    %v2585 = vld [vmem:[#allocation14 + $0x34] sm:$0xf]
    %v2586 = vld [vmem:[#allocation14 + $0x38] sm:$0xf]
    %v2587 = vld [vmem:[#allocation14 + $0x3c] sm:$0xf]
    %v2604 = vunpack.c.l.b16 %v2572
    %v2605 = vunpack.c.l.b16 %v2573
    %v2606 = vunpack.c.l.b16 %v2574
    %v2607 = vunpack.c.l.b16 %v2575
    %v2608 = vunpack.c.l.b16 %v2576
    %v2609 = vunpack.c.l.b16 %v2577
    %v2610 = vunpack.c.l.b16 %v2578
    %v2611 = vunpack.c.l.b16 %v2579
    %v2612 = vunpack.c.l.b16 %v2580
    %v2613 = vunpack.c.l.b16 %v2581
    %v2614 = vunpack.c.l.b16 %v2582
    %v2615 = vunpack.c.l.b16 %v2583
    %v2616 = vunpack.c.l.b16 %v2584
    %v2617 = vunpack.c.l.b16 %v2585
    %v2618 = vunpack.c.l.b16 %v2586
    %v2619 = vunpack.c.l.b16 %v2587
    %v2620 = vpack.c.b16 %v2605, %v2604
    %v2621 = vpack.c.b16 %v2607, %v2606
    %v2622 = vpack.c.b16 %v2609, %v2608
    %v2623 = vpack.c.b16 %v2611, %v2610
    %v2624 = vpack.c.b16 %v2613, %v2612
    %v2625 = vpack.c.b16 %v2615, %v2614
    %v2626 = vpack.c.b16 %v2617, %v2616
    %v2627 = vpack.c.b16 %v2619, %v2618
    %2636 = vmatprep.subr.bf16.mxu0 0
    %2637 = vmatpush1.bf16.msra.mxu0 %v2620
    %2638 = vmatprep.subr.bf16.mxu0 0
    %2639 = vmatpush1.bf16.msra.mxu0 %v2621
    %2640 = vmatprep.subr.bf16.mxu0 0
    %2641 = vmatpush1.bf16.msra.mxu0 %v2622
    %2642 = vmatprep.subr.bf16.mxu0 0
    %2643 = vmatpush1.bf16.msra.mxu0 %v2623
    %2644 = vmatprep.subr.bf16.mxu0 0
    %2645 = vmatpush1.bf16.msra.mxu0 %v2624
    %2646 = vmatprep.subr.bf16.mxu0 0
    %2647 = vmatpush1.bf16.msra.mxu0 %v2625
    %2648 = vmatprep.subr.bf16.mxu0 0
    %2649 = vmatpush1.bf16.msra.mxu0 %v2626
    %2650 = vmatprep.subr.bf16.mxu0 0
    %2651 = vmatpush1.bf16.msra.mxu0 %v2627
    %2652 = vmatprep.subr.bf16.mxu0 0
    %2653 = vmatpush1.bf16.msra.mxu0 0
    %2654 = vmatprep.subr.bf16.mxu0 0
    %2655 = vmatpush1.bf16.msra.mxu0 0
    %2656 = vmatprep.subr.bf16.mxu0 0
    %2657 = vmatpush1.bf16.msra.mxu0 0
    %2658 = vmatprep.subr.bf16.mxu0 0
    %2659 = vmatpush1.bf16.msra.mxu0 0
    %2660 = vmatprep.subr.bf16.mxu0 0
    %2661 = vmatpush1.bf16.msra.mxu0 0
    %2662 = vmatprep.subr.bf16.mxu0 0
    %2663 = vmatpush1.bf16.msra.mxu0 0
    %2664 = vmatprep.subr.bf16.mxu0 0
    %2665 = vmatpush1.bf16.msra.mxu0 0
    %2666 = vmatprep.subr.bf16.mxu0 0
    %2667 = vmatpush1.bf16.msra.mxu0 0
    %2668 = vmatprep.mubr.bf16.mxu0 0
    %2669 = vmatmul.mubr.bf16.gmra.mrb[0].mxu0 %v2571
    %v2670 = vpop.f32.mrb[0].mxu0
    %v2671 = vadd.f32 %v208, %v2670
    %v2672 = vpop.f32.mrb[0].mxu0
    %v2673 = vpop.f32.mrb[0].mxu0
    %v2674 = vadd.f32 %v208, %v2673
    %v2675 = vpop.f32.mrb[0].mxu0
    %2676 = vdwg.mxu0
    %2677 = vst [vmem:[#allocation16 + $0x20] sm:$0xff] %v2671
    %2678 = vst [vmem:[#allocation16 + $0x28] sm:$0xff] %v2674
    %v2679 = vld [vmem:[#allocation2 + $0x18] sm:$0xf]
    %v2680 = vld [vmem:[#allocation2 + $0x1c] sm:$0xf]
    %v2681 = vld [vmem:[#allocation5] sm:$0xf]
    %v2682 = vld [vmem:[#allocation5 + $0x4] sm:$0xf]
    %v2683 = vld [vmem:[#allocation5 + $0x8] sm:$0xf]
    %v2684 = vld [vmem:[#allocation5 + $0xc] sm:$0xf]
    %v2685 = vld [vmem:[#allocation5 + $0x10] sm:$0xf]
    %v2686 = vld [vmem:[#allocation5 + $0x14] sm:$0xf]
    %v2687 = vld [vmem:[#allocation5 + $0x18] sm:$0xf]
    %v2688 = vld [vmem:[#allocation5 + $0x1c] sm:$0xf]
    %v2689 = vld [vmem:[#allocation5 + $0x20] sm:$0xf]
    %v2690 = vld [vmem:[#allocation5 + $0x24] sm:$0xf]
    %v2691 = vld [vmem:[#allocation5 + $0x28] sm:$0xf]
    %v2692 = vld [vmem:[#allocation5 + $0x2c] sm:$0xf]
    %v2693 = vld [vmem:[#allocation5 + $0x30] sm:$0xf]
    %v2694 = vld [vmem:[#allocation5 + $0x34] sm:$0xf]
    %v2695 = vld [vmem:[#allocation5 + $0x38] sm:$0xf]
    %v2696 = vld [vmem:[#allocation5 + $0x3c] sm:$0xf]
    %v2699 = vunpack.c.l.b16 %v2679
    %v2700 = vunpack.c.l.b16 %v2680
    %v2701 = vpack.c.b16 %v2700, %v2699
    %v2719 = vunpack.c.l.b16 %v2681
    %v2720 = vunpack.c.l.b16 %v2682
    %v2721 = vunpack.c.l.b16 %v2683
    %v2722 = vunpack.c.l.b16 %v2684
    %v2723 = vunpack.c.l.b16 %v2685
    %v2724 = vunpack.c.l.b16 %v2686
    %v2725 = vunpack.c.l.b16 %v2687
    %v2726 = vunpack.c.l.b16 %v2688
    %v2727 = vunpack.c.l.b16 %v2689
    %v2728 = vunpack.c.l.b16 %v2690
    %v2729 = vunpack.c.l.b16 %v2691
    %v2730 = vunpack.c.l.b16 %v2692
    %v2731 = vunpack.c.l.b16 %v2693
    %v2732 = vunpack.c.l.b16 %v2694
    %v2733 = vunpack.c.l.b16 %v2695
    %v2734 = vunpack.c.l.b16 %v2696
    %v2735 = vpack.c.b16 %v2720, %v2719
    %v2736 = vpack.c.b16 %v2722, %v2721
    %v2737 = vpack.c.b16 %v2724, %v2723
    %v2738 = vpack.c.b16 %v2726, %v2725
    %v2739 = vpack.c.b16 %v2728, %v2727
    %v2740 = vpack.c.b16 %v2730, %v2729
    %v2741 = vpack.c.b16 %v2732, %v2731
    %v2742 = vpack.c.b16 %v2734, %v2733
    %2751 = vmatprep.subr.bf16.mxu0 0
    %2752 = vmatpush1.bf16.msra.mxu0 %v2735
    %2753 = vmatprep.subr.bf16.mxu0 0
    %2754 = vmatpush1.bf16.msra.mxu0 %v2736
    %2755 = vmatprep.subr.bf16.mxu0 0
    %2756 = vmatpush1.bf16.msra.mxu0 %v2737
    %2757 = vmatprep.subr.bf16.mxu0 0
    %2758 = vmatpush1.bf16.msra.mxu0 %v2738
    %2759 = vmatprep.subr.bf16.mxu0 0
    %2760 = vmatpush1.bf16.msra.mxu0 %v2739
    %2761 = vmatprep.subr.bf16.mxu0 0
    %2762 = vmatpush1.bf16.msra.mxu0 %v2740
    %2763 = vmatprep.subr.bf16.mxu0 0
    %2764 = vmatpush1.bf16.msra.mxu0 %v2741
    %2765 = vmatprep.subr.bf16.mxu0 0
    %2766 = vmatpush1.bf16.msra.mxu0 %v2742
    %2767 = vmatprep.subr.bf16.mxu0 0
    %2768 = vmatpush1.bf16.msra.mxu0 0
    %2769 = vmatprep.subr.bf16.mxu0 0
    %2770 = vmatpush1.bf16.msra.mxu0 0
    %2771 = vmatprep.subr.bf16.mxu0 0
    %2772 = vmatpush1.bf16.msra.mxu0 0
    %2773 = vmatprep.subr.bf16.mxu0 0
    %2774 = vmatpush1.bf16.msra.mxu0 0
    %2775 = vmatprep.subr.bf16.mxu0 0
    %2776 = vmatpush1.bf16.msra.mxu0 0
    %2777 = vmatprep.subr.bf16.mxu0 0
    %2778 = vmatpush1.bf16.msra.mxu0 0
    %2779 = vmatprep.subr.bf16.mxu0 0
    %2780 = vmatpush1.bf16.msra.mxu0 0
    %2781 = vmatprep.subr.bf16.mxu0 0
    %2782 = vmatpush1.bf16.msra.mxu0 0
    %2783 = vmatprep.mubr.bf16.mxu0 0
    %2784 = vmatmul.mubr.bf16.gmra.mrb[0].mxu0 %v2701
    %v2785 = vpop.f32.mrb[0].mxu0
    %v2786 = vadd.f32 %v166, %v2785
    %v2787 = vpop.f32.mrb[0].mxu0
    %v2788 = vpop.f32.mrb[0].mxu0
    %v2789 = vadd.f32 %v166, %v2788
    %v2790 = vpop.f32.mrb[0].mxu0
    %2791 = vdwg.mxu0
    %v2792 = vadd.f32 %v1978, %v2786
    %vm2793 = vcmp.ge.f32.partialorder %v2792, 1.0
    %v2794 = vsel %vm2793, 1, 0
    %v2795 = vcvt.s32.f32 %v2794
    %v2796 = vsel %vm2793, 0.0, %v2792
    %v2797 = vadd.f32 %v2796, %v2789
    %vm2798 = vcmp.ge.f32.partialorder %v2797, 1.0
    %v2799 = vsel %vm2798, 1, 0
    %v2800 = vcvt.s32.f32 %v2799
    %v2801 = vpack.c.bf16 %v2800, %v2795
    %v2802 = vld [vmem:[#allocation7] sm:$0xf]
    %v2803 = vld [vmem:[#allocation7 + $0x4] sm:$0xf]
    %v2804 = vld [vmem:[#allocation7 + $0x8] sm:$0xf]
    %v2805 = vld [vmem:[#allocation7 + $0xc] sm:$0xf]
    %v2806 = vld [vmem:[#allocation7 + $0x10] sm:$0xf]
    %v2807 = vld [vmem:[#allocation7 + $0x14] sm:$0xf]
    %v2808 = vld [vmem:[#allocation7 + $0x18] sm:$0xf]
    %v2809 = vld [vmem:[#allocation7 + $0x1c] sm:$0xf]
    %v2810 = vld [vmem:[#allocation7 + $0x20] sm:$0xf]
    %v2811 = vld [vmem:[#allocation7 + $0x24] sm:$0xf]
    %v2812 = vld [vmem:[#allocation7 + $0x28] sm:$0xf]
    %v2813 = vld [vmem:[#allocation7 + $0x2c] sm:$0xf]
    %v2814 = vld [vmem:[#allocation7 + $0x30] sm:$0xf]
    %v2815 = vld [vmem:[#allocation7 + $0x34] sm:$0xf]
    %v2816 = vld [vmem:[#allocation7 + $0x38] sm:$0xf]
    %v2817 = vld [vmem:[#allocation7 + $0x3c] sm:$0xf]
    %v2834 = vunpack.c.l.b16 %v2802
    %v2835 = vunpack.c.l.b16 %v2803
    %v2836 = vunpack.c.l.b16 %v2804
    %v2837 = vunpack.c.l.b16 %v2805
    %v2838 = vunpack.c.l.b16 %v2806
    %v2839 = vunpack.c.l.b16 %v2807
    %v2840 = vunpack.c.l.b16 %v2808
    %v2841 = vunpack.c.l.b16 %v2809
    %v2842 = vunpack.c.l.b16 %v2810
    %v2843 = vunpack.c.l.b16 %v2811
    %v2844 = vunpack.c.l.b16 %v2812
    %v2845 = vunpack.c.l.b16 %v2813
    %v2846 = vunpack.c.l.b16 %v2814
    %v2847 = vunpack.c.l.b16 %v2815
    %v2848 = vunpack.c.l.b16 %v2816
    %v2849 = vunpack.c.l.b16 %v2817
    %v2850 = vpack.c.b16 %v2835, %v2834
    %v2851 = vpack.c.b16 %v2837, %v2836
    %v2852 = vpack.c.b16 %v2839, %v2838
    %v2853 = vpack.c.b16 %v2841, %v2840
    %v2854 = vpack.c.b16 %v2843, %v2842
    %v2855 = vpack.c.b16 %v2845, %v2844
    %v2856 = vpack.c.b16 %v2847, %v2846
    %v2857 = vpack.c.b16 %v2849, %v2848
    %2866 = vmatprep.subr.bf16.mxu0 0
    %2867 = vmatpush1.bf16.msra.mxu0 %v2850
    %2868 = vmatprep.subr.bf16.mxu0 0
    %2869 = vmatpush1.bf16.msra.mxu0 %v2851
    %2870 = vmatprep.subr.bf16.mxu0 0
    %2871 = vmatpush1.bf16.msra.mxu0 %v2852
    %2872 = vmatprep.subr.bf16.mxu0 0
    %2873 = vmatpush1.bf16.msra.mxu0 %v2853
    %2874 = vmatprep.subr.bf16.mxu0 0
    %2875 = vmatpush1.bf16.msra.mxu0 %v2854
    %2876 = vmatprep.subr.bf16.mxu0 0
    %2877 = vmatpush1.bf16.msra.mxu0 %v2855
    %2878 = vmatprep.subr.bf16.mxu0 0
    %2879 = vmatpush1.bf16.msra.mxu0 %v2856
    %2880 = vmatprep.subr.bf16.mxu0 0
    %2881 = vmatpush1.bf16.msra.mxu0 %v2857
    %2882 = vmatprep.subr.bf16.mxu0 0
    %2883 = vmatpush1.bf16.msra.mxu0 0
    %2884 = vmatprep.subr.bf16.mxu0 0
    %2885 = vmatpush1.bf16.msra.mxu0 0
    %2886 = vmatprep.subr.bf16.mxu0 0
    %2887 = vmatpush1.bf16.msra.mxu0 0
    %2888 = vmatprep.subr.bf16.mxu0 0
    %2889 = vmatpush1.bf16.msra.mxu0 0
    %2890 = vmatprep.subr.bf16.mxu0 0
    %2891 = vmatpush1.bf16.msra.mxu0 0
    %2892 = vmatprep.subr.bf16.mxu0 0
    %2893 = vmatpush1.bf16.msra.mxu0 0
    %2894 = vmatprep.subr.bf16.mxu0 0
    %2895 = vmatpush1.bf16.msra.mxu0 0
    %2896 = vmatprep.subr.bf16.mxu0 0
    %2897 = vmatpush1.bf16.msra.mxu0 0
    %2898 = vmatprep.mubr.bf16.mxu0 0
    %2899 = vmatmul.mubr.bf16.gmra.mrb[0].mxu0 %v2801
    %v2900 = vpop.f32.mrb[0].mxu0
    %v2901 = vadd.f32 0.0, %v2900
    %v2902 = vpop.f32.mrb[0].mxu0
    %v2903 = vpop.f32.mrb[0].mxu0
    %v2904 = vadd.f32 0.0, %v2903
    %v2905 = vpop.f32.mrb[0].mxu0
    %2906 = vdwg.mxu0
    %v2907 = vadd.f32 %v2795, %v2901
    %v2908 = vadd.f32 %v2800, %v2904
    %v2909 = vadd.f32 %v2907, %v187
    %v2910 = vadd.f32 %v2908, %v187
    %v2911 = vadd.f32 %v2098, %v2909
    %vm2912 = vcmp.ge.f32.partialorder %v2911, 1.0
    %v2913 = vsel %vm2912, 1, 0
    %v2914 = vcvt.s32.f32 %v2913
    %v2915 = vsel %vm2912, 0.0, %v2911
    %v2916 = vadd.f32 %v2915, %v2910
    %vm2917 = vcmp.ge.f32.partialorder %v2916, 1.0
    %v2918 = vsel %vm2917, 1, 0
    %v2919 = vcvt.s32.f32 %v2918
    %v2920 = vpack.c.bf16 %v2919, %v2914
    %v2921 = vld [vmem:[#allocation8] sm:$0xf]
    %v2922 = vld [vmem:[#allocation8 + $0x4] sm:$0xf]
    %v2923 = vld [vmem:[#allocation8 + $0x8] sm:$0xf]
    %v2924 = vld [vmem:[#allocation8 + $0xc] sm:$0xf]
    %v2925 = vld [vmem:[#allocation8 + $0x10] sm:$0xf]
    %v2926 = vld [vmem:[#allocation8 + $0x14] sm:$0xf]
    %v2927 = vld [vmem:[#allocation8 + $0x18] sm:$0xf]
    %v2928 = vld [vmem:[#allocation8 + $0x1c] sm:$0xf]
    %v2929 = vld [vmem:[#allocation8 + $0x20] sm:$0xf]
    %v2930 = vld [vmem:[#allocation8 + $0x24] sm:$0xf]
    %v2931 = vld [vmem:[#allocation8 + $0x28] sm:$0xf]
    %v2932 = vld [vmem:[#allocation8 + $0x2c] sm:$0xf]
    %v2933 = vld [vmem:[#allocation8 + $0x30] sm:$0xf]
    %v2934 = vld [vmem:[#allocation8 + $0x34] sm:$0xf]
    %v2935 = vld [vmem:[#allocation8 + $0x38] sm:$0xf]
    %v2936 = vld [vmem:[#allocation8 + $0x3c] sm:$0xf]
    %v2953 = vunpack.c.l.b16 %v2921
    %v2954 = vunpack.c.l.b16 %v2922
    %v2955 = vunpack.c.l.b16 %v2923
    %v2956 = vunpack.c.l.b16 %v2924
    %v2957 = vunpack.c.l.b16 %v2925
    %v2958 = vunpack.c.l.b16 %v2926
    %v2959 = vunpack.c.l.b16 %v2927
    %v2960 = vunpack.c.l.b16 %v2928
    %v2961 = vunpack.c.l.b16 %v2929
    %v2962 = vunpack.c.l.b16 %v2930
    %v2963 = vunpack.c.l.b16 %v2931
    %v2964 = vunpack.c.l.b16 %v2932
    %v2965 = vunpack.c.l.b16 %v2933
    %v2966 = vunpack.c.l.b16 %v2934
    %v2967 = vunpack.c.l.b16 %v2935
    %v2968 = vunpack.c.l.b16 %v2936
    %v2969 = vpack.c.b16 %v2954, %v2953
    %v2970 = vpack.c.b16 %v2956, %v2955
    %v2971 = vpack.c.b16 %v2958, %v2957
    %v2972 = vpack.c.b16 %v2960, %v2959
    %v2973 = vpack.c.b16 %v2962, %v2961
    %v2974 = vpack.c.b16 %v2964, %v2963
    %v2975 = vpack.c.b16 %v2966, %v2965
    %v2976 = vpack.c.b16 %v2968, %v2967
    %2985 = vmatprep.subr.bf16.mxu0 0
    %2986 = vmatpush1.bf16.msra.mxu0 %v2969
    %2987 = vmatprep.subr.bf16.mxu0 0
    %2988 = vmatpush1.bf16.msra.mxu0 %v2970
    %2989 = vmatprep.subr.bf16.mxu0 0
    %2990 = vmatpush1.bf16.msra.mxu0 %v2971
    %2991 = vmatprep.subr.bf16.mxu0 0
    %2992 = vmatpush1.bf16.msra.mxu0 %v2972
    %2993 = vmatprep.subr.bf16.mxu0 0
    %2994 = vmatpush1.bf16.msra.mxu0 %v2973
    %2995 = vmatprep.subr.bf16.mxu0 0
    %2996 = vmatpush1.bf16.msra.mxu0 %v2974
    %2997 = vmatprep.subr.bf16.mxu0 0
    %2998 = vmatpush1.bf16.msra.mxu0 %v2975
    %2999 = vmatprep.subr.bf16.mxu0 0
    %3000 = vmatpush1.bf16.msra.mxu0 %v2976
    %3001 = vmatprep.subr.bf16.mxu0 0
    %3002 = vmatpush1.bf16.msra.mxu0 0
    %3003 = vmatprep.subr.bf16.mxu0 0
    %3004 = vmatpush1.bf16.msra.mxu0 0
    %3005 = vmatprep.subr.bf16.mxu0 0
    %3006 = vmatpush1.bf16.msra.mxu0 0
    %3007 = vmatprep.subr.bf16.mxu0 0
    %3008 = vmatpush1.bf16.msra.mxu0 0
    %3009 = vmatprep.subr.bf16.mxu0 0
    %3010 = vmatpush1.bf16.msra.mxu0 0
    %3011 = vmatprep.subr.bf16.mxu0 0
    %3012 = vmatpush1.bf16.msra.mxu0 0
    %3013 = vmatprep.subr.bf16.mxu0 0
    %3014 = vmatpush1.bf16.msra.mxu0 0
    %3015 = vmatprep.subr.bf16.mxu0 0
    %3016 = vmatpush1.bf16.msra.mxu0 0
    %3017 = vmatprep.mubr.bf16.mxu0 0
    %3018 = vmatmul.mubr.bf16.gmra.mrb[0].mxu0 %v2920
    %v3019 = vpop.f32.mrb[0].mxu0
    %v3020 = vadd.f32 %v173, %v3019
    %v3021 = vpop.f32.mrb[0].mxu0
    %v3022 = vpop.f32.mrb[0].mxu0
    %v3023 = vadd.f32 %v173, %v3022
    %v3024 = vpop.f32.mrb[0].mxu0
    %3025 = vdwg.mxu0
    %v3026 = vadd.f32 %v2214, %v3020
    %vm3027 = vcmp.ge.f32.partialorder %v3026, 1.0
    %v3028 = vsel %vm3027, 1, 0
    %v3029 = vcvt.s32.f32 %v3028
    %v3030 = vsel %vm3027, 0.0, %v3026
    %v3031 = vadd.f32 %v3030, %v3023
    %vm3032 = vcmp.ge.f32.partialorder %v3031, 1.0
    %v3033 = vsel %vm3032, 1, 0
    %v3034 = vcvt.s32.f32 %v3033
    %v3035 = vpack.c.bf16 %v3034, %v3029
    %v3036 = vld [vmem:[#allocation10] sm:$0xf]
    %v3037 = vld [vmem:[#allocation10 + $0x4] sm:$0xf]
    %v3038 = vld [vmem:[#allocation10 + $0x8] sm:$0xf]
    %v3039 = vld [vmem:[#allocation10 + $0xc] sm:$0xf]
    %v3040 = vld [vmem:[#allocation10 + $0x10] sm:$0xf]
    %v3041 = vld [vmem:[#allocation10 + $0x14] sm:$0xf]
    %v3042 = vld [vmem:[#allocation10 + $0x18] sm:$0xf]
    %v3043 = vld [vmem:[#allocation10 + $0x1c] sm:$0xf]
    %v3044 = vld [vmem:[#allocation10 + $0x20] sm:$0xf]
    %v3045 = vld [vmem:[#allocation10 + $0x24] sm:$0xf]
    %v3046 = vld [vmem:[#allocation10 + $0x28] sm:$0xf]
    %v3047 = vld [vmem:[#allocation10 + $0x2c] sm:$0xf]
    %v3048 = vld [vmem:[#allocation10 + $0x30] sm:$0xf]
    %v3049 = vld [vmem:[#allocation10 + $0x34] sm:$0xf]
    %v3050 = vld [vmem:[#allocation10 + $0x38] sm:$0xf]
    %v3051 = vld [vmem:[#allocation10 + $0x3c] sm:$0xf]
    %v3068 = vunpack.c.l.b16 %v3036
    %v3069 = vunpack.c.l.b16 %v3037
    %v3070 = vunpack.c.l.b16 %v3038
    %v3071 = vunpack.c.l.b16 %v3039
    %v3072 = vunpack.c.l.b16 %v3040
    %v3073 = vunpack.c.l.b16 %v3041
    %v3074 = vunpack.c.l.b16 %v3042
    %v3075 = vunpack.c.l.b16 %v3043
    %v3076 = vunpack.c.l.b16 %v3044
    %v3077 = vunpack.c.l.b16 %v3045
    %v3078 = vunpack.c.l.b16 %v3046
    %v3079 = vunpack.c.l.b16 %v3047
    %v3080 = vunpack.c.l.b16 %v3048
    %v3081 = vunpack.c.l.b16 %v3049
    %v3082 = vunpack.c.l.b16 %v3050
    %v3083 = vunpack.c.l.b16 %v3051
    %v3084 = vpack.c.b16 %v3069, %v3068
    %v3085 = vpack.c.b16 %v3071, %v3070
    %v3086 = vpack.c.b16 %v3073, %v3072
    %v3087 = vpack.c.b16 %v3075, %v3074
    %v3088 = vpack.c.b16 %v3077, %v3076
    %v3089 = vpack.c.b16 %v3079, %v3078
    %v3090 = vpack.c.b16 %v3081, %v3080
    %v3091 = vpack.c.b16 %v3083, %v3082
    %3100 = vmatprep.subr.bf16.mxu0 0
    %3101 = vmatpush1.bf16.msra.mxu0 %v3084
    %3102 = vmatprep.subr.bf16.mxu0 0
    %3103 = vmatpush1.bf16.msra.mxu0 %v3085
    %3104 = vmatprep.subr.bf16.mxu0 0
    %3105 = vmatpush1.bf16.msra.mxu0 %v3086
    %3106 = vmatprep.subr.bf16.mxu0 0
    %3107 = vmatpush1.bf16.msra.mxu0 %v3087
    %3108 = vmatprep.subr.bf16.mxu0 0
    %3109 = vmatpush1.bf16.msra.mxu0 %v3088
    %3110 = vmatprep.subr.bf16.mxu0 0
    %3111 = vmatpush1.bf16.msra.mxu0 %v3089
    %3112 = vmatprep.subr.bf16.mxu0 0
    %3113 = vmatpush1.bf16.msra.mxu0 %v3090
    %3114 = vmatprep.subr.bf16.mxu0 0
    %3115 = vmatpush1.bf16.msra.mxu0 %v3091
    %3116 = vmatprep.subr.bf16.mxu0 0
    %3117 = vmatpush1.bf16.msra.mxu0 0
    %3118 = vmatprep.subr.bf16.mxu0 0
    %3119 = vmatpush1.bf16.msra.mxu0 0
    %3120 = vmatprep.subr.bf16.mxu0 0
    %3121 = vmatpush1.bf16.msra.mxu0 0
    %3122 = vmatprep.subr.bf16.mxu0 0
    %3123 = vmatpush1.bf16.msra.mxu0 0
    %3124 = vmatprep.subr.bf16.mxu0 0
    %3125 = vmatpush1.bf16.msra.mxu0 0
    %3126 = vmatprep.subr.bf16.mxu0 0
    %3127 = vmatpush1.bf16.msra.mxu0 0
    %3128 = vmatprep.subr.bf16.mxu0 0
    %3129 = vmatpush1.bf16.msra.mxu0 0
    %3130 = vmatprep.subr.bf16.mxu0 0
    %3131 = vmatpush1.bf16.msra.mxu0 0
    %3132 = vmatprep.mubr.bf16.mxu0 0
    %3133 = vmatmul.mubr.bf16.gmra.mrb[0].mxu0 %v3035
    %v3134 = vpop.f32.mrb[0].mxu0
    %v3135 = vadd.f32 0.0, %v3134
    %v3136 = vpop.f32.mrb[0].mxu0
    %v3137 = vpop.f32.mrb[0].mxu0
    %v3138 = vadd.f32 0.0, %v3137
    %v3139 = vpop.f32.mrb[0].mxu0
    %3140 = vdwg.mxu0
    %v3141 = vadd.f32 %v3029, %v3135
    %v3142 = vadd.f32 %v3034, %v3138
    %v3143 = vadd.f32 %v3141, %v194
    %v3144 = vadd.f32 %v3142, %v194
    %v3145 = vadd.f32 %v2334, %v3143
    %vm3146 = vcmp.ge.f32.partialorder %v3145, 1.0
    %v3147 = vsel %vm3146, 1, 0
    %v3148 = vcvt.s32.f32 %v3147
    %v3149 = vsel %vm3146, 0.0, %v3145
    %v3150 = vadd.f32 %v3149, %v3144
    %vm3151 = vcmp.ge.f32.partialorder %v3150, 1.0
    %v3152 = vsel %vm3151, 1, 0
    %v3153 = vcvt.s32.f32 %v3152
    %v3154 = vpack.c.bf16 %v3153, %v3148
    %v3155 = vld [vmem:[#allocation11] sm:$0xf]
    %v3156 = vld [vmem:[#allocation11 + $0x4] sm:$0xf]
    %v3157 = vld [vmem:[#allocation11 + $0x8] sm:$0xf]
    %v3158 = vld [vmem:[#allocation11 + $0xc] sm:$0xf]
    %v3159 = vld [vmem:[#allocation11 + $0x10] sm:$0xf]
    %v3160 = vld [vmem:[#allocation11 + $0x14] sm:$0xf]
    %v3161 = vld [vmem:[#allocation11 + $0x18] sm:$0xf]
    %v3162 = vld [vmem:[#allocation11 + $0x1c] sm:$0xf]
    %v3163 = vld [vmem:[#allocation11 + $0x20] sm:$0xf]
    %v3164 = vld [vmem:[#allocation11 + $0x24] sm:$0xf]
    %v3165 = vld [vmem:[#allocation11 + $0x28] sm:$0xf]
    %v3166 = vld [vmem:[#allocation11 + $0x2c] sm:$0xf]
    %v3167 = vld [vmem:[#allocation11 + $0x30] sm:$0xf]
    %v3168 = vld [vmem:[#allocation11 + $0x34] sm:$0xf]
    %v3169 = vld [vmem:[#allocation11 + $0x38] sm:$0xf]
    %v3170 = vld [vmem:[#allocation11 + $0x3c] sm:$0xf]
    %v3187 = vunpack.c.l.b16 %v3155
    %v3188 = vunpack.c.l.b16 %v3156
    %v3189 = vunpack.c.l.b16 %v3157
    %v3190 = vunpack.c.l.b16 %v3158
    %v3191 = vunpack.c.l.b16 %v3159
    %v3192 = vunpack.c.l.b16 %v3160
    %v3193 = vunpack.c.l.b16 %v3161
    %v3194 = vunpack.c.l.b16 %v3162
    %v3195 = vunpack.c.l.b16 %v3163
    %v3196 = vunpack.c.l.b16 %v3164
    %v3197 = vunpack.c.l.b16 %v3165
    %v3198 = vunpack.c.l.b16 %v3166
    %v3199 = vunpack.c.l.b16 %v3167
    %v3200 = vunpack.c.l.b16 %v3168
    %v3201 = vunpack.c.l.b16 %v3169
    %v3202 = vunpack.c.l.b16 %v3170
    %v3203 = vpack.c.b16 %v3188, %v3187
    %v3204 = vpack.c.b16 %v3190, %v3189
    %v3205 = vpack.c.b16 %v3192, %v3191
    %v3206 = vpack.c.b16 %v3194, %v3193
    %v3207 = vpack.c.b16 %v3196, %v3195
    %v3208 = vpack.c.b16 %v3198, %v3197
    %v3209 = vpack.c.b16 %v3200, %v3199
    %v3210 = vpack.c.b16 %v3202, %v3201
    %3219 = vmatprep.subr.bf16.mxu0 0
    %3220 = vmatpush1.bf16.msra.mxu0 %v3203
    %3221 = vmatprep.subr.bf16.mxu0 0
    %3222 = vmatpush1.bf16.msra.mxu0 %v3204
    %3223 = vmatprep.subr.bf16.mxu0 0
    %3224 = vmatpush1.bf16.msra.mxu0 %v3205
    %3225 = vmatprep.subr.bf16.mxu0 0
    %3226 = vmatpush1.bf16.msra.mxu0 %v3206
    %3227 = vmatprep.subr.bf16.mxu0 0
    %3228 = vmatpush1.bf16.msra.mxu0 %v3207
    %3229 = vmatprep.subr.bf16.mxu0 0
    %3230 = vmatpush1.bf16.msra.mxu0 %v3208
    %3231 = vmatprep.subr.bf16.mxu0 0
    %3232 = vmatpush1.bf16.msra.mxu0 %v3209
    %3233 = vmatprep.subr.bf16.mxu0 0
    %3234 = vmatpush1.bf16.msra.mxu0 %v3210
    %3235 = vmatprep.subr.bf16.mxu0 0
    %3236 = vmatpush1.bf16.msra.mxu0 0
    %3237 = vmatprep.subr.bf16.mxu0 0
    %3238 = vmatpush1.bf16.msra.mxu0 0
    %3239 = vmatprep.subr.bf16.mxu0 0
    %3240 = vmatpush1.bf16.msra.mxu0 0
    %3241 = vmatprep.subr.bf16.mxu0 0
    %3242 = vmatpush1.bf16.msra.mxu0 0
    %3243 = vmatprep.subr.bf16.mxu0 0
    %3244 = vmatpush1.bf16.msra.mxu0 0
    %3245 = vmatprep.subr.bf16.mxu0 0
    %3246 = vmatpush1.bf16.msra.mxu0 0
    %3247 = vmatprep.subr.bf16.mxu0 0
    %3248 = vmatpush1.bf16.msra.mxu0 0
    %3249 = vmatprep.subr.bf16.mxu0 0
    %3250 = vmatpush1.bf16.msra.mxu0 0
    %3251 = vmatprep.mubr.bf16.mxu0 0
    %3252 = vmatmul.mubr.bf16.gmra.mrb[0].mxu0 %v3154
    %v3253 = vpop.f32.mrb[0].mxu0
    %v3254 = vadd.f32 %v180, %v3253
    %v3255 = vpop.f32.mrb[0].mxu0
    %v3256 = vpop.f32.mrb[0].mxu0
    %v3257 = vadd.f32 %v180, %v3256
    %v3258 = vpop.f32.mrb[0].mxu0
    %3259 = vdwg.mxu0
    %v3260 = vadd.f32 %v2450, %v3254
    %vm3261 = vcmp.ge.f32.partialorder %v3260, 1.0
    %v3262 = vsel %vm3261, 1, 0
    %v3263 = vcvt.s32.f32 %v3262
    %v3264 = vsel %vm3261, 0.0, %v3260
    %v3265 = vadd.f32 %v3264, %v3257
    %vm3266 = vcmp.ge.f32.partialorder %v3265, 1.0
    %v3267 = vsel %vm3266, 1, 0
    %v3268 = vcvt.s32.f32 %v3267
    %v3269 = vpack.c.bf16 %v3268, %v3263
    %v3270 = vld [vmem:[#allocation13] sm:$0xf]
    %v3271 = vld [vmem:[#allocation13 + $0x4] sm:$0xf]
    %v3272 = vld [vmem:[#allocation13 + $0x8] sm:$0xf]
    %v3273 = vld [vmem:[#allocation13 + $0xc] sm:$0xf]
    %v3274 = vld [vmem:[#allocation13 + $0x10] sm:$0xf]
    %v3275 = vld [vmem:[#allocation13 + $0x14] sm:$0xf]
    %v3276 = vld [vmem:[#allocation13 + $0x18] sm:$0xf]
    %v3277 = vld [vmem:[#allocation13 + $0x1c] sm:$0xf]
    %v3278 = vld [vmem:[#allocation13 + $0x20] sm:$0xf]
    %v3279 = vld [vmem:[#allocation13 + $0x24] sm:$0xf]
    %v3280 = vld [vmem:[#allocation13 + $0x28] sm:$0xf]
    %v3281 = vld [vmem:[#allocation13 + $0x2c] sm:$0xf]
    %v3282 = vld [vmem:[#allocation13 + $0x30] sm:$0xf]
    %v3283 = vld [vmem:[#allocation13 + $0x34] sm:$0xf]
    %v3284 = vld [vmem:[#allocation13 + $0x38] sm:$0xf]
    %v3285 = vld [vmem:[#allocation13 + $0x3c] sm:$0xf]
    %v3302 = vunpack.c.l.b16 %v3270
    %v3303 = vunpack.c.l.b16 %v3271
    %v3304 = vunpack.c.l.b16 %v3272
    %v3305 = vunpack.c.l.b16 %v3273
    %v3306 = vunpack.c.l.b16 %v3274
    %v3307 = vunpack.c.l.b16 %v3275
    %v3308 = vunpack.c.l.b16 %v3276
    %v3309 = vunpack.c.l.b16 %v3277
    %v3310 = vunpack.c.l.b16 %v3278
    %v3311 = vunpack.c.l.b16 %v3279
    %v3312 = vunpack.c.l.b16 %v3280
    %v3313 = vunpack.c.l.b16 %v3281
    %v3314 = vunpack.c.l.b16 %v3282
    %v3315 = vunpack.c.l.b16 %v3283
    %v3316 = vunpack.c.l.b16 %v3284
    %v3317 = vunpack.c.l.b16 %v3285
    %v3318 = vpack.c.b16 %v3303, %v3302
    %v3319 = vpack.c.b16 %v3305, %v3304
    %v3320 = vpack.c.b16 %v3307, %v3306
    %v3321 = vpack.c.b16 %v3309, %v3308
    %v3322 = vpack.c.b16 %v3311, %v3310
    %v3323 = vpack.c.b16 %v3313, %v3312
    %v3324 = vpack.c.b16 %v3315, %v3314
    %v3325 = vpack.c.b16 %v3317, %v3316
    %3334 = vmatprep.subr.bf16.mxu0 0
    %3335 = vmatpush1.bf16.msra.mxu0 %v3318
    %3336 = vmatprep.subr.bf16.mxu0 0
    %3337 = vmatpush1.bf16.msra.mxu0 %v3319
    %3338 = vmatprep.subr.bf16.mxu0 0
    %3339 = vmatpush1.bf16.msra.mxu0 %v3320
    %3340 = vmatprep.subr.bf16.mxu0 0
    %3341 = vmatpush1.bf16.msra.mxu0 %v3321
    %3342 = vmatprep.subr.bf16.mxu0 0
    %3343 = vmatpush1.bf16.msra.mxu0 %v3322
    %3344 = vmatprep.subr.bf16.mxu0 0
    %3345 = vmatpush1.bf16.msra.mxu0 %v3323
    %3346 = vmatprep.subr.bf16.mxu0 0
    %3347 = vmatpush1.bf16.msra.mxu0 %v3324
    %3348 = vmatprep.subr.bf16.mxu0 0
    %3349 = vmatpush1.bf16.msra.mxu0 %v3325
    %3350 = vmatprep.subr.bf16.mxu0 0
    %3351 = vmatpush1.bf16.msra.mxu0 0
    %3352 = vmatprep.subr.bf16.mxu0 0
    %3353 = vmatpush1.bf16.msra.mxu0 0
    %3354 = vmatprep.subr.bf16.mxu0 0
    %3355 = vmatpush1.bf16.msra.mxu0 0
    %3356 = vmatprep.subr.bf16.mxu0 0
    %3357 = vmatpush1.bf16.msra.mxu0 0
    %3358 = vmatprep.subr.bf16.mxu0 0
    %3359 = vmatpush1.bf16.msra.mxu0 0
    %3360 = vmatprep.subr.bf16.mxu0 0
    %3361 = vmatpush1.bf16.msra.mxu0 0
    %3362 = vmatprep.subr.bf16.mxu0 0
    %3363 = vmatpush1.bf16.msra.mxu0 0
    %3364 = vmatprep.subr.bf16.mxu0 0
    %3365 = vmatpush1.bf16.msra.mxu0 0
    %3366 = vmatprep.mubr.bf16.mxu0 0
    %3367 = vmatmul.mubr.bf16.gmra.mrb[0].mxu0 %v3269
    %v3368 = vpop.f32.mrb[0].mxu0
    %v3369 = vadd.f32 0.0, %v3368
    %v3370 = vpop.f32.mrb[0].mxu0
    %v3371 = vpop.f32.mrb[0].mxu0
    %v3372 = vadd.f32 0.0, %v3371
    %v3373 = vpop.f32.mrb[0].mxu0
    %3374 = vdwg.mxu0
    %v3375 = vadd.f32 %v3263, %v3369
    %v3376 = vadd.f32 %v3268, %v3372
    %v3377 = vadd.f32 %v3375, %v201
    %v3378 = vadd.f32 %v3376, %v201
    %v3379 = vadd.f32 %v2570, %v3377
    %vm3380 = vcmp.ge.f32.partialorder %v3379, 1.0
    %v3381 = vsel %vm3380, 1, 0
    %v3382 = vcvt.s32.f32 %v3381
    %v3383 = vsel %vm3380, 0.0, %v3379
    %v3384 = vadd.f32 %v3383, %v3378
    %vm3385 = vcmp.ge.f32.partialorder %v3384, 1.0
    %v3386 = vsel %vm3385, 1, 0
    %v3387 = vcvt.s32.f32 %v3386
    %v3388 = vpack.c.bf16 %v3387, %v3382
    %v3389 = vld [vmem:[#allocation14] sm:$0xf]
    %v3390 = vld [vmem:[#allocation14 + $0x4] sm:$0xf]
    %v3391 = vld [vmem:[#allocation14 + $0x8] sm:$0xf]
    %v3392 = vld [vmem:[#allocation14 + $0xc] sm:$0xf]
    %v3393 = vld [vmem:[#allocation14 + $0x10] sm:$0xf]
    %v3394 = vld [vmem:[#allocation14 + $0x14] sm:$0xf]
    %v3395 = vld [vmem:[#allocation14 + $0x18] sm:$0xf]
    %v3396 = vld [vmem:[#allocation14 + $0x1c] sm:$0xf]
    %v3397 = vld [vmem:[#allocation14 + $0x20] sm:$0xf]
    %v3398 = vld [vmem:[#allocation14 + $0x24] sm:$0xf]
    %v3399 = vld [vmem:[#allocation14 + $0x28] sm:$0xf]
    %v3400 = vld [vmem:[#allocation14 + $0x2c] sm:$0xf]
    %v3401 = vld [vmem:[#allocation14 + $0x30] sm:$0xf]
    %v3402 = vld [vmem:[#allocation14 + $0x34] sm:$0xf]
    %v3403 = vld [vmem:[#allocation14 + $0x38] sm:$0xf]
    %v3404 = vld [vmem:[#allocation14 + $0x3c] sm:$0xf]
    %v3421 = vunpack.c.l.b16 %v3389
    %v3422 = vunpack.c.l.b16 %v3390
    %v3423 = vunpack.c.l.b16 %v3391
    %v3424 = vunpack.c.l.b16 %v3392
    %v3425 = vunpack.c.l.b16 %v3393
    %v3426 = vunpack.c.l.b16 %v3394
    %v3427 = vunpack.c.l.b16 %v3395
    %v3428 = vunpack.c.l.b16 %v3396
    %v3429 = vunpack.c.l.b16 %v3397
    %v3430 = vunpack.c.l.b16 %v3398
    %v3431 = vunpack.c.l.b16 %v3399
    %v3432 = vunpack.c.l.b16 %v3400
    %v3433 = vunpack.c.l.b16 %v3401
    %v3434 = vunpack.c.l.b16 %v3402
    %v3435 = vunpack.c.l.b16 %v3403
    %v3436 = vunpack.c.l.b16 %v3404
    %v3437 = vpack.c.b16 %v3422, %v3421
    %v3438 = vpack.c.b16 %v3424, %v3423
    %v3439 = vpack.c.b16 %v3426, %v3425
    %v3440 = vpack.c.b16 %v3428, %v3427
    %v3441 = vpack.c.b16 %v3430, %v3429
    %v3442 = vpack.c.b16 %v3432, %v3431
    %v3443 = vpack.c.b16 %v3434, %v3433
    %v3444 = vpack.c.b16 %v3436, %v3435
    %3453 = vmatprep.subr.bf16.mxu0 0
    %3454 = vmatpush1.bf16.msra.mxu0 %v3437
    %3455 = vmatprep.subr.bf16.mxu0 0
    %3456 = vmatpush1.bf16.msra.mxu0 %v3438
    %3457 = vmatprep.subr.bf16.mxu0 0
    %3458 = vmatpush1.bf16.msra.mxu0 %v3439
    %3459 = vmatprep.subr.bf16.mxu0 0
    %3460 = vmatpush1.bf16.msra.mxu0 %v3440
    %3461 = vmatprep.subr.bf16.mxu0 0
    %3462 = vmatpush1.bf16.msra.mxu0 %v3441
    %3463 = vmatprep.subr.bf16.mxu0 0
    %3464 = vmatpush1.bf16.msra.mxu0 %v3442
    %3465 = vmatprep.subr.bf16.mxu0 0
    %3466 = vmatpush1.bf16.msra.mxu0 %v3443
    %3467 = vmatprep.subr.bf16.mxu0 0
    %3468 = vmatpush1.bf16.msra.mxu0 %v3444
    %3469 = vmatprep.subr.bf16.mxu0 0
    %3470 = vmatpush1.bf16.msra.mxu0 0
    %3471 = vmatprep.subr.bf16.mxu0 0
    %3472 = vmatpush1.bf16.msra.mxu0 0
    %3473 = vmatprep.subr.bf16.mxu0 0
    %3474 = vmatpush1.bf16.msra.mxu0 0
    %3475 = vmatprep.subr.bf16.mxu0 0
    %3476 = vmatpush1.bf16.msra.mxu0 0
    %3477 = vmatprep.subr.bf16.mxu0 0
    %3478 = vmatpush1.bf16.msra.mxu0 0
    %3479 = vmatprep.subr.bf16.mxu0 0
    %3480 = vmatpush1.bf16.msra.mxu0 0
    %3481 = vmatprep.subr.bf16.mxu0 0
    %3482 = vmatpush1.bf16.msra.mxu0 0
    %3483 = vmatprep.subr.bf16.mxu0 0
    %3484 = vmatpush1.bf16.msra.mxu0 0
    %3485 = vmatprep.mubr.bf16.mxu0 0
    %3486 = vmatmul.mubr.bf16.gmra.mrb[0].mxu0 %v3388
    %v3487 = vpop.f32.mrb[0].mxu0
    %v3488 = vadd.f32 %v208, %v3487
    %v3489 = vpop.f32.mrb[0].mxu0
    %v3490 = vpop.f32.mrb[0].mxu0
    %v3491 = vadd.f32 %v208, %v3490
    %v3492 = vpop.f32.mrb[0].mxu0
    %3493 = vdwg.mxu0
    %3494 = vst [vmem:[#allocation16 + $0x30] sm:$0xff] %v3488
    %3495 = vst [vmem:[#allocation16 + $0x38] sm:$0xff] %v3491
    // Predicated region
    $region94: #{tpu_custom_call.1} parent=1 // pred_check
      _
    $region95: #{tpu_custom_call.1} parent=1 // pred_check_branch
      %3497 = sbr.rel (0) target = $region97
    $region96: #{tpu_custom_call.1} parent=1 // pred_region
      %s3499 = ssub.s32 1024, 1024
      %3500 = vsyncadd [#allocation4], %s3499
      %s3501 = sshll.u32 [#allocation16], 4
      %s3502 = int_to_ptr.vmem [resolvable:$true] %s3501
      %3507 = dma.vmem_to_hbm [thread:$0]  %s3502, 1024, %s15, [#allocation4], 128, 128, 8
    $region97: #{tpu_custom_call.1} parent=1 // pred_fallthru
      _
    // Predicated region
    $region98: #{tpu_custom_call.1} parent=1 // pred_check
      _
    $region99: #{tpu_custom_call.1} parent=1 // pred_check_branch
      %3509 = sbr.rel (0) target = $region101
    $region100: #{tpu_custom_call.1} parent=1 // pred_region
      %3510 = dma.done [#allocation4], 1024
    $region101: #{tpu_custom_call.1} parent=1 // pred_fallthru
      _
    %3511 = vsyncpa [#allocation3], 1
    %3512 = vsyncpa [#allocation6], 1
    %3513 = vsyncpa [#allocation9], 1
    %3514 = vsyncpa [#allocation12], 1
    %3515 = vsyncpa [#allocation15], 1
    %3516 = vsyncpa [#allocation4], 1

</llo_original>
